<compile_context>
chip_gen: v7x
topology: tpu7x:2x2x1
jax: 0.10.0
libtpu: 0.0.40
codegen_flags: <defaults>
</compile_context>

<pallas_src>
import jax
import jax.numpy as jnp
from jax.experimental import pallas as pl
from jax.experimental.pallas import tpu as pltpu

CONV_CHANNELS = [(1, 16), (16, 32), (32, 32), (32, 64), (64, 64)]
POOL_K = 8
PAD = 8            # front pad rows per activation buffer (sublane-aligned data start)


# ---------------------------------------------------------------------------
# Fused Pallas kernel: whole network, TB batch samples per grid step
# ---------------------------------------------------------------------------

def fused_create_kernel(x_ref,
                        w1, b1, w2, b2, w3, b3, w4, b4, w5, b5, w6, b6,
                        o_ref,
                        buf1, buf2, buf3, buf4):
    tb = x_ref.shape[0]
    bufs = (buf1, buf2, buf3, buf4)

    # Zero the (aligned) pad rows of every inter-layer buffer.  Done every grid
    # step: scratch is per-core and uninitialized, and under "parallel" grid
    # sharding a pl.when(program_id == 0) init would never run on the second TC.
    for buf in bufs:
        c = buf.shape[2]
        buf[:, pl.ds(0, PAD), :] = jnp.zeros((tb, PAD, c), jnp.float32)

    def conv_relu(in_ref, w_ref, b_ref):
        # in_ref: (TB, PAD + L_in, C_in); data at rows [PAD, PAD + L_in).
        # Row PAD-1 is the conv's left zero pad; the right pad is never read.
        _, lp, c_in = in_ref.shape
        lo = (lp - PAD) // 2
        acc = None
        for k in range(3):            # per-tap dot-accumulate (no lane concat)
            tap = in_ref[:, pl.ds(PAD - 1 + k, lo, stride=2), :]   # (TB, lo, C_in)
            part = jnp.dot(tap.reshape(tb * lo, c_in),
                           w_ref[pl.ds(k * c_in, c_in), :],
                           preferred_element_type=jnp.float32)
            acc = part if acc is None else acc + part
        return jnp.maximum(acc + b_ref[...], 0.0), lo              # (TB*lo, C_out)

    def store(buf, y, lo):
        # Aligned sublane-offset-8 store of the next layer's input.
        buf[:, pl.ds(PAD, lo), :] = y.reshape(tb, lo, buf.shape[2])

    y, lo = conv_relu(x_ref, w1, b1); store(buf1, y, lo)
    y, lo = conv_relu(buf1,  w2, b2); store(buf2, y, lo)
    y, lo = conv_relu(buf2,  w3, b3); store(buf3, y, lo)
    y, lo = conv_relu(buf3,  w4, b4); store(buf4, y, lo)
    y, fc_len = conv_relu(buf4, w5, b5)                            # (TB*fc_len, 64)

    # Head: 1x1 conv (channel matmul) + AvgPool1d(POOL_K) over the length dim.
    z = jnp.dot(y, w6[...], preferred_element_type=jnp.float32) + b6[...]   # (TB*fc_len, D)
    d = z.shape[1]
    p_out = fc_len // POOL_K
    pooled = jnp.mean(z.reshape(tb * p_out, POOL_K, d), axis=1)    # (TB*p_out, D)
    o_ref[...] = pooled.reshape(tb, p_out, d)


# ---------------------------------------------------------------------------
# Wrappers
# ---------------------------------------------------------------------------

def prepare_params(params):
    """One-time reshape of torch-layout params into kernel-friendly matrices."""
    kparams = []
    for (w, b) in params[:-1]:
        c_out, c_in, k = w.shape
        # Row index = tap*C_in + ci  ->  static per-tap slices in the kernel.
        wr = jnp.transpose(w, (2, 1, 0)).reshape(k * c_in, c_out)
        kparams.append((wr, b.reshape(1, c_out)))
    w6, b6 = params[-1]
    kparams.append((jnp.transpose(w6[:, :, 0]), b6.reshape(1, -1)))
    return kparams


def create_forward(state_ncl, kparams, batch_tile=8):
    """Fused forward.  state_ncl: (B, 1, L) like the PyTorch module."""
    # TODO(synk): nn.Dropout(p=0.05) layers are inference-mode identities (no RNG mask).
    B, c0, L = state_ncl.shape
    n_conv = len(CONV_CHANNELS)
    assert c0 == 1
    assert L % (2 ** n_conv) == 0
    fc_len = L >> n_conv
    assert fc_len >= POOL_K and fc_len % POOL_K == 0
    p_out = fc_len // POOL_K
    d = kparams[-1][0].shape[1]

    tb = max(1, min(batch_tile, B))
    while B % tb:
        tb -= 1

    # Channel-last + PAD zero rows in front, done once in XLA: contiguous input
    # DMA and no in-kernel staging stores.
    x_pad = jnp.pad(state_ncl.reshape(B, L, 1).astype(jnp.float32),
                    ((0, 0), (PAD, 0), (0, 0)))

    wb_inputs, wb_specs = [], []
    for (wr, br) in kparams:
        wb_inputs += [wr, br]
        wb_specs += [pl.BlockSpec(wr.shape, lambda i: (0, 0)),
                     pl.BlockSpec(br.shape, lambda i: (0, 0))]

    scratch, lcur = [], L
    for (_c_in, c_out) in CONV_CHANNELS[:-1]:     # outputs of conv layers 1..4
        lcur //= 2
        scratch.append(pltpu.VMEM((tb, PAD + lcur, c_out), jnp.float32))

    pooled = pl.pallas_call(
        fused_create_kernel,
        out_shape=jax.ShapeDtypeStruct((B, p_out, d), jnp.float32),
        grid=(B // tb,),
        in_specs=[pl.BlockSpec((tb, PAD + L, 1), lambda i: (i, 0, 0))] + wb_specs,
        out_specs=pl.BlockSpec((tb, p_out, d), lambda i: (i, 0, 0)),
        scratch_shapes=scratch,
        compiler_params=pltpu.CompilerParams(
            dimension_semantics=("parallel",),        # shard batch tiles across TCs
            vmem_limit_bytes=32 * 1024 * 1024),
    )(x_pad, *wb_inputs)

    # torch Flatten after AvgPool sees (B, D, p_out): flatten channel-major.
    return jnp.transpose(pooled, (0, 2, 1)).reshape(B, d * p_out)


# ---------------------------------------------------------------------------
# Deterministic parameter init (xavier_uniform weights, torch-default-ish biases)
# ---------------------------------------------------------------------------

def _xavier_uniform(key, shape):
    c_out, c_in, k = shape
    fan_in, fan_out = c_in * k, c_out * k
    bound = (6.0 / (fan_in + fan_out)) ** 0.5
    return jax.random.uniform(key, shape, jnp.float32, -bound, bound)


def init_params(key, outputs_count):
    params = []
    for (cin, cout) in CONV_CHANNELS:
        key, kw, kb = jax.random.split(key, 3)
        w = _xavier_uniform(kw, (cout, cin, 3))
        bnd = 1.0 / (cin * 3) ** 0.5
        b = jax.random.uniform(kb, (cout,), jnp.float32, -bnd, bnd)
        params.append((w, b))
    key, kw, kb = jax.random.split(key, 3)
    w6 = _xavier_uniform(kw, (outputs_count, 64, 1))
    b6 = jax.random.uniform(kb, (outputs_count,), jnp.float32, -1.0 / 8.0, 1.0 / 8.0)
    params.append((w6, b6))
    return params


# ---------------------------------------------------------------------------
# Pure-JAX reference (lax.conv, HIGHEST precision) for correctness checking
# ---------------------------------------------------------------------------

def reference_forward(state, params):
    x = state
    for (w, b) in params[:5]:
        y = jax.lax.conv_general_dilated(
            x, w, (2,), [(1, 1)], dimension_numbers=("NCH", "OIH", "NCH"),
            precision=jax.lax.Precision.HIGHEST)
        x = jax.nn.relu(y + b[None, :, None])
    w6, b6 = params[5]
    y = jax.lax.conv_general_dilated(
        x, w6, (1,), [(0, 0)], dimension_numbers=("NCH", "OIH", "NCH"),
        precision=jax.lax.Precision.HIGHEST) + b6[None, :, None]
    Bn, Dn, Lf = y.shape
    p = Lf // POOL_K
    y = y[:, :, :p * POOL_K].reshape(Bn, Dn, p, POOL_K).mean(-1)
    return y.reshape(Bn, -1)


if __name__ == "__main__":
    # Smallest legal spatial size: sequence_length = 256 -> fc_length = 8 (AvgPool1d(8)).
    B, L, outputs_count = 4, 256, 4
    key = jax.random.PRNGKey(0)
    kp, kx = jax.random.split(key)
    params = init_params(kp, outputs_count)
    kparams = prepare_params(params)          # one-time weight reshape (not per-forward)
    state = jax.random.normal(kx, (B, 1, L), jnp.float32)   # torch NCL input

    fwd = jax.jit(lambda s: create_forward(s, kparams, batch_tile=2))  # grid=(2,)
    out = jax.block_until_ready(fwd(state))
    ref = reference_forward(state, params)

    assert out.shape == (B, outputs_count * ((L // 32) // POOL_K)), out.shape
    assert jnp.allclose(out, ref, atol=1e-2, rtol=1e-2), "Pallas output mismatch vs reference"
    print("KERNEL_OK")
</pallas_src>

<mosaic_0001>
module attributes {stable_mosaic.version = 11 : i64} {
  func.func @fused_create_kernel(%arg0: i32, %arg1: memref<2x264x1xf32, #tpu.memory_space<vmem>>, %arg2: memref<3x16xf32, #tpu.memory_space<vmem>>, %arg3: memref<1x16xf32, #tpu.memory_space<vmem>>, %arg4: memref<48x32xf32, #tpu.memory_space<vmem>>, %arg5: memref<1x32xf32, #tpu.memory_space<vmem>>, %arg6: memref<96x32xf32, #tpu.memory_space<vmem>>, %arg7: memref<1x32xf32, #tpu.memory_space<vmem>>, %arg8: memref<96x64xf32, #tpu.memory_space<vmem>>, %arg9: memref<1x64xf32, #tpu.memory_space<vmem>>, %arg10: memref<192x64xf32, #tpu.memory_space<vmem>>, %arg11: memref<1x64xf32, #tpu.memory_space<vmem>>, %arg12: memref<64x4xf32, #tpu.memory_space<vmem>>, %arg13: memref<1x4xf32, #tpu.memory_space<vmem>>, %arg14: memref<2x1x4xf32, #tpu.memory_space<vmem>>, %arg15: memref<2x136x16xf32, #tpu.memory_space<vmem>>, %arg16: memref<2x72x32xf32, #tpu.memory_space<vmem>>, %arg17: memref<2x40x32xf32, #tpu.memory_space<vmem>>, %arg18: memref<2x24x64xf32, #tpu.memory_space<vmem>>) attributes {dimension_semantics = [#tpu.dimension_semantics<parallel>], iteration_bounds = array<i64: 2>, scalar_prefetch = 0 : i64, scratch_operands = 4 : i64, tpu.core_type = #tpu.core_type<tc>, window_params = [{transform_indices = @transform_0, window_bounds = array<i64: 2, 264, 1>}, {pipeline_mode = #tpu.pipeline_mode<synchronous>, transform_indices = @transform_1, window_bounds = array<i64: 3, 16>}, {pipeline_mode = #tpu.pipeline_mode<synchronous>, transform_indices = @transform_2, window_bounds = array<i64: 1, 16>}, {pipeline_mode = #tpu.pipeline_mode<synchronous>, transform_indices = @transform_3, window_bounds = array<i64: 48, 32>}, {pipeline_mode = #tpu.pipeline_mode<synchronous>, transform_indices = @transform_4, window_bounds = array<i64: 1, 32>}, {pipeline_mode = #tpu.pipeline_mode<synchronous>, transform_indices = @transform_5, window_bounds = array<i64: 96, 32>}, {pipeline_mode = #tpu.pipeline_mode<synchronous>, transform_indices = @transform_6, window_bounds = array<i64: 1, 32>}, {pipeline_mode = #tpu.pipeline_mode<synchronous>, transform_indices = @transform_7, window_bounds = array<i64: 96, 64>}, {pipeline_mode = #tpu.pipeline_mode<synchronous>, transform_indices = @transform_8, window_bounds = array<i64: 1, 64>}, {pipeline_mode = #tpu.pipeline_mode<synchronous>, transform_indices = @transform_9, window_bounds = array<i64: 192, 64>}, {pipeline_mode = #tpu.pipeline_mode<synchronous>, transform_indices = @transform_10, window_bounds = array<i64: 1, 64>}, {pipeline_mode = #tpu.pipeline_mode<synchronous>, transform_indices = @transform_11, window_bounds = array<i64: 64, 4>}, {pipeline_mode = #tpu.pipeline_mode<synchronous>, transform_indices = @transform_12, window_bounds = array<i64: 1, 4>}, {transform_indices = @transform_13, window_bounds = array<i64: 2, 1, 4>}]} {
    %cst = arith.constant 0.000000e+00 : f32
    %0 = vector.broadcast %cst : f32 to vector<2x8x16xf32>
    %c0 = arith.constant 0 : index
    %c0_0 = arith.constant 0 : index
    %c0_1 = arith.constant 0 : index
    %1 = vector.load %arg15[%c0, %c0_0, %c0_1] : memref<2x136x16xf32, #tpu.memory_space<vmem>>, vector<2x8x16xf32>
    tpu.vector_store %arg15[%c0, %c0_0, %c0_1], %0 {strides = array<i32>} : memref<2x136x16xf32, #tpu.memory_space<vmem>>, vector<2x8x16xf32>,
    %cst_2 = arith.constant 0.000000e+00 : f32
    %2 = vector.broadcast %cst_2 : f32 to vector<2x8x32xf32>
    %c0_3 = arith.constant 0 : index
    %c0_4 = arith.constant 0 : index
    %c0_5 = arith.constant 0 : index
    %3 = vector.load %arg16[%c0_3, %c0_4, %c0_5] : memref<2x72x32xf32, #tpu.memory_space<vmem>>, vector<2x8x32xf32>
    tpu.vector_store %arg16[%c0_3, %c0_4, %c0_5], %2 {strides = array<i32>} : memref<2x72x32xf32, #tpu.memory_space<vmem>>, vector<2x8x32xf32>,
    %cst_6 = arith.constant 0.000000e+00 : f32
    %4 = vector.broadcast %cst_6 : f32 to vector<2x8x32xf32>
    %c0_7 = arith.constant 0 : index
    %c0_8 = arith.constant 0 : index
    %c0_9 = arith.constant 0 : index
    %5 = vector.load %arg17[%c0_7, %c0_8, %c0_9] : memref<2x40x32xf32, #tpu.memory_space<vmem>>, vector<2x8x32xf32>
    tpu.vector_store %arg17[%c0_7, %c0_8, %c0_9], %4 {strides = array<i32>} : memref<2x40x32xf32, #tpu.memory_space<vmem>>, vector<2x8x32xf32>,
    %cst_10 = arith.constant 0.000000e+00 : f32
    %6 = vector.broadcast %cst_10 : f32 to vector<2x8x64xf32>
    %c0_11 = arith.constant 0 : index
    %c0_12 = arith.constant 0 : index
    %c0_13 = arith.constant 0 : index
    %7 = vector.load %arg18[%c0_11, %c0_12, %c0_13] : memref<2x24x64xf32, #tpu.memory_space<vmem>>, vector<2x8x64xf32>
    tpu.vector_store %arg18[%c0_11, %c0_12, %c0_13], %6 {strides = array<i32>} : memref<2x24x64xf32, #tpu.memory_space<vmem>>, vector<2x8x64xf32>,
    %c0_14 = arith.constant 0 : index
    %c7 = arith.constant 7 : index
    %c0_15 = arith.constant 0 : index
    %8 = tpu.strided_load %arg1[%c0_14, %c7, %c0_15] {strides = array<i32: 1, 2, 1>} : memref<2x264x1xf32, #tpu.memory_space<vmem>>, vector<2x128x1xf32>
    %9 = vector.shape_cast %8 : vector<2x128x1xf32> to vector<256x1xf32>
    %c0_16 = arith.constant 0 : index
    %c0_17 = arith.constant 0 : index
    %10 = vector.load %arg2[%c0_16, %c0_17] : memref<3x16xf32, #tpu.memory_space<vmem>>, vector<1x16xf32>
    %cst_18 = arith.constant dense<0.000000e+00> : vector<256x16xf32>
    %11 = tpu.matmul %9, %10, %cst_18 {dimension_numbers = #tpu.dot_dimension_numbers<[1], [0], [0], [1], [0, 0, 1, 1], [], []>} : vector<256x1xf32>, vector<1x16xf32>, vector<256x16xf32> -> vector<256x16xf32>
    %c0_19 = arith.constant 0 : index
    %c8 = arith.constant 8 : index
    %c0_20 = arith.constant 0 : index
    %12 = tpu.strided_load %arg1[%c0_19, %c8, %c0_20] {strides = array<i32: 1, 2, 1>} : memref<2x264x1xf32, #tpu.memory_space<vmem>>, vector<2x128x1xf32>
    %13 = vector.shape_cast %12 : vector<2x128x1xf32> to vector<256x1xf32>
    %c1 = arith.constant 1 : index
    %c0_21 = arith.constant 0 : index
    %14 = vector.load %arg2[%c1, %c0_21] : memref<3x16xf32, #tpu.memory_space<vmem>>, vector<1x16xf32>
    %cst_22 = arith.constant dense<0.000000e+00> : vector<256x16xf32>
    %15 = tpu.matmul %13, %14, %cst_22 {dimension_numbers = #tpu.dot_dimension_numbers<[1], [0], [0], [1], [0, 0, 1, 1], [], []>} : vector<256x1xf32>, vector<1x16xf32>, vector<256x16xf32> -> vector<256x16xf32>
    %16 = arith.addf %11, %15 : vector<256x16xf32>
    %c0_23 = arith.constant 0 : index
    %c9 = arith.constant 9 : index
    %c0_24 = arith.constant 0 : index
    %17 = tpu.strided_load %arg1[%c0_23, %c9, %c0_24] {strides = array<i32: 1, 2, 1>} : memref<2x264x1xf32, #tpu.memory_space<vmem>>, vector<2x128x1xf32>
    %18 = vector.shape_cast %17 : vector<2x128x1xf32> to vector<256x1xf32>
    %c2 = arith.constant 2 : index
    %c0_25 = arith.constant 0 : index
    %19 = vector.load %arg2[%c2, %c0_25] : memref<3x16xf32, #tpu.memory_space<vmem>>, vector<1x16xf32>
    %cst_26 = arith.constant dense<0.000000e+00> : vector<256x16xf32>
    %20 = tpu.matmul %18, %19, %cst_26 {dimension_numbers = #tpu.dot_dimension_numbers<[1], [0], [0], [1], [0, 0, 1, 1], [], []>} : vector<256x1xf32>, vector<1x16xf32>, vector<256x16xf32> -> vector<256x16xf32>
    %21 = arith.addf %16, %20 : vector<256x16xf32>
    %c0_27 = arith.constant 0 : index
    %c0_28 = arith.constant 0 : index
    %22 = vector.load %arg3[%c0_27, %c0_28] : memref<1x16xf32, #tpu.memory_space<vmem>>, vector<1x16xf32>
    %23 = vector.broadcast %22 : vector<1x16xf32> to vector<256x16xf32>
    %24 = arith.addf %21, %23 : vector<256x16xf32>
    %cst_29 = arith.constant 0.000000e+00 : f32
    %25 = vector.broadcast %cst_29 : f32 to vector<256x16xf32>
    %26 = arith.maximumf %24, %25 : vector<256x16xf32>
    %27 = vector.shape_cast %26 : vector<256x16xf32> to vector<2x128x16xf32>
    %c0_30 = arith.constant 0 : index
    %c8_31 = arith.constant 8 : index
    %c0_32 = arith.constant 0 : index
    %28 = vector.load %arg15[%c0_30, %c8_31, %c0_32] : memref<2x136x16xf32, #tpu.memory_space<vmem>>, vector<2x128x16xf32>
    tpu.vector_store %arg15[%c0_30, %c8_31, %c0_32], %27 {strides = array<i32>} : memref<2x136x16xf32, #tpu.memory_space<vmem>>, vector<2x128x16xf32>,
    %c0_33 = arith.constant 0 : index
    %c7_34 = arith.constant 7 : index
    %c0_35 = arith.constant 0 : index
    %29 = tpu.strided_load %arg15[%c0_33, %c7_34, %c0_35] {strides = array<i32: 1, 2, 1>} : memref<2x136x16xf32, #tpu.memory_space<vmem>>, vector<2x64x16xf32>
    %30 = vector.shape_cast %29 : vector<2x64x16xf32> to vector<128x16xf32>
    %c0_36 = arith.constant 0 : index
    %c0_37 = arith.constant 0 : index
    %31 = vector.load %arg4[%c0_36, %c0_37] : memref<48x32xf32, #tpu.memory_space<vmem>>, vector<16x32xf32>
    %cst_38 = arith.constant dense<0.000000e+00> : vector<128x32xf32>
    %32 = tpu.matmul %30, %31, %cst_38 {dimension_numbers = #tpu.dot_dimension_numbers<[1], [0], [0], [1], [0, 0, 1, 1], [], []>} : vector<128x16xf32>, vector<16x32xf32>, vector<128x32xf32> -> vector<128x32xf32>
    %c0_39 = arith.constant 0 : index
    %c8_40 = arith.constant 8 : index
    %c0_41 = arith.constant 0 : index
    %33 = tpu.strided_load %arg15[%c0_39, %c8_40, %c0_41] {strides = array<i32: 1, 2, 1>} : memref<2x136x16xf32, #tpu.memory_space<vmem>>, vector<2x64x16xf32>
    %34 = vector.shape_cast %33 : vector<2x64x16xf32> to vector<128x16xf32>
    %c16 = arith.constant 16 : index
    %c0_42 = arith.constant 0 : index
    %35 = vector.load %arg4[%c16, %c0_42] : memref<48x32xf32, #tpu.memory_space<vmem>>, vector<16x32xf32>
    %cst_43 = arith.constant dense<0.000000e+00> : vector<128x32xf32>
    %36 = tpu.matmul %34, %35, %cst_43 {dimension_numbers = #tpu.dot_dimension_numbers<[1], [0], [0], [1], [0, 0, 1, 1], [], []>} : vector<128x16xf32>, vector<16x32xf32>, vector<128x32xf32> -> vector<128x32xf32>
    %37 = arith.addf %32, %36 : vector<128x32xf32>
    %c0_44 = arith.constant 0 : index
    %c9_45 = arith.constant 9 : index
    %c0_46 = arith.constant 0 : index
    %38 = tpu.strided_load %arg15[%c0_44, %c9_45, %c0_46] {strides = array<i32: 1, 2, 1>} : memref<2x136x16xf32, #tpu.memory_space<vmem>>, vector<2x64x16xf32>
    %39 = vector.shape_cast %38 : vector<2x64x16xf32> to vector<128x16xf32>
    %c32 = arith.constant 32 : index
    %c0_47 = arith.constant 0 : index
    %40 = vector.load %arg4[%c32, %c0_47] : memref<48x32xf32, #tpu.memory_space<vmem>>, vector<16x32xf32>
    %cst_48 = arith.constant dense<0.000000e+00> : vector<128x32xf32>
    %41 = tpu.matmul %39, %40, %cst_48 {dimension_numbers = #tpu.dot_dimension_numbers<[1], [0], [0], [1], [0, 0, 1, 1], [], []>} : vector<128x16xf32>, vector<16x32xf32>, vector<128x32xf32> -> vector<128x32xf32>
    %42 = arith.addf %37, %41 : vector<128x32xf32>
    %c0_49 = arith.constant 0 : index
    %c0_50 = arith.constant 0 : index
    %43 = vector.load %arg5[%c0_49, %c0_50] : memref<1x32xf32, #tpu.memory_space<vmem>>, vector<1x32xf32>
    %44 = vector.broadcast %43 : vector<1x32xf32> to vector<128x32xf32>
    %45 = arith.addf %42, %44 : vector<128x32xf32>
    %cst_51 = arith.constant 0.000000e+00 : f32
    %46 = vector.broadcast %cst_51 : f32 to vector<128x32xf32>
    %47 = arith.maximumf %45, %46 : vector<128x32xf32>
    %48 = vector.shape_cast %47 : vector<128x32xf32> to vector<2x64x32xf32>
    %c0_52 = arith.constant 0 : index
    %c8_53 = arith.constant 8 : index
    %c0_54 = arith.constant 0 : index
    %49 = vector.load %arg16[%c0_52, %c8_53, %c0_54] : memref<2x72x32xf32, #tpu.memory_space<vmem>>, vector<2x64x32xf32>
    tpu.vector_store %arg16[%c0_52, %c8_53, %c0_54], %48 {strides = array<i32>} : memref<2x72x32xf32, #tpu.memory_space<vmem>>, vector<2x64x32xf32>,
    %c0_55 = arith.constant 0 : index
    %c7_56 = arith.constant 7 : index
    %c0_57 = arith.constant 0 : index
    %50 = tpu.strided_load %arg16[%c0_55, %c7_56, %c0_57] {strides = array<i32: 1, 2, 1>} : memref<2x72x32xf32, #tpu.memory_space<vmem>>, vector<2x32x32xf32>
    %51 = vector.shape_cast %50 : vector<2x32x32xf32> to vector<64x32xf32>
    %c0_58 = arith.constant 0 : index
    %c0_59 = arith.constant 0 : index
    %52 = vector.load %arg6[%c0_58, %c0_59] : memref<96x32xf32, #tpu.memory_space<vmem>>, vector<32x32xf32>
    %cst_60 = arith.constant dense<0.000000e+00> : vector<64x32xf32>
    %53 = tpu.matmul %51, %52, %cst_60 {dimension_numbers = #tpu.dot_dimension_numbers<[1], [0], [0], [1], [0, 0, 1, 1], [], []>} : vector<64x32xf32>, vector<32x32xf32>, vector<64x32xf32> -> vector<64x32xf32>
    %c0_61 = arith.constant 0 : index
    %c8_62 = arith.constant 8 : index
    %c0_63 = arith.constant 0 : index
    %54 = tpu.strided_load %arg16[%c0_61, %c8_62, %c0_63] {strides = array<i32: 1, 2, 1>} : memref<2x72x32xf32, #tpu.memory_space<vmem>>, vector<2x32x32xf32>
    %55 = vector.shape_cast %54 : vector<2x32x32xf32> to vector<64x32xf32>
    %c32_64 = arith.constant 32 : index
    %c0_65 = arith.constant 0 : index
    %56 = vector.load %arg6[%c32_64, %c0_65] : memref<96x32xf32, #tpu.memory_space<vmem>>, vector<32x32xf32>
    %cst_66 = arith.constant dense<0.000000e+00> : vector<64x32xf32>
    %57 = tpu.matmul %55, %56, %cst_66 {dimension_numbers = #tpu.dot_dimension_numbers<[1], [0], [0], [1], [0, 0, 1, 1], [], []>} : vector<64x32xf32>, vector<32x32xf32>, vector<64x32xf32> -> vector<64x32xf32>
    %58 = arith.addf %53, %57 : vector<64x32xf32>
    %c0_67 = arith.constant 0 : index
    %c9_68 = arith.constant 9 : index
    %c0_69 = arith.constant 0 : index
    %59 = tpu.strided_load %arg16[%c0_67, %c9_68, %c0_69] {strides = array<i32: 1, 2, 1>} : memref<2x72x32xf32, #tpu.memory_space<vmem>>, vector<2x32x32xf32>
    %60 = vector.shape_cast %59 : vector<2x32x32xf32> to vector<64x32xf32>
    %c64 = arith.constant 64 : index
    %c0_70 = arith.constant 0 : index
    %61 = vector.load %arg6[%c64, %c0_70] : memref<96x32xf32, #tpu.memory_space<vmem>>, vector<32x32xf32>
    %cst_71 = arith.constant dense<0.000000e+00> : vector<64x32xf32>
    %62 = tpu.matmul %60, %61, %cst_71 {dimension_numbers = #tpu.dot_dimension_numbers<[1], [0], [0], [1], [0, 0, 1, 1], [], []>} : vector<64x32xf32>, vector<32x32xf32>, vector<64x32xf32> -> vector<64x32xf32>
    %63 = arith.addf %58, %62 : vector<64x32xf32>
    %c0_72 = arith.constant 0 : index
    %c0_73 = arith.constant 0 : index
    %64 = vector.load %arg7[%c0_72, %c0_73] : memref<1x32xf32, #tpu.memory_space<vmem>>, vector<1x32xf32>
    %65 = vector.broadcast %64 : vector<1x32xf32> to vector<64x32xf32>
    %66 = arith.addf %63, %65 : vector<64x32xf32>
    %cst_74 = arith.constant 0.000000e+00 : f32
    %67 = vector.broadcast %cst_74 : f32 to vector<64x32xf32>
    %68 = arith.maximumf %66, %67 : vector<64x32xf32>
    %69 = vector.shape_cast %68 : vector<64x32xf32> to vector<2x32x32xf32>
    %c0_75 = arith.constant 0 : index
    %c8_76 = arith.constant 8 : index
    %c0_77 = arith.constant 0 : index
    %70 = vector.load %arg17[%c0_75, %c8_76, %c0_77] : memref<2x40x32xf32, #tpu.memory_space<vmem>>, vector<2x32x32xf32>
    tpu.vector_store %arg17[%c0_75, %c8_76, %c0_77], %69 {strides = array<i32>} : memref<2x40x32xf32, #tpu.memory_space<vmem>>, vector<2x32x32xf32>,
    %c0_78 = arith.constant 0 : index
    %c7_79 = arith.constant 7 : index
    %c0_80 = arith.constant 0 : index
    %71 = tpu.strided_load %arg17[%c0_78, %c7_79, %c0_80] {strides = array<i32: 1, 2, 1>} : memref<2x40x32xf32, #tpu.memory_space<vmem>>, vector<2x16x32xf32>
    %72 = vector.shape_cast %71 : vector<2x16x32xf32> to vector<32x32xf32>
    %c0_81 = arith.constant 0 : index
    %c0_82 = arith.constant 0 : index
    %73 = vector.load %arg8[%c0_81, %c0_82] : memref<96x64xf32, #tpu.memory_space<vmem>>, vector<32x64xf32>
    %cst_83 = arith.constant dense<0.000000e+00> : vector<32x64xf32>
    %74 = tpu.matmul %72, %73, %cst_83 {dimension_numbers = #tpu.dot_dimension_numbers<[1], [0], [0], [1], [0, 0, 1, 1], [], []>} : vector<32x32xf32>, vector<32x64xf32>, vector<32x64xf32> -> vector<32x64xf32>
    %c0_84 = arith.constant 0 : index
    %c8_85 = arith.constant 8 : index
    %c0_86 = arith.constant 0 : index
    %75 = tpu.strided_load %arg17[%c0_84, %c8_85, %c0_86] {strides = array<i32: 1, 2, 1>} : memref<2x40x32xf32, #tpu.memory_space<vmem>>, vector<2x16x32xf32>
    %76 = vector.shape_cast %75 : vector<2x16x32xf32> to vector<32x32xf32>
    %c32_87 = arith.constant 32 : index
    %c0_88 = arith.constant 0 : index
    %77 = vector.load %arg8[%c32_87, %c0_88] : memref<96x64xf32, #tpu.memory_space<vmem>>, vector<32x64xf32>
    %cst_89 = arith.constant dense<0.000000e+00> : vector<32x64xf32>
    %78 = tpu.matmul %76, %77, %cst_89 {dimension_numbers = #tpu.dot_dimension_numbers<[1], [0], [0], [1], [0, 0, 1, 1], [], []>} : vector<32x32xf32>, vector<32x64xf32>, vector<32x64xf32> -> vector<32x64xf32>
    %79 = arith.addf %74, %78 : vector<32x64xf32>
    %c0_90 = arith.constant 0 : index
    %c9_91 = arith.constant 9 : index
    %c0_92 = arith.constant 0 : index
    %80 = tpu.strided_load %arg17[%c0_90, %c9_91, %c0_92] {strides = array<i32: 1, 2, 1>} : memref<2x40x32xf32, #tpu.memory_space<vmem>>, vector<2x16x32xf32>
    %81 = vector.shape_cast %80 : vector<2x16x32xf32> to vector<32x32xf32>
    %c64_93 = arith.constant 64 : index
    %c0_94 = arith.constant 0 : index
    %82 = vector.load %arg8[%c64_93, %c0_94] : memref<96x64xf32, #tpu.memory_space<vmem>>, vector<32x64xf32>
    %cst_95 = arith.constant dense<0.000000e+00> : vector<32x64xf32>
    %83 = tpu.matmul %81, %82, %cst_95 {dimension_numbers = #tpu.dot_dimension_numbers<[1], [0], [0], [1], [0, 0, 1, 1], [], []>} : vector<32x32xf32>, vector<32x64xf32>, vector<32x64xf32> -> vector<32x64xf32>
    %84 = arith.addf %79, %83 : vector<32x64xf32>
    %c0_96 = arith.constant 0 : index
    %c0_97 = arith.constant 0 : index
    %85 = vector.load %arg9[%c0_96, %c0_97] : memref<1x64xf32, #tpu.memory_space<vmem>>, vector<1x64xf32>
    %86 = vector.broadcast %85 : vector<1x64xf32> to vector<32x64xf32>
    %87 = arith.addf %84, %86 : vector<32x64xf32>
    %cst_98 = arith.constant 0.000000e+00 : f32
    %88 = vector.broadcast %cst_98 : f32 to vector<32x64xf32>
    %89 = arith.maximumf %87, %88 : vector<32x64xf32>
    %90 = vector.shape_cast %89 : vector<32x64xf32> to vector<2x16x64xf32>
    %c0_99 = arith.constant 0 : index
    %c8_100 = arith.constant 8 : index
    %c0_101 = arith.constant 0 : index
    %91 = vector.load %arg18[%c0_99, %c8_100, %c0_101] : memref<2x24x64xf32, #tpu.memory_space<vmem>>, vector<2x16x64xf32>
    tpu.vector_store %arg18[%c0_99, %c8_100, %c0_101], %90 {strides = array<i32>} : memref<2x24x64xf32, #tpu.memory_space<vmem>>, vector<2x16x64xf32>,
    %c0_102 = arith.constant 0 : index
    %c7_103 = arith.constant 7 : index
    %c0_104 = arith.constant 0 : index
    %92 = tpu.strided_load %arg18[%c0_102, %c7_103, %c0_104] {strides = array<i32: 1, 2, 1>} : memref<2x24x64xf32, #tpu.memory_space<vmem>>, vector<2x8x64xf32>
    %93 = vector.shape_cast %92 : vector<2x8x64xf32> to vector<16x64xf32>
    %c0_105 = arith.constant 0 : index
    %c0_106 = arith.constant 0 : index
    %94 = vector.load %arg10[%c0_105, %c0_106] : memref<192x64xf32, #tpu.memory_space<vmem>>, vector<64x64xf32>
    %cst_107 = arith.constant dense<0.000000e+00> : vector<16x64xf32>
    %95 = tpu.matmul %93, %94, %cst_107 {dimension_numbers = #tpu.dot_dimension_numbers<[1], [0], [0], [1], [0, 0, 1, 1], [], []>} : vector<16x64xf32>, vector<64x64xf32>, vector<16x64xf32> -> vector<16x64xf32>
    %c0_108 = arith.constant 0 : index
    %c8_109 = arith.constant 8 : index
    %c0_110 = arith.constant 0 : index
    %96 = tpu.strided_load %arg18[%c0_108, %c8_109, %c0_110] {strides = array<i32: 1, 2, 1>} : memref<2x24x64xf32, #tpu.memory_space<vmem>>, vector<2x8x64xf32>
    %97 = vector.shape_cast %96 : vector<2x8x64xf32> to vector<16x64xf32>
    %c64_111 = arith.constant 64 : index
    %c0_112 = arith.constant 0 : index
    %98 = vector.load %arg10[%c64_111, %c0_112] : memref<192x64xf32, #tpu.memory_space<vmem>>, vector<64x64xf32>
    %cst_113 = arith.constant dense<0.000000e+00> : vector<16x64xf32>
    %99 = tpu.matmul %97, %98, %cst_113 {dimension_numbers = #tpu.dot_dimension_numbers<[1], [0], [0], [1], [0, 0, 1, 1], [], []>} : vector<16x64xf32>, vector<64x64xf32>, vector<16x64xf32> -> vector<16x64xf32>
    %100 = arith.addf %95, %99 : vector<16x64xf32>
    %c0_114 = arith.constant 0 : index
    %c9_115 = arith.constant 9 : index
    %c0_116 = arith.constant 0 : index
    %101 = tpu.strided_load %arg18[%c0_114, %c9_115, %c0_116] {strides = array<i32: 1, 2, 1>} : memref<2x24x64xf32, #tpu.memory_space<vmem>>, vector<2x8x64xf32>
    %102 = vector.shape_cast %101 : vector<2x8x64xf32> to vector<16x64xf32>
    %c128 = arith.constant 128 : index
    %c0_117 = arith.constant 0 : index
    %103 = vector.load %arg10[%c128, %c0_117] : memref<192x64xf32, #tpu.memory_space<vmem>>, vector<64x64xf32>
    %cst_118 = arith.constant dense<0.000000e+00> : vector<16x64xf32>
    %104 = tpu.matmul %102, %103, %cst_118 {dimension_numbers = #tpu.dot_dimension_numbers<[1], [0], [0], [1], [0, 0, 1, 1], [], []>} : vector<16x64xf32>, vector<64x64xf32>, vector<16x64xf32> -> vector<16x64xf32>
    %105 = arith.addf %100, %104 : vector<16x64xf32>
    %c0_119 = arith.constant 0 : index
    %c0_120 = arith.constant 0 : index
    %106 = vector.load %arg11[%c0_119, %c0_120] : memref<1x64xf32, #tpu.memory_space<vmem>>, vector<1x64xf32>
    %107 = vector.broadcast %106 : vector<1x64xf32> to vector<16x64xf32>
    %108 = arith.addf %105, %107 : vector<16x64xf32>
    %cst_121 = arith.constant 0.000000e+00 : f32
    %109 = vector.broadcast %cst_121 : f32 to vector<16x64xf32>
    %110 = arith.maximumf %108, %109 : vector<16x64xf32>
    %c0_122 = arith.constant 0 : index
    %c0_123 = arith.constant 0 : index
    %111 = vector.load %arg12[%c0_122, %c0_123] : memref<64x4xf32, #tpu.memory_space<vmem>>, vector<64x4xf32>
    %cst_124 = arith.constant dense<0.000000e+00> : vector<16x4xf32>
    %112 = tpu.matmul %110, %111, %cst_124 {dimension_numbers = #tpu.dot_dimension_numbers<[1], [0], [0], [1], [0, 0, 1, 1], [], []>} : vector<16x64xf32>, vector<64x4xf32>, vector<16x4xf32> -> vector<16x4xf32>
    %c0_125 = arith.constant 0 : index
    %c0_126 = arith.constant 0 : index
    %113 = vector.load %arg13[%c0_125, %c0_126] : memref<1x4xf32, #tpu.memory_space<vmem>>, vector<1x4xf32>
    %114 = vector.broadcast %113 : vector<1x4xf32> to vector<16x4xf32>
    %115 = arith.addf %112, %114 : vector<16x4xf32>
    %116 = vector.shape_cast %115 : vector<16x4xf32> to vector<2x8x4xf32>
    %cst_127 = arith.constant dense<0.000000e+00> : vector<2x4xf32>
    %117 = vector.multi_reduction <add>, %116, %cst_127 [1] : vector<2x8x4xf32> to vector<2x4xf32>
    %cst_128 = arith.constant 8.000000e+00 : f32
    %118 = vector.broadcast %cst_128 : f32 to vector<2x4xf32>
    %119 = arith.divf %117, %118 : vector<2x4xf32>
    %120 = vector.shape_cast %119 : vector<2x4xf32> to vector<2x1x4xf32>
    %c0_129 = arith.constant 0 : index
    %c0_130 = arith.constant 0 : index
    %c0_131 = arith.constant 0 : index
    %121 = vector.load %arg14[%c0_129, %c0_130, %c0_131] : memref<2x1x4xf32, #tpu.memory_space<vmem>>, vector<2x1x4xf32>
    tpu.vector_store %arg14[%c0_129, %c0_130, %c0_131], %120 {strides = array<i32>} : memref<2x1x4xf32, #tpu.memory_space<vmem>>, vector<2x1x4xf32>,
    return
  }
  func.func @transform_0(%arg0: i32) -> (i32, i32, i32) {
    %c0_i32 = arith.constant 0 : i32
    %c0_i32_0 = arith.constant 0 : i32
    %c0_i32_1 = arith.constant 0 : i32
    return %arg0, %c0_i32, %c0_i32_0 : i32, i32, i32
  }
  func.func @transform_1(%arg0: i32) -> (i32, i32) {
    %c0_i32 = arith.constant 0 : i32
    %c0_i32_0 = arith.constant 0 : i32
    %c0_i32_1 = arith.constant 0 : i32
    return %c0_i32, %c0_i32_0 : i32, i32
  }
  func.func @transform_2(%arg0: i32) -> (i32, i32) {
    %c0_i32 = arith.constant 0 : i32
    %c0_i32_0 = arith.constant 0 : i32
    %c0_i32_1 = arith.constant 0 : i32
    return %c0_i32, %c0_i32_0 : i32, i32
  }
  func.func @transform_3(%arg0: i32) -> (i32, i32) {
    %c0_i32 = arith.constant 0 : i32
    %c0_i32_0 = arith.constant 0 : i32
    %c0_i32_1 = arith.constant 0 : i32
    return %c0_i32, %c0_i32_0 : i32, i32
  }
  func.func @transform_4(%arg0: i32) -> (i32, i32) {
    %c0_i32 = arith.constant 0 : i32
    %c0_i32_0 = arith.constant 0 : i32
    %c0_i32_1 = arith.constant 0 : i32
    return %c0_i32, %c0_i32_0 : i32, i32
  }
  func.func @transform_5(%arg0: i32) -> (i32, i32) {
    %c0_i32 = arith.constant 0 : i32
    %c0_i32_0 = arith.constant 0 : i32
    %c0_i32_1 = arith.constant 0 : i32
    return %c0_i32, %c0_i32_0 : i32, i32
  }
  func.func @transform_6(%arg0: i32) -> (i32, i32) {
    %c0_i32 = arith.constant 0 : i32
    %c0_i32_0 = arith.constant 0 : i32
    %c0_i32_1 = arith.constant 0 : i32
    return %c0_i32, %c0_i32_0 : i32, i32
  }
  func.func @transform_7(%arg0: i32) -> (i32, i32) {
    %c0_i32 = arith.constant 0 : i32
    %c0_i32_0 = arith.constant 0 : i32
    %c0_i32_1 = arith.constant 0 : i32
    return %c0_i32, %c0_i32_0 : i32, i32
  }
  func.func @transform_8(%arg0: i32) -> (i32, i32) {
    %c0_i32 = arith.constant 0 : i32
    %c0_i32_0 = arith.constant 0 : i32
    %c0_i32_1 = arith.constant 0 : i32
    return %c0_i32, %c0_i32_0 : i32, i32
  }
  func.func @transform_9(%arg0: i32) -> (i32, i32) {
    %c0_i32 = arith.constant 0 : i32
    %c0_i32_0 = arith.constant 0 : i32
    %c0_i32_1 = arith.constant 0 : i32
    return %c0_i32, %c0_i32_0 : i32, i32
  }
  func.func @transform_10(%arg0: i32) -> (i32, i32) {
    %c0_i32 = arith.constant 0 : i32
    %c0_i32_0 = arith.constant 0 : i32
    %c0_i32_1 = arith.constant 0 : i32
    return %c0_i32, %c0_i32_0 : i32, i32
  }
  func.func @transform_11(%arg0: i32) -> (i32, i32) {
    %c0_i32 = arith.constant 0 : i32
    %c0_i32_0 = arith.constant 0 : i32
    %c0_i32_1 = arith.constant 0 : i32
    return %c0_i32, %c0_i32_0 : i32, i32
  }
  func.func @transform_12(%arg0: i32) -> (i32, i32) {
    %c0_i32 = arith.constant 0 : i32
    %c0_i32_0 = arith.constant 0 : i32
    %c0_i32_1 = arith.constant 0 : i32
    return %c0_i32, %c0_i32_0 : i32, i32
  }
  func.func @transform_13(%arg0: i32) -> (i32, i32, i32) {
    %c0_i32 = arith.constant 0 : i32
    %c0_i32_0 = arith.constant 0 : i32
    %c0_i32_1 = arith.constant 0 : i32
    return %arg0, %c0_i32, %c0_i32_0 : i32, i32, i32
  }
}

</mosaic_0001>

<llo_original>
// kernel: _lambda_.1
$region0: #{_lambda_.1}
  #allocation0 [shape = 'u32[]', space=smem, size = 0x4, offset = 0x4, fixed_abs, tag = 'smem constant byte address 0x4 - core index']
  #allocation1 [shape = 'u32[144,128]{1,0:T(1,128)}', space=vmem, size = 0x12000, scoped, tag = 'internal scratch']
  #allocation2 [shape = 'f32[2,136,16]{2,1,0:T(8,128)}', space=vmem, size = 0x22000, scoped, tag = 'scratch operand']
  #allocation3 [shape = 'f32[2,72,32]{2,1,0:T(8,128)}', space=vmem, size = 0x12000, scoped, tag = 'scratch operand']
  #allocation4 [shape = 'f32[2,40,32]{2,1,0:T(8,128)}', space=vmem, size = 0xa000, scoped, tag = 'scratch operand']
  #allocation5 [shape = 'f32[2,24,64]{2,1,0:T(8,128)}', space=vmem, size = 0x6000, scoped, tag = 'scratch operand']
  %s0 = inlined_call_operand.vmem [shape: f32[4,264,1], index: 0, kind: input, shape index: {}]
  %s1 = inlined_call_operand.vmem [shape: f32[3,16], index: 1, kind: input, shape index: {}]
  %s2 = inlined_call_operand.vmem [shape: f32[1,16], index: 2, kind: input, shape index: {}]
  %s3 = inlined_call_operand.vmem [shape: f32[48,32], index: 3, kind: input, shape index: {}]
  %s4 = inlined_call_operand.vmem [shape: f32[1,32], index: 4, kind: input, shape index: {}]
  %s5 = inlined_call_operand.vmem [shape: f32[96,32], index: 5, kind: input, shape index: {}]
  %s6 = inlined_call_operand.vmem [shape: f32[1,32], index: 6, kind: input, shape index: {}]
  %s7 = inlined_call_operand.vmem [shape: f32[96,64], index: 7, kind: input, shape index: {}]
  %s8 = inlined_call_operand.vmem [shape: f32[1,64], index: 8, kind: input, shape index: {}]
  %s9 = inlined_call_operand.vmem [shape: f32[192,64], index: 9, kind: input, shape index: {}]
  %s10 = inlined_call_operand.vmem [shape: f32[1,64], index: 10, kind: input, shape index: {}]
  %s11 = inlined_call_operand.vmem [shape: f32[64,4], index: 11, kind: input, shape index: {}]
  %s12 = inlined_call_operand.vmem [shape: f32[1,4], index: 12, kind: input, shape index: {}]
  %s13 = inlined_call_operand.hbm [shape: f32[4,1,4], index: 13, kind: output, shape index: {}]
  %s14 = sld [smem:[#allocation0]]
  $region85: #{_lambda_.1} parent=0
    _
  %s16 = ssub.s32 1, %s14
  %s17 = scalar_select 0, %s16, %s14
  $region1: #{_lambda_.1} parent=0
    #allocation6 [shape = 'u8[2048]{0}', space=vmem, size = 0x800, scoped, tag = 'output window, operand 0']
    #allocation7 [shape = 's32[2]{0}', space=sflag, size = 0x8, scoped, tag = 'scoped memory for _lambda_.1']
    %18 = vsyncpa [#allocation7], 0
    %s19 = scalar_lea.sflag [#allocation7], 1
    %20 = vsyncpa %s19, 0
    loop: start=0, step=1, limit=4
    $region2: #{_lambda_.1} parent=1 // loop_pre_header
      _
    $region3: #{_lambda_.1} parent=1 // loop_header
      %s22 = sphi 0, %s26
      %p23 = scmp.ge.s32.totalorder %s22, 4
      %s32 = sphi 0, %s34
      %s35 = sphi 0, %s32
      %s36 = sphi 0, %s35
      %s52 = sphi 0, %s36
      %s56 = sphi 0, %s56
      %s58 = sphi 0, %s56
      %s59 = sphi 0, %s58
      %s73 = sphi 0, %s59
      %s77 = sphi 0, %s77
      %s79 = sphi 0, %s77
      %s80 = sphi 0, %s79
      %s94 = sphi 0, %s80
      %s98 = sphi 0, %s98
      %s100 = sphi 0, %s98
      %s101 = sphi 0, %s100
      %s115 = sphi 0, %s101
      %s119 = sphi 0, %s119
      %s121 = sphi 0, %s119
      %s122 = sphi 0, %s121
      %s136 = sphi 0, %s122
      %s140 = sphi 0, %s140
      %s142 = sphi 0, %s140
      %s143 = sphi 0, %s142
      %s157 = sphi 0, %s143
      %s161 = sphi 0, %s161
      %s163 = sphi 0, %s161
      %s164 = sphi 0, %s163
      %s178 = sphi 0, %s164
      %s182 = sphi 0, %s182
      %s184 = sphi 0, %s182
      %s185 = sphi 0, %s184
      %s199 = sphi 0, %s185
      %s203 = sphi 0, %s203
      %s205 = sphi 0, %s203
      %s206 = sphi 0, %s205
      %s220 = sphi 0, %s206
      %s224 = sphi 0, %s224
      %s226 = sphi 0, %s224
      %s227 = sphi 0, %s226
      %s241 = sphi 0, %s227
      %s245 = sphi 0, %s245
      %s247 = sphi 0, %s245
      %s248 = sphi 0, %s247
      %s262 = sphi 0, %s248
      %s266 = sphi 0, %s266
      %s268 = sphi 0, %s266
      %s269 = sphi 0, %s268
      %s283 = sphi 0, %s269
      %s287 = sphi 0, %s287
      %s289 = sphi 0, %s287
      %s290 = sphi 0, %s289
      %s304 = sphi 0, %s290
      %s310 = sphi 0, %s312
      %s313 = sphi 0, %s310
      %s314 = sphi 0, %s313
      %s330 = sphi 0, %s314
    $region4: #{_lambda_.1} parent=1 // loop_header_branch
      %25 = sbr.rel (%p23) target = $region8
    $region5: #{_lambda_.1} parent=1 // loop_body
      %s27 = ssub.s32 %s22, 1
      %s28 = ssub.s32 %s22, 2
      %s29 = sadd.s32 %s22, 1
      %s30 = ssub.s32 %s22, %s29
      %p31 = scmp.eq.s32.totalorder %s30, 0
      %s33 = sadd.s32 %s32, 1
      %s34 = scalar_select %p31, %s32, %s33
      %p37 = pneg %p31
      %p38 = scmp.eq.s32.totalorder %s22, 1
      %p39 = por %p37, %p38
      %p40 = scmp.ne.s32.totalorder %s32, %s35
      %p41 = scmp.eq.s32.totalorder %s22, 0
      %p42 = por %p40, %p41
      %p43 = scmp.ne.s32.totalorder %s32, %s35
      %p44 = scmp.eq.s32.totalorder %s27, 1
      %p45 = por %p43, %p44
      %p46 = scmp.ne.s32.totalorder %s35, %s36
      %p47 = scmp.eq.s32.totalorder %s27, 0
      %p48 = por %p46, %p47
      %p49 = scmp.ne.s32.totalorder %s35, %s36
      %p50 = scmp.eq.s32.totalorder %s28, 1
      %p51 = por %p49, %p50
      %p53 = scmp.ne.s32.totalorder %s36, %s52
      %p54 = scmp.eq.s32.totalorder %s28, 0
      %p55 = por %p53, %p54
      %s57 = sadd.s32 %s56, 1
      %p60 = scmp.eq.s32.totalorder %s22, 1
      %p61 = scmp.ne.s32.totalorder %s56, %s58
      %p62 = scmp.eq.s32.totalorder %s22, 0
      %p63 = por %p61, %p62
      %p64 = scmp.ne.s32.totalorder %s56, %s58
      %p65 = scmp.eq.s32.totalorder %s27, 1
      %p66 = por %p64, %p65
      %p67 = scmp.ne.s32.totalorder %s58, %s59
      %p68 = scmp.eq.s32.totalorder %s27, 0
      %p69 = por %p67, %p68
      %p70 = scmp.ne.s32.totalorder %s58, %s59
      %p71 = scmp.eq.s32.totalorder %s28, 1
      %p72 = por %p70, %p71
      %p74 = scmp.ne.s32.totalorder %s59, %s73
      %p75 = scmp.eq.s32.totalorder %s28, 0
      %p76 = por %p74, %p75
      %s78 = sadd.s32 %s77, 1
      %p81 = scmp.eq.s32.totalorder %s22, 1
      %p82 = scmp.ne.s32.totalorder %s77, %s79
      %p83 = scmp.eq.s32.totalorder %s22, 0
      %p84 = por %p82, %p83
      %p85 = scmp.ne.s32.totalorder %s77, %s79
      %p86 = scmp.eq.s32.totalorder %s27, 1
      %p87 = por %p85, %p86
      %p88 = scmp.ne.s32.totalorder %s79, %s80
      %p89 = scmp.eq.s32.totalorder %s27, 0
      %p90 = por %p88, %p89
      %p91 = scmp.ne.s32.totalorder %s79, %s80
      %p92 = scmp.eq.s32.totalorder %s28, 1
      %p93 = por %p91, %p92
      %p95 = scmp.ne.s32.totalorder %s80, %s94
      %p96 = scmp.eq.s32.totalorder %s28, 0
      %p97 = por %p95, %p96
      %s99 = sadd.s32 %s98, 1
      %p102 = scmp.eq.s32.totalorder %s22, 1
      %p103 = scmp.ne.s32.totalorder %s98, %s100
      %p104 = scmp.eq.s32.totalorder %s22, 0
      %p105 = por %p103, %p104
      %p106 = scmp.ne.s32.totalorder %s98, %s100
      %p107 = scmp.eq.s32.totalorder %s27, 1
      %p108 = por %p106, %p107
      %p109 = scmp.ne.s32.totalorder %s100, %s101
      %p110 = scmp.eq.s32.totalorder %s27, 0
      %p111 = por %p109, %p110
      %p112 = scmp.ne.s32.totalorder %s100, %s101
      %p113 = scmp.eq.s32.totalorder %s28, 1
      %p114 = por %p112, %p113
      %p116 = scmp.ne.s32.totalorder %s101, %s115
      %p117 = scmp.eq.s32.totalorder %s28, 0
      %p118 = por %p116, %p117
      %s120 = sadd.s32 %s119, 1
      %p123 = scmp.eq.s32.totalorder %s22, 1
      %p124 = scmp.ne.s32.totalorder %s119, %s121
      %p125 = scmp.eq.s32.totalorder %s22, 0
      %p126 = por %p124, %p125
      %p127 = scmp.ne.s32.totalorder %s119, %s121
      %p128 = scmp.eq.s32.totalorder %s27, 1
      %p129 = por %p127, %p128
      %p130 = scmp.ne.s32.totalorder %s121, %s122
      %p131 = scmp.eq.s32.totalorder %s27, 0
      %p132 = por %p130, %p131
      %p133 = scmp.ne.s32.totalorder %s121, %s122
      %p134 = scmp.eq.s32.totalorder %s28, 1
      %p135 = por %p133, %p134
      %p137 = scmp.ne.s32.totalorder %s122, %s136
      %p138 = scmp.eq.s32.totalorder %s28, 0
      %p139 = por %p137, %p138
      %s141 = sadd.s32 %s140, 1
      %p144 = scmp.eq.s32.totalorder %s22, 1
      %p145 = scmp.ne.s32.totalorder %s140, %s142
      %p146 = scmp.eq.s32.totalorder %s22, 0
      %p147 = por %p145, %p146
      %p148 = scmp.ne.s32.totalorder %s140, %s142
      %p149 = scmp.eq.s32.totalorder %s27, 1
      %p150 = por %p148, %p149
      %p151 = scmp.ne.s32.totalorder %s142, %s143
      %p152 = scmp.eq.s32.totalorder %s27, 0
      %p153 = por %p151, %p152
      %p154 = scmp.ne.s32.totalorder %s142, %s143
      %p155 = scmp.eq.s32.totalorder %s28, 1
      %p156 = por %p154, %p155
      %p158 = scmp.ne.s32.totalorder %s143, %s157
      %p159 = scmp.eq.s32.totalorder %s28, 0
      %p160 = por %p158, %p159
      %s162 = sadd.s32 %s161, 1
      %p165 = scmp.eq.s32.totalorder %s22, 1
      %p166 = scmp.ne.s32.totalorder %s161, %s163
      %p167 = scmp.eq.s32.totalorder %s22, 0
      %p168 = por %p166, %p167
      %p169 = scmp.ne.s32.totalorder %s161, %s163
      %p170 = scmp.eq.s32.totalorder %s27, 1
      %p171 = por %p169, %p170
      %p172 = scmp.ne.s32.totalorder %s163, %s164
      %p173 = scmp.eq.s32.totalorder %s27, 0
      %p174 = por %p172, %p173
      %p175 = scmp.ne.s32.totalorder %s163, %s164
      %p176 = scmp.eq.s32.totalorder %s28, 1
      %p177 = por %p175, %p176
      %p179 = scmp.ne.s32.totalorder %s164, %s178
      %p180 = scmp.eq.s32.totalorder %s28, 0
      %p181 = por %p179, %p180
      %s183 = sadd.s32 %s182, 1
      %p186 = scmp.eq.s32.totalorder %s22, 1
      %p187 = scmp.ne.s32.totalorder %s182, %s184
      %p188 = scmp.eq.s32.totalorder %s22, 0
      %p189 = por %p187, %p188
      %p190 = scmp.ne.s32.totalorder %s182, %s184
      %p191 = scmp.eq.s32.totalorder %s27, 1
      %p192 = por %p190, %p191
      %p193 = scmp.ne.s32.totalorder %s184, %s185
      %p194 = scmp.eq.s32.totalorder %s27, 0
      %p195 = por %p193, %p194
      %p196 = scmp.ne.s32.totalorder %s184, %s185
      %p197 = scmp.eq.s32.totalorder %s28, 1
      %p198 = por %p196, %p197
      %p200 = scmp.ne.s32.totalorder %s185, %s199
      %p201 = scmp.eq.s32.totalorder %s28, 0
      %p202 = por %p200, %p201
      %s204 = sadd.s32 %s203, 1
      %p207 = scmp.eq.s32.totalorder %s22, 1
      %p208 = scmp.ne.s32.totalorder %s203, %s205
      %p209 = scmp.eq.s32.totalorder %s22, 0
      %p210 = por %p208, %p209
      %p211 = scmp.ne.s32.totalorder %s203, %s205
      %p212 = scmp.eq.s32.totalorder %s27, 1
      %p213 = por %p211, %p212
      %p214 = scmp.ne.s32.totalorder %s205, %s206
      %p215 = scmp.eq.s32.totalorder %s27, 0
      %p216 = por %p214, %p215
      %p217 = scmp.ne.s32.totalorder %s205, %s206
      %p218 = scmp.eq.s32.totalorder %s28, 1
      %p219 = por %p217, %p218
      %p221 = scmp.ne.s32.totalorder %s206, %s220
      %p222 = scmp.eq.s32.totalorder %s28, 0
      %p223 = por %p221, %p222
      %s225 = sadd.s32 %s224, 1
      %p228 = scmp.eq.s32.totalorder %s22, 1
      %p229 = scmp.ne.s32.totalorder %s224, %s226
      %p230 = scmp.eq.s32.totalorder %s22, 0
      %p231 = por %p229, %p230
      %p232 = scmp.ne.s32.totalorder %s224, %s226
      %p233 = scmp.eq.s32.totalorder %s27, 1
      %p234 = por %p232, %p233
      %p235 = scmp.ne.s32.totalorder %s226, %s227
      %p236 = scmp.eq.s32.totalorder %s27, 0
      %p237 = por %p235, %p236
      %p238 = scmp.ne.s32.totalorder %s226, %s227
      %p239 = scmp.eq.s32.totalorder %s28, 1
      %p240 = por %p238, %p239
      %p242 = scmp.ne.s32.totalorder %s227, %s241
      %p243 = scmp.eq.s32.totalorder %s28, 0
      %p244 = por %p242, %p243
      %s246 = sadd.s32 %s245, 1
      %p249 = scmp.eq.s32.totalorder %s22, 1
      %p250 = scmp.ne.s32.totalorder %s245, %s247
      %p251 = scmp.eq.s32.totalorder %s22, 0
      %p252 = por %p250, %p251
      %p253 = scmp.ne.s32.totalorder %s245, %s247
      %p254 = scmp.eq.s32.totalorder %s27, 1
      %p255 = por %p253, %p254
      %p256 = scmp.ne.s32.totalorder %s247, %s248
      %p257 = scmp.eq.s32.totalorder %s27, 0
      %p258 = por %p256, %p257
      %p259 = scmp.ne.s32.totalorder %s247, %s248
      %p260 = scmp.eq.s32.totalorder %s28, 1
      %p261 = por %p259, %p260
      %p263 = scmp.ne.s32.totalorder %s248, %s262
      %p264 = scmp.eq.s32.totalorder %s28, 0
      %p265 = por %p263, %p264
      %s267 = sadd.s32 %s266, 1
      %p270 = scmp.eq.s32.totalorder %s22, 1
      %p271 = scmp.ne.s32.totalorder %s266, %s268
      %p272 = scmp.eq.s32.totalorder %s22, 0
      %p273 = por %p271, %p272
      %p274 = scmp.ne.s32.totalorder %s266, %s268
      %p275 = scmp.eq.s32.totalorder %s27, 1
      %p276 = por %p274, %p275
      %p277 = scmp.ne.s32.totalorder %s268, %s269
      %p278 = scmp.eq.s32.totalorder %s27, 0
      %p279 = por %p277, %p278
      %p280 = scmp.ne.s32.totalorder %s268, %s269
      %p281 = scmp.eq.s32.totalorder %s28, 1
      %p282 = por %p280, %p281
      %p284 = scmp.ne.s32.totalorder %s269, %s283
      %p285 = scmp.eq.s32.totalorder %s28, 0
      %p286 = por %p284, %p285
      %s288 = sadd.s32 %s287, 1
      %p291 = scmp.eq.s32.totalorder %s22, 1
      %p292 = scmp.ne.s32.totalorder %s287, %s289
      %p293 = scmp.eq.s32.totalorder %s22, 0
      %p294 = por %p292, %p293
      %p295 = scmp.ne.s32.totalorder %s287, %s289
      %p296 = scmp.eq.s32.totalorder %s27, 1
      %p297 = por %p295, %p296
      %p298 = scmp.ne.s32.totalorder %s289, %s290
      %p299 = scmp.eq.s32.totalorder %s27, 0
      %p300 = por %p298, %p299
      %p301 = scmp.ne.s32.totalorder %s289, %s290
      %p302 = scmp.eq.s32.totalorder %s28, 1
      %p303 = por %p301, %p302
      %p305 = scmp.ne.s32.totalorder %s290, %s304
      %p306 = scmp.eq.s32.totalorder %s28, 0
      %p307 = por %p305, %p306
      %s308 = ssub.s32 %s22, %s29
      %p309 = scmp.eq.s32.totalorder %s308, 0
      %s311 = sadd.s32 %s310, 1
      %s312 = scalar_select %p309, %s310, %s311
      %p315 = pneg %p309
      %p316 = scmp.eq.s32.totalorder %s22, 1
      %p317 = por %p315, %p316
      %p318 = scmp.ne.s32.totalorder %s310, %s313
      %p319 = scmp.eq.s32.totalorder %s22, 0
      %p320 = por %p318, %p319
      %p321 = scmp.ne.s32.totalorder %s310, %s313
      %p322 = scmp.eq.s32.totalorder %s27, 1
      %p323 = por %p321, %p322
      %p324 = scmp.ne.s32.totalorder %s313, %s314
      %p325 = scmp.eq.s32.totalorder %s27, 0
      %p326 = por %p324, %p325
      %p327 = scmp.ne.s32.totalorder %s313, %s314
      %p328 = scmp.eq.s32.totalorder %s28, 1
      %p329 = por %p327, %p328
      %p331 = scmp.ne.s32.totalorder %s314, %s330
      %p332 = scmp.eq.s32.totalorder %s28, 0
      %p333 = por %p331, %p332
      %p334 = scmp.le.s32.totalorder 1, %s22
      %p335 = scmp.lt.s32.totalorder %s22, 3
      %p336 = pnand %p334, %p335
      %p337 = pneg %p336
      // Predicated region
      $region9: #{_lambda_.1} parent=5 // pred_check
        _
      $region10: #{_lambda_.1} parent=5 // pred_check_branch
        %339 = sbr.rel (%p336) target = $region12
      $region11: #{_lambda_.1} parent=5 // pred_region
        %s340 = ssub.s32 %s22, 1
        // Predicated region
        $region13: #{_lambda_.1} parent=11 // pred_check
          %p341 = pneg %p69
        $region14: #{_lambda_.1} parent=11 // pred_check_branch
          %343 = sbr.rel (%p341) target = $region16
        $region15: #{_lambda_.1} parent=11 // pred_region
          _
        $region16: #{_lambda_.1} parent=11 // pred_fallthru
          _
        // Predicated region
        $region17: #{_lambda_.1} parent=11 // pred_check
          %p344 = pneg %p90
        $region18: #{_lambda_.1} parent=11 // pred_check_branch
          %346 = sbr.rel (%p344) target = $region20
        $region19: #{_lambda_.1} parent=11 // pred_region
          _
        $region20: #{_lambda_.1} parent=11 // pred_fallthru
          _
        // Predicated region
        $region21: #{_lambda_.1} parent=11 // pred_check
          %p347 = pneg %p111
        $region22: #{_lambda_.1} parent=11 // pred_check_branch
          %349 = sbr.rel (%p347) target = $region24
        $region23: #{_lambda_.1} parent=11 // pred_region
          _
        $region24: #{_lambda_.1} parent=11 // pred_fallthru
          _
        // Predicated region
        $region25: #{_lambda_.1} parent=11 // pred_check
          %p350 = pneg %p132
        $region26: #{_lambda_.1} parent=11 // pred_check_branch
          %352 = sbr.rel (%p350) target = $region28
        $region27: #{_lambda_.1} parent=11 // pred_region
          _
        $region28: #{_lambda_.1} parent=11 // pred_fallthru
          _
        // Predicated region
        $region29: #{_lambda_.1} parent=11 // pred_check
          %p353 = pneg %p153
        $region30: #{_lambda_.1} parent=11 // pred_check_branch
          %355 = sbr.rel (%p353) target = $region32
        $region31: #{_lambda_.1} parent=11 // pred_region
          _
        $region32: #{_lambda_.1} parent=11 // pred_fallthru
          _
        // Predicated region
        $region33: #{_lambda_.1} parent=11 // pred_check
          %p356 = pneg %p174
        $region34: #{_lambda_.1} parent=11 // pred_check_branch
          %358 = sbr.rel (%p356) target = $region36
        $region35: #{_lambda_.1} parent=11 // pred_region
          _
        $region36: #{_lambda_.1} parent=11 // pred_fallthru
          _
        // Predicated region
        $region37: #{_lambda_.1} parent=11 // pred_check
          %p359 = pneg %p195
        $region38: #{_lambda_.1} parent=11 // pred_check_branch
          %361 = sbr.rel (%p359) target = $region40
        $region39: #{_lambda_.1} parent=11 // pred_region
          _
        $region40: #{_lambda_.1} parent=11 // pred_fallthru
          _
        // Predicated region
        $region41: #{_lambda_.1} parent=11 // pred_check
          %p362 = pneg %p216
        $region42: #{_lambda_.1} parent=11 // pred_check_branch
          %364 = sbr.rel (%p362) target = $region44
        $region43: #{_lambda_.1} parent=11 // pred_region
          _
        $region44: #{_lambda_.1} parent=11 // pred_fallthru
          _
        // Predicated region
        $region45: #{_lambda_.1} parent=11 // pred_check
          %p365 = pneg %p237
        $region46: #{_lambda_.1} parent=11 // pred_check_branch
          %367 = sbr.rel (%p365) target = $region48
        $region47: #{_lambda_.1} parent=11 // pred_region
          _
        $region48: #{_lambda_.1} parent=11 // pred_fallthru
          _
        // Predicated region
        $region49: #{_lambda_.1} parent=11 // pred_check
          %p368 = pneg %p258
        $region50: #{_lambda_.1} parent=11 // pred_check_branch
          %370 = sbr.rel (%p368) target = $region52
        $region51: #{_lambda_.1} parent=11 // pred_region
          _
        $region52: #{_lambda_.1} parent=11 // pred_fallthru
          _
        // Predicated region
        $region53: #{_lambda_.1} parent=11 // pred_check
          %p371 = pneg %p279
        $region54: #{_lambda_.1} parent=11 // pred_check_branch
          %373 = sbr.rel (%p371) target = $region56
        $region55: #{_lambda_.1} parent=11 // pred_region
          _
        $region56: #{_lambda_.1} parent=11 // pred_fallthru
          _
        // Predicated region
        $region57: #{_lambda_.1} parent=11 // pred_check
          %p374 = pneg %p300
        $region58: #{_lambda_.1} parent=11 // pred_check_branch
          %376 = sbr.rel (%p374) target = $region60
        $region59: #{_lambda_.1} parent=11 // pred_region
          _
        $region60: #{_lambda_.1} parent=11 // pred_fallthru
          _
      $region12: #{_lambda_.1} parent=5 // pred_fallthru
        _
      %p377 = scmp.lt.s32.totalorder %s22, 2
      // Predicated region
      $region61: #{_lambda_.1} parent=5 // pred_check
        %p378 = pneg %p377
      $region62: #{_lambda_.1} parent=5 // pred_check_branch
        %380 = sbr.rel (%p378) target = $region64
      $region63: #{_lambda_.1} parent=5 // pred_region
        // Predicated region
        $region65: #{_lambda_.1} parent=63 // pred_check
          %p381 = pneg %p42
        $region66: #{_lambda_.1} parent=63 // pred_check_branch
          %383 = sbr.rel (%p381) target = $region68
        $region67: #{_lambda_.1} parent=63 // pred_region
          %s384 = smul.u32 2, %s22
          %p385 = scmp.lt.s32.totalorder %s384, 3
          %s386 = scalar_select %p385, %s384, 3
          %s387 = smul.addr %s386, 33
          %s388 = smul.addr %s387, 8
          %s389 = scalar_lea.vmem %s0, %s388
          %s390 = smul.u32 2, %s22
        $region68: #{_lambda_.1} parent=63 // pred_fallthru
          _
      $region64: #{_lambda_.1} parent=5 // pred_fallthru
        _
      %p391 = scmp.le.s32.totalorder 1, %s22
      %p392 = scmp.lt.s32.totalorder %s22, 3
      %p393 = pnand %p391, %p392
      %p394 = pneg %p393
      // Predicated region
      $region69: #{_lambda_.1} parent=5 // pred_check
        _
      $region70: #{_lambda_.1} parent=5 // pred_check_branch
        %396 = sbr.rel (%p393) target = $region72
      $region71: #{_lambda_.1} parent=5 // pred_region
        %s397 = ssub.s32 %s22, 1
        %s398 = smul.u32 2, %s27
        %p399 = scmp.lt.s32.totalorder %s398, 3
        %s400 = scalar_select %p399, %s398, 3
        %s401 = smul.addr %s400, 33
        %s402 = smul.addr %s401, 8
        %s403 = scalar_lea.vmem %s0, %s402
        %p404 = pneg %p48
        %p405 = pneg %p45
        %p406 = pneg %p69
        %p407 = pneg %p66
        %p408 = pneg %p90
        %p409 = pneg %p87
        %p410 = pneg %p111
        %p411 = pneg %p108
        %p412 = pneg %p132
        %p413 = pneg %p129
        %p414 = pneg %p153
        %p415 = pneg %p150
        %p416 = pneg %p174
        %p417 = pneg %p171
        %p418 = pneg %p195
        %p419 = pneg %p192
        %p420 = pneg %p216
        %p421 = pneg %p213
        %p422 = pneg %p237
        %p423 = pneg %p234
        %p424 = pneg %p258
        %p425 = pneg %p255
        %p426 = pneg %p279
        %p427 = pneg %p276
        %p428 = pneg %p300
        %p429 = pneg %p297
        %p430 = pneg %p326
        %p431 = pneg %p323
        %s432 = sand.u32 %s313, 1
        %s433 = scalar_lea.sflag [#allocation7], %s432
        %s434 = sand.u32 %s313, 1
        %s435 = smul.addr %s434, 2
        %s436 = scalar_lea.vmem [#allocation6], %s435
        %s437 = smul.u32 2, %s27
        %p438 = scmp.lt.s32.totalorder %s437, 3
        %s439 = scalar_select %p438, %s437, 3
        %s440 = smul.addr %s439, 33
        %s441 = smul.addr %s440, 8
        %s442 = scalar_lea.vmem %s0, %s441
        %s443 = smul.u32 2, %s27
        %s444 = smul.u32 2, %s27
        %vm445 = vcmask 130048
        %446 = vst.msk [vmem:[#allocation2] sm:$0xff] %vm445, 0.0
        %447 = vst.msk [vmem:[#allocation2 + $0x88] sm:$0xff] %vm445, 0.0
        %vm448 = vcmask 261120
        %449 = vst.msk [vmem:[#allocation3] sm:$0xff] %vm448, 0.0
        %450 = vst.msk [vmem:[#allocation3 + $0x48] sm:$0xff] %vm448, 0.0
        %451 = vst.msk [vmem:[#allocation4] sm:$0xff] %vm448, 0.0
        %452 = vst.msk [vmem:[#allocation4 + $0x28] sm:$0xff] %vm448, 0.0
        %vm453 = vcmask 523264
        %454 = vst.msk [vmem:[#allocation5] sm:$0xff] %vm453, 0.0
        %455 = vst.msk [vmem:[#allocation5 + $0x18] sm:$0xff] %vm453, 0.0
        %s456 = scalar_lea.vmem %s442, 7
        %v457 = vld [vmem:[%s456] ss:$2 sm:$0xff]
        %s458 = scalar_lea.vmem %s442, 23
        %v459 = vld [vmem:[%s458] ss:$2 sm:$0xff]
        %s460 = scalar_lea.vmem %s442, 39
        %v461 = vld [vmem:[%s460] ss:$2 sm:$0xff]
        %s462 = scalar_lea.vmem %s442, 55
        %v463 = vld [vmem:[%s462] ss:$2 sm:$0xff]
        %s464 = scalar_lea.vmem %s442, 71
        %v465 = vld [vmem:[%s464] ss:$2 sm:$0xff]
        %s466 = scalar_lea.vmem %s442, 87
        %v467 = vld [vmem:[%s466] ss:$2 sm:$0xff]
        %s468 = scalar_lea.vmem %s442, 103
        %v469 = vld [vmem:[%s468] ss:$2 sm:$0xff]
        %s470 = scalar_lea.vmem %s442, 119
        %v471 = vld [vmem:[%s470] ss:$2 sm:$0xff]
        %s472 = scalar_lea.vmem %s442, 135
        %v473 = vld [vmem:[%s472] ss:$2 sm:$0xff]
        %s474 = scalar_lea.vmem %s442, 151
        %v475 = vld [vmem:[%s474] ss:$2 sm:$0xff]
        %s476 = scalar_lea.vmem %s442, 167
        %v477 = vld [vmem:[%s476] ss:$2 sm:$0xff]
        %s478 = scalar_lea.vmem %s442, 183
        %v479 = vld [vmem:[%s478] ss:$2 sm:$0xff]
        %s480 = scalar_lea.vmem %s442, 199
        %v481 = vld [vmem:[%s480] ss:$2 sm:$0xff]
        %s482 = scalar_lea.vmem %s442, 215
        %v483 = vld [vmem:[%s482] ss:$2 sm:$0xff]
        %s484 = scalar_lea.vmem %s442, 231
        %v485 = vld [vmem:[%s484] ss:$2 sm:$0xff]
        %s486 = scalar_lea.vmem %s442, 247
        %v487 = vld [vmem:[%s486] ss:$2 sm:$0xff]
        %s488 = scalar_lea.vmem %s442, 271
        %v489 = vld [vmem:[%s488] ss:$2 sm:$0xff]
        %s490 = scalar_lea.vmem %s442, 287
        %v491 = vld [vmem:[%s490] ss:$2 sm:$0xff]
        %s492 = scalar_lea.vmem %s442, 303
        %v493 = vld [vmem:[%s492] ss:$2 sm:$0xff]
        %s494 = scalar_lea.vmem %s442, 319
        %v495 = vld [vmem:[%s494] ss:$2 sm:$0xff]
        %s496 = scalar_lea.vmem %s442, 335
        %v497 = vld [vmem:[%s496] ss:$2 sm:$0xff]
        %s498 = scalar_lea.vmem %s442, 351
        %v499 = vld [vmem:[%s498] ss:$2 sm:$0xff]
        %s500 = scalar_lea.vmem %s442, 367
        %v501 = vld [vmem:[%s500] ss:$2 sm:$0xff]
        %s502 = scalar_lea.vmem %s442, 383
        %v503 = vld [vmem:[%s502] ss:$2 sm:$0xff]
        %s504 = scalar_lea.vmem %s442, 399
        %v505 = vld [vmem:[%s504] ss:$2 sm:$0xff]
        %s506 = scalar_lea.vmem %s442, 415
        %v507 = vld [vmem:[%s506] ss:$2 sm:$0xff]
        %s508 = scalar_lea.vmem %s442, 431
        %v509 = vld [vmem:[%s508] ss:$2 sm:$0xff]
        %s510 = scalar_lea.vmem %s442, 447
        %v511 = vld [vmem:[%s510] ss:$2 sm:$0xff]
        %s512 = scalar_lea.vmem %s442, 463
        %v513 = vld [vmem:[%s512] ss:$2 sm:$0xff]
        %s514 = scalar_lea.vmem %s442, 479
        %v515 = vld [vmem:[%s514] ss:$2 sm:$0xff]
        %s516 = scalar_lea.vmem %s442, 495
        %v517 = vld [vmem:[%s516] ss:$2 sm:$0xff]
        %s518 = scalar_lea.vmem %s442, 511
        %v519 = vld [vmem:[%s518] ss:$2 sm:$0xff]
        %v520 = vld [vmem:[%s1] sm:$0x1]
        %s521 = scalar_lea.vmem %s442, 8
        %v522 = vld [vmem:[%s521] ss:$2 sm:$0xff]
        %s523 = scalar_lea.vmem %s442, 24
        %v524 = vld [vmem:[%s523] ss:$2 sm:$0xff]
        %s525 = scalar_lea.vmem %s442, 40
        %v526 = vld [vmem:[%s525] ss:$2 sm:$0xff]
        %s527 = scalar_lea.vmem %s442, 56
        %v528 = vld [vmem:[%s527] ss:$2 sm:$0xff]
        %s529 = scalar_lea.vmem %s442, 72
        %v530 = vld [vmem:[%s529] ss:$2 sm:$0xff]
        %s531 = scalar_lea.vmem %s442, 88
        %v532 = vld [vmem:[%s531] ss:$2 sm:$0xff]
        %s533 = scalar_lea.vmem %s442, 104
        %v534 = vld [vmem:[%s533] ss:$2 sm:$0xff]
        %s535 = scalar_lea.vmem %s442, 120
        %v536 = vld [vmem:[%s535] ss:$2 sm:$0xff]
        %s537 = scalar_lea.vmem %s442, 136
        %v538 = vld [vmem:[%s537] ss:$2 sm:$0xff]
        %s539 = scalar_lea.vmem %s442, 152
        %v540 = vld [vmem:[%s539] ss:$2 sm:$0xff]
        %s541 = scalar_lea.vmem %s442, 168
        %v542 = vld [vmem:[%s541] ss:$2 sm:$0xff]
        %s543 = scalar_lea.vmem %s442, 184
        %v544 = vld [vmem:[%s543] ss:$2 sm:$0xff]
        %s545 = scalar_lea.vmem %s442, 200
        %v546 = vld [vmem:[%s545] ss:$2 sm:$0xff]
        %s547 = scalar_lea.vmem %s442, 216
        %v548 = vld [vmem:[%s547] ss:$2 sm:$0xff]
        %s549 = scalar_lea.vmem %s442, 232
        %v550 = vld [vmem:[%s549] ss:$2 sm:$0xff]
        %s551 = scalar_lea.vmem %s442, 248
        %v552 = vld [vmem:[%s551] ss:$2 sm:$0xff]
        %s553 = scalar_lea.vmem %s442, 272
        %v554 = vld [vmem:[%s553] ss:$2 sm:$0xff]
        %s555 = scalar_lea.vmem %s442, 288
        %v556 = vld [vmem:[%s555] ss:$2 sm:$0xff]
        %s557 = scalar_lea.vmem %s442, 304
        %v558 = vld [vmem:[%s557] ss:$2 sm:$0xff]
        %s559 = scalar_lea.vmem %s442, 320
        %v560 = vld [vmem:[%s559] ss:$2 sm:$0xff]
        %s561 = scalar_lea.vmem %s442, 336
        %v562 = vld [vmem:[%s561] ss:$2 sm:$0xff]
        %s563 = scalar_lea.vmem %s442, 352
        %v564 = vld [vmem:[%s563] ss:$2 sm:$0xff]
        %s565 = scalar_lea.vmem %s442, 368
        %v566 = vld [vmem:[%s565] ss:$2 sm:$0xff]
        %s567 = scalar_lea.vmem %s442, 384
        %v568 = vld [vmem:[%s567] ss:$2 sm:$0xff]
        %s569 = scalar_lea.vmem %s442, 400
        %v570 = vld [vmem:[%s569] ss:$2 sm:$0xff]
        %s571 = scalar_lea.vmem %s442, 416
        %v572 = vld [vmem:[%s571] ss:$2 sm:$0xff]
        %s573 = scalar_lea.vmem %s442, 432
        %v574 = vld [vmem:[%s573] ss:$2 sm:$0xff]
        %s575 = scalar_lea.vmem %s442, 448
        %v576 = vld [vmem:[%s575] ss:$2 sm:$0xff]
        %s577 = scalar_lea.vmem %s442, 464
        %v578 = vld [vmem:[%s577] ss:$2 sm:$0xff]
        %s579 = scalar_lea.vmem %s442, 480
        %v580 = vld [vmem:[%s579] ss:$2 sm:$0xff]
        %s581 = scalar_lea.vmem %s442, 496
        %v582 = vld [vmem:[%s581] ss:$2 sm:$0xff]
        %s583 = scalar_lea.vmem %s442, 512
        %v584 = vld [vmem:[%s583] ss:$2 sm:$0xff]
        %v585 = vld [vmem:[%s1 + $0x1] sm:$0x1]
        %vm586 = vcmask 7168
        %v588 = vsel %vm586, %v522, 0
        %v591 = vsel %vm586, %v524, 0
        %v594 = vsel %vm586, %v526, 0
        %v597 = vsel %vm586, %v528, 0
        %v600 = vsel %vm586, %v530, 0
        %v603 = vsel %vm586, %v532, 0
        %v606 = vsel %vm586, %v534, 0
        %v609 = vsel %vm586, %v536, 0
        %v612 = vsel %vm586, %v538, 0
        %v615 = vsel %vm586, %v540, 0
        %v618 = vsel %vm586, %v542, 0
        %v621 = vsel %vm586, %v544, 0
        %v624 = vsel %vm586, %v546, 0
        %v627 = vsel %vm586, %v548, 0
        %v630 = vsel %vm586, %v550, 0
        %v633 = vsel %vm586, %v552, 0
        %v636 = vsel %vm586, %v554, 0
        %v639 = vsel %vm586, %v556, 0
        %v642 = vsel %vm586, %v558, 0
        %v645 = vsel %vm586, %v560, 0
        %v648 = vsel %vm586, %v562, 0
        %v651 = vsel %vm586, %v564, 0
        %v654 = vsel %vm586, %v566, 0
        %v657 = vsel %vm586, %v568, 0
        %v660 = vsel %vm586, %v570, 0
        %v663 = vsel %vm586, %v572, 0
        %v666 = vsel %vm586, %v574, 0
        %v669 = vsel %vm586, %v576, 0
        %v672 = vsel %vm586, %v578, 0
        %v675 = vsel %vm586, %v580, 0
        %v678 = vsel %vm586, %v582, 0
        %v681 = vsel %vm586, %v584, 0
        %vm683 = vcmask 1040384
        %v685 = vsel %vm683, %v585, 0
        %687 = vmatprep.subr.mxu0 0.0
        %688 = vmatpush1.msra.mxu0 %v685
        %689 = vmatprep.subr.mxu0 0.0
        %690 = vmatpush1.msra.mxu0 0.0
        %691 = vmatprep.subr.mxu0 0.0
        %692 = vmatpush1.msra.mxu0 0.0
        %693 = vmatprep.subr.mxu0 0.0
        %694 = vmatpush1.msra.mxu0 0.0
        %695 = vmatprep.subr.mxu0 0.0
        %696 = vmatpush1.msra.mxu0 0.0
        %697 = vmatprep.subr.mxu0 0.0
        %698 = vmatpush1.msra.mxu0 0.0
        %699 = vmatprep.subr.mxu0 0.0
        %700 = vmatpush1.msra.mxu0 0.0
        %701 = vmatprep.subr.mxu0 0.0
        %702 = vmatpush1.msra.mxu0 0.0
        %703 = vmatprep.subr.mxu0 0.0
        %704 = vmatpush1.msra.mxu0 0.0
        %705 = vmatprep.subr.mxu0 0.0
        %706 = vmatpush1.msra.mxu0 0.0
        %707 = vmatprep.subr.mxu0 0.0
        %708 = vmatpush1.msra.mxu0 0.0
        %709 = vmatprep.subr.mxu0 0.0
        %710 = vmatpush1.msra.mxu0 0.0
        %711 = vmatprep.subr.mxu0 0.0
        %712 = vmatpush1.msra.mxu0 0.0
        %713 = vmatprep.subr.mxu0 0.0
        %714 = vmatpush1.msra.mxu0 0.0
        %715 = vmatprep.subr.mxu0 0.0
        %716 = vmatpush1.msra.mxu0 0.0
        %717 = vmatprep.subr.mxu0 0.0
        %718 = vmatpush1.msra.mxu0 0.0
        %719 = vmatprep.subr.mxu0 0.0
        %720 = vmatpush1.msra.mxu0 0.0
        %721 = vmatprep.subr.mxu0 0.0
        %722 = vmatpush1.msra.mxu0 0.0
        %723 = vmatprep.subr.mxu0 0.0
        %724 = vmatpush1.msra.mxu0 0.0
        %725 = vmatprep.subr.mxu0 0.0
        %726 = vmatpush1.msra.mxu0 0.0
        %727 = vmatprep.subr.mxu0 0.0
        %728 = vmatpush1.msra.mxu0 0.0
        %729 = vmatprep.subr.mxu0 0.0
        %730 = vmatpush1.msra.mxu0 0.0
        %731 = vmatprep.subr.mxu0 0.0
        %732 = vmatpush1.msra.mxu0 0.0
        %733 = vmatprep.subr.mxu0 0.0
        %734 = vmatpush1.msra.mxu0 0.0
        %735 = vmatprep.subr.mxu0 0.0
        %736 = vmatpush1.msra.mxu0 0.0
        %737 = vmatprep.subr.mxu0 0.0
        %738 = vmatpush1.msra.mxu0 0.0
        %739 = vmatprep.subr.mxu0 0.0
        %740 = vmatpush1.msra.mxu0 0.0
        %741 = vmatprep.subr.mxu0 0.0
        %742 = vmatpush1.msra.mxu0 0.0
        %743 = vmatprep.subr.mxu0 0.0
        %744 = vmatpush1.msra.mxu0 0.0
        %745 = vmatprep.subr.mxu0 0.0
        %746 = vmatpush1.msra.mxu0 0.0
        %747 = vmatprep.subr.mxu0 0.0
        %748 = vmatpush1.msra.mxu0 0.0
        %749 = vmatprep.subr.mxu0 0.0
        %750 = vmatpush1.msra.mxu0 0.0
        %751 = vmatprep.mubr.f32.mxu0 0.0
        %752 = vmatmul.mubr.f32.gmra.mrb[0].mxu0 %v588
        %v753 = vpop.f32.mrb[0].mxu0
        %v754 = vadd.f32 0.0, %v753
        %v755 = vpop.f32.mrb[0].mxu0
        %756 = vmatprep.mubr.f32.mxu0 0.0
        %757 = vmatmul.mubr.f32.gmra.mrb[0].mxu0 %v591
        %v758 = vpop.f32.mrb[0].mxu0
        %v759 = vadd.f32 0.0, %v758
        %v760 = vpop.f32.mrb[0].mxu0
        %761 = vmatprep.mubr.f32.mxu0 0.0
        %762 = vmatmul.mubr.f32.gmra.mrb[0].mxu0 %v594
        %v763 = vpop.f32.mrb[0].mxu0
        %v764 = vadd.f32 0.0, %v763
        %v765 = vpop.f32.mrb[0].mxu0
        %766 = vmatprep.mubr.f32.mxu0 0.0
        %767 = vmatmul.mubr.f32.gmra.mrb[0].mxu0 %v597
        %v768 = vpop.f32.mrb[0].mxu0
        %v769 = vadd.f32 0.0, %v768
        %v770 = vpop.f32.mrb[0].mxu0
        %771 = vmatprep.mubr.f32.mxu0 0.0
        %772 = vmatmul.mubr.f32.gmra.mrb[0].mxu0 %v600
        %v773 = vpop.f32.mrb[0].mxu0
        %v774 = vadd.f32 0.0, %v773
        %v775 = vpop.f32.mrb[0].mxu0
        %776 = vmatprep.mubr.f32.mxu0 0.0
        %777 = vmatmul.mubr.f32.gmra.mrb[0].mxu0 %v603
        %v778 = vpop.f32.mrb[0].mxu0
        %v779 = vadd.f32 0.0, %v778
        %v780 = vpop.f32.mrb[0].mxu0
        %781 = vmatprep.mubr.f32.mxu0 0.0
        %782 = vmatmul.mubr.f32.gmra.mrb[0].mxu0 %v606
        %v783 = vpop.f32.mrb[0].mxu0
        %v784 = vadd.f32 0.0, %v783
        %v785 = vpop.f32.mrb[0].mxu0
        %786 = vmatprep.mubr.f32.mxu0 0.0
        %787 = vmatmul.mubr.f32.gmra.mrb[0].mxu0 %v609
        %v788 = vpop.f32.mrb[0].mxu0
        %v789 = vadd.f32 0.0, %v788
        %v790 = vpop.f32.mrb[0].mxu0
        %791 = vmatprep.mubr.f32.mxu0 0.0
        %792 = vmatmul.mubr.f32.gmra.mrb[0].mxu0 %v612
        %v793 = vpop.f32.mrb[0].mxu0
        %v794 = vadd.f32 0.0, %v793
        %v795 = vpop.f32.mrb[0].mxu0
        %796 = vmatprep.mubr.f32.mxu0 0.0
        %797 = vmatmul.mubr.f32.gmra.mrb[0].mxu0 %v615
        %v798 = vpop.f32.mrb[0].mxu0
        %v799 = vadd.f32 0.0, %v798
        %v800 = vpop.f32.mrb[0].mxu0
        %801 = vmatprep.mubr.f32.mxu0 0.0
        %802 = vmatmul.mubr.f32.gmra.mrb[0].mxu0 %v618
        %v803 = vpop.f32.mrb[0].mxu0
        %v804 = vadd.f32 0.0, %v803
        %v805 = vpop.f32.mrb[0].mxu0
        %806 = vmatprep.mubr.f32.mxu0 0.0
        %807 = vmatmul.mubr.f32.gmra.mrb[0].mxu0 %v621
        %v808 = vpop.f32.mrb[0].mxu0
        %v809 = vadd.f32 0.0, %v808
        %v810 = vpop.f32.mrb[0].mxu0
        %811 = vmatprep.mubr.f32.mxu0 0.0
        %812 = vmatmul.mubr.f32.gmra.mrb[0].mxu0 %v624
        %v813 = vpop.f32.mrb[0].mxu0
        %v814 = vadd.f32 0.0, %v813
        %v815 = vpop.f32.mrb[0].mxu0
        %816 = vmatprep.mubr.f32.mxu0 0.0
        %817 = vmatmul.mubr.f32.gmra.mrb[0].mxu0 %v627
        %v818 = vpop.f32.mrb[0].mxu0
        %v819 = vadd.f32 0.0, %v818
        %v820 = vpop.f32.mrb[0].mxu0
        %821 = vmatprep.mubr.f32.mxu0 0.0
        %822 = vmatmul.mubr.f32.gmra.mrb[0].mxu0 %v630
        %v823 = vpop.f32.mrb[0].mxu0
        %v824 = vadd.f32 0.0, %v823
        %v825 = vpop.f32.mrb[0].mxu0
        %826 = vmatprep.mubr.f32.mxu0 0.0
        %827 = vmatmul.mubr.f32.gmra.mrb[0].mxu0 %v633
        %v828 = vpop.f32.mrb[0].mxu0
        %v829 = vadd.f32 0.0, %v828
        %v830 = vpop.f32.mrb[0].mxu0
        %831 = vmatprep.mubr.f32.mxu0 0.0
        %832 = vmatmul.mubr.f32.gmra.mrb[0].mxu0 %v636
        %v833 = vpop.f32.mrb[0].mxu0
        %v834 = vadd.f32 0.0, %v833
        %v835 = vpop.f32.mrb[0].mxu0
        %836 = vmatprep.mubr.f32.mxu0 0.0
        %837 = vmatmul.mubr.f32.gmra.mrb[0].mxu0 %v639
        %v838 = vpop.f32.mrb[0].mxu0
        %v839 = vadd.f32 0.0, %v838
        %v840 = vpop.f32.mrb[0].mxu0
        %841 = vmatprep.mubr.f32.mxu0 0.0
        %842 = vmatmul.mubr.f32.gmra.mrb[0].mxu0 %v642
        %v843 = vpop.f32.mrb[0].mxu0
        %v844 = vadd.f32 0.0, %v843
        %v845 = vpop.f32.mrb[0].mxu0
        %846 = vmatprep.mubr.f32.mxu0 0.0
        %847 = vmatmul.mubr.f32.gmra.mrb[0].mxu0 %v645
        %v848 = vpop.f32.mrb[0].mxu0
        %v849 = vadd.f32 0.0, %v848
        %v850 = vpop.f32.mrb[0].mxu0
        %851 = vmatprep.mubr.f32.mxu0 0.0
        %852 = vmatmul.mubr.f32.gmra.mrb[0].mxu0 %v648
        %v853 = vpop.f32.mrb[0].mxu0
        %v854 = vadd.f32 0.0, %v853
        %v855 = vpop.f32.mrb[0].mxu0
        %856 = vmatprep.mubr.f32.mxu0 0.0
        %857 = vmatmul.mubr.f32.gmra.mrb[0].mxu0 %v651
        %v858 = vpop.f32.mrb[0].mxu0
        %v859 = vadd.f32 0.0, %v858
        %v860 = vpop.f32.mrb[0].mxu0
        %861 = vmatprep.mubr.f32.mxu0 0.0
        %862 = vmatmul.mubr.f32.gmra.mrb[0].mxu0 %v654
        %v863 = vpop.f32.mrb[0].mxu0
        %v864 = vadd.f32 0.0, %v863
        %v865 = vpop.f32.mrb[0].mxu0
        %866 = vmatprep.mubr.f32.mxu0 0.0
        %867 = vmatmul.mubr.f32.gmra.mrb[0].mxu0 %v657
        %v868 = vpop.f32.mrb[0].mxu0
        %v869 = vadd.f32 0.0, %v868
        %v870 = vpop.f32.mrb[0].mxu0
        %871 = vmatprep.mubr.f32.mxu0 0.0
        %872 = vmatmul.mubr.f32.gmra.mrb[0].mxu0 %v660
        %v873 = vpop.f32.mrb[0].mxu0
        %v874 = vadd.f32 0.0, %v873
        %v875 = vpop.f32.mrb[0].mxu0
        %876 = vmatprep.mubr.f32.mxu0 0.0
        %877 = vmatmul.mubr.f32.gmra.mrb[0].mxu0 %v663
        %v878 = vpop.f32.mrb[0].mxu0
        %v879 = vadd.f32 0.0, %v878
        %v880 = vpop.f32.mrb[0].mxu0
        %881 = vmatprep.mubr.f32.mxu0 0.0
        %882 = vmatmul.mubr.f32.gmra.mrb[0].mxu0 %v666
        %v883 = vpop.f32.mrb[0].mxu0
        %v884 = vadd.f32 0.0, %v883
        %v885 = vpop.f32.mrb[0].mxu0
        %886 = vmatprep.mubr.f32.mxu0 0.0
        %887 = vmatmul.mubr.f32.gmra.mrb[0].mxu0 %v669
        %v888 = vpop.f32.mrb[0].mxu0
        %v889 = vadd.f32 0.0, %v888
        %v890 = vpop.f32.mrb[0].mxu0
        %891 = vmatprep.mubr.f32.mxu0 0.0
        %892 = vmatmul.mubr.f32.gmra.mrb[0].mxu0 %v672
        %v893 = vpop.f32.mrb[0].mxu0
        %v894 = vadd.f32 0.0, %v893
        %v895 = vpop.f32.mrb[0].mxu0
        %896 = vmatprep.mubr.f32.mxu0 0.0
        %897 = vmatmul.mubr.f32.gmra.mrb[0].mxu0 %v675
        %v898 = vpop.f32.mrb[0].mxu0
        %v899 = vadd.f32 0.0, %v898
        %v900 = vpop.f32.mrb[0].mxu0
        %901 = vmatprep.mubr.f32.mxu0 0.0
        %902 = vmatmul.mubr.f32.gmra.mrb[0].mxu0 %v678
        %v903 = vpop.f32.mrb[0].mxu0
        %v904 = vadd.f32 0.0, %v903
        %v905 = vpop.f32.mrb[0].mxu0
        %906 = vmatprep.mubr.f32.mxu0 0.0
        %907 = vmatmul.mubr.f32.gmra.mrb[0].mxu0 %v681
        %v908 = vpop.f32.mrb[0].mxu0
        %v909 = vadd.f32 0.0, %v908
        %v910 = vpop.f32.mrb[0].mxu0
        %911 = vdwg.mxu0
        %v913 = vsel %vm586, %v457, 0
        %v916 = vsel %vm586, %v459, 0
        %v919 = vsel %vm586, %v461, 0
        %v922 = vsel %vm586, %v463, 0
        %v925 = vsel %vm586, %v465, 0
        %v928 = vsel %vm586, %v467, 0
        %v931 = vsel %vm586, %v469, 0
        %v934 = vsel %vm586, %v471, 0
        %v937 = vsel %vm586, %v473, 0
        %v940 = vsel %vm586, %v475, 0
        %v943 = vsel %vm586, %v477, 0
        %v946 = vsel %vm586, %v479, 0
        %v949 = vsel %vm586, %v481, 0
        %v952 = vsel %vm586, %v483, 0
        %v955 = vsel %vm586, %v485, 0
        %v958 = vsel %vm586, %v487, 0
        %v961 = vsel %vm586, %v489, 0
        %v964 = vsel %vm586, %v491, 0
        %v967 = vsel %vm586, %v493, 0
        %v970 = vsel %vm586, %v495, 0
        %v973 = vsel %vm586, %v497, 0
        %v976 = vsel %vm586, %v499, 0
        %v979 = vsel %vm586, %v501, 0
        %v982 = vsel %vm586, %v503, 0
        %v985 = vsel %vm586, %v505, 0
        %v988 = vsel %vm586, %v507, 0
        %v991 = vsel %vm586, %v509, 0
        %v994 = vsel %vm586, %v511, 0
        %v997 = vsel %vm586, %v513, 0
        %v1000 = vsel %vm586, %v515, 0
        %v1003 = vsel %vm586, %v517, 0
        %v1006 = vsel %vm586, %v519, 0
        %v1009 = vsel %vm683, %v520, 0
        %1011 = vmatprep.subr.mxu0 0.0
        %1012 = vmatpush1.msra.mxu0 %v1009
        %1013 = vmatprep.subr.mxu0 0.0
        %1014 = vmatpush1.msra.mxu0 0.0
        %1015 = vmatprep.subr.mxu0 0.0
        %1016 = vmatpush1.msra.mxu0 0.0
        %1017 = vmatprep.subr.mxu0 0.0
        %1018 = vmatpush1.msra.mxu0 0.0
        %1019 = vmatprep.subr.mxu0 0.0
        %1020 = vmatpush1.msra.mxu0 0.0
        %1021 = vmatprep.subr.mxu0 0.0
        %1022 = vmatpush1.msra.mxu0 0.0
        %1023 = vmatprep.subr.mxu0 0.0
        %1024 = vmatpush1.msra.mxu0 0.0
        %1025 = vmatprep.subr.mxu0 0.0
        %1026 = vmatpush1.msra.mxu0 0.0
        %1027 = vmatprep.subr.mxu0 0.0
        %1028 = vmatpush1.msra.mxu0 0.0
        %1029 = vmatprep.subr.mxu0 0.0
        %1030 = vmatpush1.msra.mxu0 0.0
        %1031 = vmatprep.subr.mxu0 0.0
        %1032 = vmatpush1.msra.mxu0 0.0
        %1033 = vmatprep.subr.mxu0 0.0
        %1034 = vmatpush1.msra.mxu0 0.0
        %1035 = vmatprep.subr.mxu0 0.0
        %1036 = vmatpush1.msra.mxu0 0.0
        %1037 = vmatprep.subr.mxu0 0.0
        %1038 = vmatpush1.msra.mxu0 0.0
        %1039 = vmatprep.subr.mxu0 0.0
        %1040 = vmatpush1.msra.mxu0 0.0
        %1041 = vmatprep.subr.mxu0 0.0
        %1042 = vmatpush1.msra.mxu0 0.0
        %1043 = vmatprep.subr.mxu0 0.0
        %1044 = vmatpush1.msra.mxu0 0.0
        %1045 = vmatprep.subr.mxu0 0.0
        %1046 = vmatpush1.msra.mxu0 0.0
        %1047 = vmatprep.subr.mxu0 0.0
        %1048 = vmatpush1.msra.mxu0 0.0
        %1049 = vmatprep.subr.mxu0 0.0
        %1050 = vmatpush1.msra.mxu0 0.0
        %1051 = vmatprep.subr.mxu0 0.0
        %1052 = vmatpush1.msra.mxu0 0.0
        %1053 = vmatprep.subr.mxu0 0.0
        %1054 = vmatpush1.msra.mxu0 0.0
        %1055 = vmatprep.subr.mxu0 0.0
        %1056 = vmatpush1.msra.mxu0 0.0
        %1057 = vmatprep.subr.mxu0 0.0
        %1058 = vmatpush1.msra.mxu0 0.0
        %1059 = vmatprep.subr.mxu0 0.0
        %1060 = vmatpush1.msra.mxu0 0.0
        %1061 = vmatprep.subr.mxu0 0.0
        %1062 = vmatpush1.msra.mxu0 0.0
        %1063 = vmatprep.subr.mxu0 0.0
        %1064 = vmatpush1.msra.mxu0 0.0
        %1065 = vmatprep.subr.mxu0 0.0
        %1066 = vmatpush1.msra.mxu0 0.0
        %1067 = vmatprep.subr.mxu0 0.0
        %1068 = vmatpush1.msra.mxu0 0.0
        %1069 = vmatprep.subr.mxu0 0.0
        %1070 = vmatpush1.msra.mxu0 0.0
        %1071 = vmatprep.subr.mxu0 0.0
        %1072 = vmatpush1.msra.mxu0 0.0
        %1073 = vmatprep.subr.mxu0 0.0
        %1074 = vmatpush1.msra.mxu0 0.0
        %1075 = vmatprep.mubr.f32.mxu0 0.0
        %1076 = vmatmul.mubr.f32.gmra.mrb[0].mxu0 %v913
        %v1077 = vpop.f32.mrb[0].mxu0
        %v1078 = vadd.f32 %v754, %v1077
        %v1079 = vpop.f32.mrb[0].mxu0
        %1080 = vmatprep.mubr.f32.mxu0 0.0
        %1081 = vmatmul.mubr.f32.gmra.mrb[0].mxu0 %v916
        %v1082 = vpop.f32.mrb[0].mxu0
        %v1083 = vadd.f32 %v759, %v1082
        %v1084 = vpop.f32.mrb[0].mxu0
        %1085 = vmatprep.mubr.f32.mxu0 0.0
        %1086 = vmatmul.mubr.f32.gmra.mrb[0].mxu0 %v919
        %v1087 = vpop.f32.mrb[0].mxu0
        %v1088 = vadd.f32 %v764, %v1087
        %v1089 = vpop.f32.mrb[0].mxu0
        %1090 = vmatprep.mubr.f32.mxu0 0.0
        %1091 = vmatmul.mubr.f32.gmra.mrb[0].mxu0 %v922
        %v1092 = vpop.f32.mrb[0].mxu0
        %v1093 = vadd.f32 %v769, %v1092
        %v1094 = vpop.f32.mrb[0].mxu0
        %1095 = vmatprep.mubr.f32.mxu0 0.0
        %1096 = vmatmul.mubr.f32.gmra.mrb[0].mxu0 %v925
        %v1097 = vpop.f32.mrb[0].mxu0
        %v1098 = vadd.f32 %v774, %v1097
        %v1099 = vpop.f32.mrb[0].mxu0
        %1100 = vmatprep.mubr.f32.mxu0 0.0
        %1101 = vmatmul.mubr.f32.gmra.mrb[0].mxu0 %v928
        %v1102 = vpop.f32.mrb[0].mxu0
        %v1103 = vadd.f32 %v779, %v1102
        %v1104 = vpop.f32.mrb[0].mxu0
        %1105 = vmatprep.mubr.f32.mxu0 0.0
        %1106 = vmatmul.mubr.f32.gmra.mrb[0].mxu0 %v931
        %v1107 = vpop.f32.mrb[0].mxu0
        %v1108 = vadd.f32 %v784, %v1107
        %v1109 = vpop.f32.mrb[0].mxu0
        %1110 = vmatprep.mubr.f32.mxu0 0.0
        %1111 = vmatmul.mubr.f32.gmra.mrb[0].mxu0 %v934
        %v1112 = vpop.f32.mrb[0].mxu0
        %v1113 = vadd.f32 %v789, %v1112
        %v1114 = vpop.f32.mrb[0].mxu0
        %1115 = vmatprep.mubr.f32.mxu0 0.0
        %1116 = vmatmul.mubr.f32.gmra.mrb[0].mxu0 %v937
        %v1117 = vpop.f32.mrb[0].mxu0
        %v1118 = vadd.f32 %v794, %v1117
        %v1119 = vpop.f32.mrb[0].mxu0
        %1120 = vmatprep.mubr.f32.mxu0 0.0
        %1121 = vmatmul.mubr.f32.gmra.mrb[0].mxu0 %v940
        %v1122 = vpop.f32.mrb[0].mxu0
        %v1123 = vadd.f32 %v799, %v1122
        %v1124 = vpop.f32.mrb[0].mxu0
        %1125 = vmatprep.mubr.f32.mxu0 0.0
        %1126 = vmatmul.mubr.f32.gmra.mrb[0].mxu0 %v943
        %v1127 = vpop.f32.mrb[0].mxu0
        %v1128 = vadd.f32 %v804, %v1127
        %v1129 = vpop.f32.mrb[0].mxu0
        %1130 = vmatprep.mubr.f32.mxu0 0.0
        %1131 = vmatmul.mubr.f32.gmra.mrb[0].mxu0 %v946
        %v1132 = vpop.f32.mrb[0].mxu0
        %v1133 = vadd.f32 %v809, %v1132
        %v1134 = vpop.f32.mrb[0].mxu0
        %1135 = vmatprep.mubr.f32.mxu0 0.0
        %1136 = vmatmul.mubr.f32.gmra.mrb[0].mxu0 %v949
        %v1137 = vpop.f32.mrb[0].mxu0
        %v1138 = vadd.f32 %v814, %v1137
        %v1139 = vpop.f32.mrb[0].mxu0
        %1140 = vmatprep.mubr.f32.mxu0 0.0
        %1141 = vmatmul.mubr.f32.gmra.mrb[0].mxu0 %v952
        %v1142 = vpop.f32.mrb[0].mxu0
        %v1143 = vadd.f32 %v819, %v1142
        %v1144 = vpop.f32.mrb[0].mxu0
        %1145 = vmatprep.mubr.f32.mxu0 0.0
        %1146 = vmatmul.mubr.f32.gmra.mrb[0].mxu0 %v955
        %v1147 = vpop.f32.mrb[0].mxu0
        %v1148 = vadd.f32 %v824, %v1147
        %v1149 = vpop.f32.mrb[0].mxu0
        %1150 = vmatprep.mubr.f32.mxu0 0.0
        %1151 = vmatmul.mubr.f32.gmra.mrb[0].mxu0 %v958
        %v1152 = vpop.f32.mrb[0].mxu0
        %v1153 = vadd.f32 %v829, %v1152
        %v1154 = vpop.f32.mrb[0].mxu0
        %1155 = vmatprep.mubr.f32.mxu0 0.0
        %1156 = vmatmul.mubr.f32.gmra.mrb[0].mxu0 %v961
        %v1157 = vpop.f32.mrb[0].mxu0
        %v1158 = vadd.f32 %v834, %v1157
        %v1159 = vpop.f32.mrb[0].mxu0
        %1160 = vmatprep.mubr.f32.mxu0 0.0
        %1161 = vmatmul.mubr.f32.gmra.mrb[0].mxu0 %v964
        %v1162 = vpop.f32.mrb[0].mxu0
        %v1163 = vadd.f32 %v839, %v1162
        %v1164 = vpop.f32.mrb[0].mxu0
        %1165 = vmatprep.mubr.f32.mxu0 0.0
        %1166 = vmatmul.mubr.f32.gmra.mrb[0].mxu0 %v967
        %v1167 = vpop.f32.mrb[0].mxu0
        %v1168 = vadd.f32 %v844, %v1167
        %v1169 = vpop.f32.mrb[0].mxu0
        %1170 = vmatprep.mubr.f32.mxu0 0.0
        %1171 = vmatmul.mubr.f32.gmra.mrb[0].mxu0 %v970
        %v1172 = vpop.f32.mrb[0].mxu0
        %v1173 = vadd.f32 %v849, %v1172
        %v1174 = vpop.f32.mrb[0].mxu0
        %1175 = vmatprep.mubr.f32.mxu0 0.0
        %1176 = vmatmul.mubr.f32.gmra.mrb[0].mxu0 %v973
        %v1177 = vpop.f32.mrb[0].mxu0
        %v1178 = vadd.f32 %v854, %v1177
        %v1179 = vpop.f32.mrb[0].mxu0
        %1180 = vmatprep.mubr.f32.mxu0 0.0
        %1181 = vmatmul.mubr.f32.gmra.mrb[0].mxu0 %v976
        %v1182 = vpop.f32.mrb[0].mxu0
        %v1183 = vadd.f32 %v859, %v1182
        %v1184 = vpop.f32.mrb[0].mxu0
        %1185 = vmatprep.mubr.f32.mxu0 0.0
        %1186 = vmatmul.mubr.f32.gmra.mrb[0].mxu0 %v979
        %v1187 = vpop.f32.mrb[0].mxu0
        %v1188 = vadd.f32 %v864, %v1187
        %v1189 = vpop.f32.mrb[0].mxu0
        %1190 = vmatprep.mubr.f32.mxu0 0.0
        %1191 = vmatmul.mubr.f32.gmra.mrb[0].mxu0 %v982
        %v1192 = vpop.f32.mrb[0].mxu0
        %v1193 = vadd.f32 %v869, %v1192
        %v1194 = vpop.f32.mrb[0].mxu0
        %1195 = vmatprep.mubr.f32.mxu0 0.0
        %1196 = vmatmul.mubr.f32.gmra.mrb[0].mxu0 %v985
        %v1197 = vpop.f32.mrb[0].mxu0
        %v1198 = vadd.f32 %v874, %v1197
        %v1199 = vpop.f32.mrb[0].mxu0
        %1200 = vmatprep.mubr.f32.mxu0 0.0
        %1201 = vmatmul.mubr.f32.gmra.mrb[0].mxu0 %v988
        %v1202 = vpop.f32.mrb[0].mxu0
        %v1203 = vadd.f32 %v879, %v1202
        %v1204 = vpop.f32.mrb[0].mxu0
        %1205 = vmatprep.mubr.f32.mxu0 0.0
        %1206 = vmatmul.mubr.f32.gmra.mrb[0].mxu0 %v991
        %v1207 = vpop.f32.mrb[0].mxu0
        %v1208 = vadd.f32 %v884, %v1207
        %v1209 = vpop.f32.mrb[0].mxu0
        %1210 = vmatprep.mubr.f32.mxu0 0.0
        %1211 = vmatmul.mubr.f32.gmra.mrb[0].mxu0 %v994
        %v1212 = vpop.f32.mrb[0].mxu0
        %v1213 = vadd.f32 %v889, %v1212
        %v1214 = vpop.f32.mrb[0].mxu0
        %1215 = vmatprep.mubr.f32.mxu0 0.0
        %1216 = vmatmul.mubr.f32.gmra.mrb[0].mxu0 %v997
        %v1217 = vpop.f32.mrb[0].mxu0
        %v1218 = vadd.f32 %v894, %v1217
        %v1219 = vpop.f32.mrb[0].mxu0
        %1220 = vmatprep.mubr.f32.mxu0 0.0
        %1221 = vmatmul.mubr.f32.gmra.mrb[0].mxu0 %v1000
        %v1222 = vpop.f32.mrb[0].mxu0
        %v1223 = vadd.f32 %v899, %v1222
        %v1224 = vpop.f32.mrb[0].mxu0
        %1225 = vmatprep.mubr.f32.mxu0 0.0
        %1226 = vmatmul.mubr.f32.gmra.mrb[0].mxu0 %v1003
        %v1227 = vpop.f32.mrb[0].mxu0
        %v1228 = vadd.f32 %v904, %v1227
        %v1229 = vpop.f32.mrb[0].mxu0
        %1230 = vmatprep.mubr.f32.mxu0 0.0
        %1231 = vmatmul.mubr.f32.gmra.mrb[0].mxu0 %v1006
        %v1232 = vpop.f32.mrb[0].mxu0
        %v1233 = vadd.f32 %v909, %v1232
        %v1234 = vpop.f32.mrb[0].mxu0
        %1235 = vdwg.mxu0
        %s1236 = scalar_lea.vmem %s442, 9
        %v1237 = vld [vmem:[%s1236] ss:$2 sm:$0xff]
        %s1238 = scalar_lea.vmem %s442, 25
        %v1239 = vld [vmem:[%s1238] ss:$2 sm:$0xff]
        %s1240 = scalar_lea.vmem %s442, 41
        %v1241 = vld [vmem:[%s1240] ss:$2 sm:$0xff]
        %s1242 = scalar_lea.vmem %s442, 57
        %v1243 = vld [vmem:[%s1242] ss:$2 sm:$0xff]
        %s1244 = scalar_lea.vmem %s442, 73
        %v1245 = vld [vmem:[%s1244] ss:$2 sm:$0xff]
        %s1246 = scalar_lea.vmem %s442, 89
        %v1247 = vld [vmem:[%s1246] ss:$2 sm:$0xff]
        %s1248 = scalar_lea.vmem %s442, 105
        %v1249 = vld [vmem:[%s1248] ss:$2 sm:$0xff]
        %s1250 = scalar_lea.vmem %s442, 121
        %v1251 = vld [vmem:[%s1250] ss:$2 sm:$0xff]
        %s1252 = scalar_lea.vmem %s442, 137
        %v1253 = vld [vmem:[%s1252] ss:$2 sm:$0xff]
        %s1254 = scalar_lea.vmem %s442, 153
        %v1255 = vld [vmem:[%s1254] ss:$2 sm:$0xff]
        %s1256 = scalar_lea.vmem %s442, 169
        %v1257 = vld [vmem:[%s1256] ss:$2 sm:$0xff]
        %s1258 = scalar_lea.vmem %s442, 185
        %v1259 = vld [vmem:[%s1258] ss:$2 sm:$0xff]
        %s1260 = scalar_lea.vmem %s442, 201
        %v1261 = vld [vmem:[%s1260] ss:$2 sm:$0xff]
        %s1262 = scalar_lea.vmem %s442, 217
        %v1263 = vld [vmem:[%s1262] ss:$2 sm:$0xff]
        %s1264 = scalar_lea.vmem %s442, 233
        %v1265 = vld [vmem:[%s1264] ss:$2 sm:$0xff]
        %s1266 = scalar_lea.vmem %s442, 249
        %v1267 = vld [vmem:[%s1266] ss:$2 sm:$0xff]
        %s1268 = scalar_lea.vmem %s442, 273
        %v1269 = vld [vmem:[%s1268] ss:$2 sm:$0xff]
        %s1270 = scalar_lea.vmem %s442, 289
        %v1271 = vld [vmem:[%s1270] ss:$2 sm:$0xff]
        %s1272 = scalar_lea.vmem %s442, 305
        %v1273 = vld [vmem:[%s1272] ss:$2 sm:$0xff]
        %s1274 = scalar_lea.vmem %s442, 321
        %v1275 = vld [vmem:[%s1274] ss:$2 sm:$0xff]
        %s1276 = scalar_lea.vmem %s442, 337
        %v1277 = vld [vmem:[%s1276] ss:$2 sm:$0xff]
        %s1278 = scalar_lea.vmem %s442, 353
        %v1279 = vld [vmem:[%s1278] ss:$2 sm:$0xff]
        %s1280 = scalar_lea.vmem %s442, 369
        %v1281 = vld [vmem:[%s1280] ss:$2 sm:$0xff]
        %s1282 = scalar_lea.vmem %s442, 385
        %v1283 = vld [vmem:[%s1282] ss:$2 sm:$0xff]
        %s1284 = scalar_lea.vmem %s442, 401
        %v1285 = vld [vmem:[%s1284] ss:$2 sm:$0xff]
        %s1286 = scalar_lea.vmem %s442, 417
        %v1287 = vld [vmem:[%s1286] ss:$2 sm:$0xff]
        %s1288 = scalar_lea.vmem %s442, 433
        %v1289 = vld [vmem:[%s1288] ss:$2 sm:$0xff]
        %s1290 = scalar_lea.vmem %s442, 449
        %v1291 = vld [vmem:[%s1290] ss:$2 sm:$0xff]
        %s1292 = scalar_lea.vmem %s442, 465
        %v1293 = vld [vmem:[%s1292] ss:$2 sm:$0xff]
        %s1294 = scalar_lea.vmem %s442, 481
        %v1295 = vld [vmem:[%s1294] ss:$2 sm:$0xff]
        %s1296 = scalar_lea.vmem %s442, 497
        %v1297 = vld [vmem:[%s1296] ss:$2 sm:$0xff]
        %s1298 = scalar_lea.vmem %s442, 513
        %v1299 = vld [vmem:[%s1298] ss:$2 sm:$0xff]
        %v1300 = vld [vmem:[%s1 + $0x2] sm:$0x1]
        %v1302 = vsel %vm586, %v1237, 0
        %v1305 = vsel %vm586, %v1239, 0
        %v1308 = vsel %vm586, %v1241, 0
        %v1311 = vsel %vm586, %v1243, 0
        %v1314 = vsel %vm586, %v1245, 0
        %v1317 = vsel %vm586, %v1247, 0
        %v1320 = vsel %vm586, %v1249, 0
        %v1323 = vsel %vm586, %v1251, 0
        %v1326 = vsel %vm586, %v1253, 0
        %v1329 = vsel %vm586, %v1255, 0
        %v1332 = vsel %vm586, %v1257, 0
        %v1335 = vsel %vm586, %v1259, 0
        %v1338 = vsel %vm586, %v1261, 0
        %v1341 = vsel %vm586, %v1263, 0
        %v1344 = vsel %vm586, %v1265, 0
        %v1347 = vsel %vm586, %v1267, 0
        %v1350 = vsel %vm586, %v1269, 0
        %v1353 = vsel %vm586, %v1271, 0
        %v1356 = vsel %vm586, %v1273, 0
        %v1359 = vsel %vm586, %v1275, 0
        %v1362 = vsel %vm586, %v1277, 0
        %v1365 = vsel %vm586, %v1279, 0
        %v1368 = vsel %vm586, %v1281, 0
        %v1371 = vsel %vm586, %v1283, 0
        %v1374 = vsel %vm586, %v1285, 0
        %v1377 = vsel %vm586, %v1287, 0
        %v1380 = vsel %vm586, %v1289, 0
        %v1383 = vsel %vm586, %v1291, 0
        %v1386 = vsel %vm586, %v1293, 0
        %v1389 = vsel %vm586, %v1295, 0
        %v1392 = vsel %vm586, %v1297, 0
        %v1395 = vsel %vm586, %v1299, 0
        %v1398 = vsel %vm683, %v1300, 0
        %1400 = vmatprep.subr.mxu0 0.0
        %1401 = vmatpush1.msra.mxu0 %v1398
        %1402 = vmatprep.subr.mxu0 0.0
        %1403 = vmatpush1.msra.mxu0 0.0
        %1404 = vmatprep.subr.mxu0 0.0
        %1405 = vmatpush1.msra.mxu0 0.0
        %1406 = vmatprep.subr.mxu0 0.0
        %1407 = vmatpush1.msra.mxu0 0.0
        %1408 = vmatprep.subr.mxu0 0.0
        %1409 = vmatpush1.msra.mxu0 0.0
        %1410 = vmatprep.subr.mxu0 0.0
        %1411 = vmatpush1.msra.mxu0 0.0
        %1412 = vmatprep.subr.mxu0 0.0
        %1413 = vmatpush1.msra.mxu0 0.0
        %1414 = vmatprep.subr.mxu0 0.0
        %1415 = vmatpush1.msra.mxu0 0.0
        %1416 = vmatprep.subr.mxu0 0.0
        %1417 = vmatpush1.msra.mxu0 0.0
        %1418 = vmatprep.subr.mxu0 0.0
        %1419 = vmatpush1.msra.mxu0 0.0
        %1420 = vmatprep.subr.mxu0 0.0
        %1421 = vmatpush1.msra.mxu0 0.0
        %1422 = vmatprep.subr.mxu0 0.0
        %1423 = vmatpush1.msra.mxu0 0.0
        %1424 = vmatprep.subr.mxu0 0.0
        %1425 = vmatpush1.msra.mxu0 0.0
        %1426 = vmatprep.subr.mxu0 0.0
        %1427 = vmatpush1.msra.mxu0 0.0
        %1428 = vmatprep.subr.mxu0 0.0
        %1429 = vmatpush1.msra.mxu0 0.0
        %1430 = vmatprep.subr.mxu0 0.0
        %1431 = vmatpush1.msra.mxu0 0.0
        %1432 = vmatprep.subr.mxu0 0.0
        %1433 = vmatpush1.msra.mxu0 0.0
        %1434 = vmatprep.subr.mxu0 0.0
        %1435 = vmatpush1.msra.mxu0 0.0
        %1436 = vmatprep.subr.mxu0 0.0
        %1437 = vmatpush1.msra.mxu0 0.0
        %1438 = vmatprep.subr.mxu0 0.0
        %1439 = vmatpush1.msra.mxu0 0.0
        %1440 = vmatprep.subr.mxu0 0.0
        %1441 = vmatpush1.msra.mxu0 0.0
        %1442 = vmatprep.subr.mxu0 0.0
        %1443 = vmatpush1.msra.mxu0 0.0
        %1444 = vmatprep.subr.mxu0 0.0
        %1445 = vmatpush1.msra.mxu0 0.0
        %1446 = vmatprep.subr.mxu0 0.0
        %1447 = vmatpush1.msra.mxu0 0.0
        %1448 = vmatprep.subr.mxu0 0.0
        %1449 = vmatpush1.msra.mxu0 0.0
        %1450 = vmatprep.subr.mxu0 0.0
        %1451 = vmatpush1.msra.mxu0 0.0
        %1452 = vmatprep.subr.mxu0 0.0
        %1453 = vmatpush1.msra.mxu0 0.0
        %1454 = vmatprep.subr.mxu0 0.0
        %1455 = vmatpush1.msra.mxu0 0.0
        %1456 = vmatprep.subr.mxu0 0.0
        %1457 = vmatpush1.msra.mxu0 0.0
        %1458 = vmatprep.subr.mxu0 0.0
        %1459 = vmatpush1.msra.mxu0 0.0
        %1460 = vmatprep.subr.mxu0 0.0
        %1461 = vmatpush1.msra.mxu0 0.0
        %1462 = vmatprep.subr.mxu0 0.0
        %1463 = vmatpush1.msra.mxu0 0.0
        %1464 = vmatprep.mubr.f32.mxu0 0.0
        %1465 = vmatmul.mubr.f32.gmra.mrb[0].mxu0 %v1302
        %v1466 = vpop.f32.mrb[0].mxu0
        %v1467 = vadd.f32 0.0, %v1466
        %v1468 = vpop.f32.mrb[0].mxu0
        %1469 = vmatprep.mubr.f32.mxu0 0.0
        %1470 = vmatmul.mubr.f32.gmra.mrb[0].mxu0 %v1305
        %v1471 = vpop.f32.mrb[0].mxu0
        %v1472 = vadd.f32 0.0, %v1471
        %v1473 = vpop.f32.mrb[0].mxu0
        %1474 = vmatprep.mubr.f32.mxu0 0.0
        %1475 = vmatmul.mubr.f32.gmra.mrb[0].mxu0 %v1308
        %v1476 = vpop.f32.mrb[0].mxu0
        %v1477 = vadd.f32 0.0, %v1476
        %v1478 = vpop.f32.mrb[0].mxu0
        %1479 = vmatprep.mubr.f32.mxu0 0.0
        %1480 = vmatmul.mubr.f32.gmra.mrb[0].mxu0 %v1311
        %v1481 = vpop.f32.mrb[0].mxu0
        %v1482 = vadd.f32 0.0, %v1481
        %v1483 = vpop.f32.mrb[0].mxu0
        %1484 = vmatprep.mubr.f32.mxu0 0.0
        %1485 = vmatmul.mubr.f32.gmra.mrb[0].mxu0 %v1314
        %v1486 = vpop.f32.mrb[0].mxu0
        %v1487 = vadd.f32 0.0, %v1486
        %v1488 = vpop.f32.mrb[0].mxu0
        %1489 = vmatprep.mubr.f32.mxu0 0.0
        %1490 = vmatmul.mubr.f32.gmra.mrb[0].mxu0 %v1317
        %v1491 = vpop.f32.mrb[0].mxu0
        %v1492 = vadd.f32 0.0, %v1491
        %v1493 = vpop.f32.mrb[0].mxu0
        %1494 = vmatprep.mubr.f32.mxu0 0.0
        %1495 = vmatmul.mubr.f32.gmra.mrb[0].mxu0 %v1320
        %v1496 = vpop.f32.mrb[0].mxu0
        %v1497 = vadd.f32 0.0, %v1496
        %v1498 = vpop.f32.mrb[0].mxu0
        %1499 = vmatprep.mubr.f32.mxu0 0.0
        %1500 = vmatmul.mubr.f32.gmra.mrb[0].mxu0 %v1323
        %v1501 = vpop.f32.mrb[0].mxu0
        %v1502 = vadd.f32 0.0, %v1501
        %v1503 = vpop.f32.mrb[0].mxu0
        %1504 = vmatprep.mubr.f32.mxu0 0.0
        %1505 = vmatmul.mubr.f32.gmra.mrb[0].mxu0 %v1326
        %v1506 = vpop.f32.mrb[0].mxu0
        %v1507 = vadd.f32 0.0, %v1506
        %v1508 = vpop.f32.mrb[0].mxu0
        %1509 = vmatprep.mubr.f32.mxu0 0.0
        %1510 = vmatmul.mubr.f32.gmra.mrb[0].mxu0 %v1329
        %v1511 = vpop.f32.mrb[0].mxu0
        %v1512 = vadd.f32 0.0, %v1511
        %v1513 = vpop.f32.mrb[0].mxu0
        %1514 = vmatprep.mubr.f32.mxu0 0.0
        %1515 = vmatmul.mubr.f32.gmra.mrb[0].mxu0 %v1332
        %v1516 = vpop.f32.mrb[0].mxu0
        %v1517 = vadd.f32 0.0, %v1516
        %v1518 = vpop.f32.mrb[0].mxu0
        %1519 = vmatprep.mubr.f32.mxu0 0.0
        %1520 = vmatmul.mubr.f32.gmra.mrb[0].mxu0 %v1335
        %v1521 = vpop.f32.mrb[0].mxu0
        %v1522 = vadd.f32 0.0, %v1521
        %v1523 = vpop.f32.mrb[0].mxu0
        %1524 = vmatprep.mubr.f32.mxu0 0.0
        %1525 = vmatmul.mubr.f32.gmra.mrb[0].mxu0 %v1338
        %v1526 = vpop.f32.mrb[0].mxu0
        %v1527 = vadd.f32 0.0, %v1526
        %v1528 = vpop.f32.mrb[0].mxu0
        %1529 = vmatprep.mubr.f32.mxu0 0.0
        %1530 = vmatmul.mubr.f32.gmra.mrb[0].mxu0 %v1341
        %v1531 = vpop.f32.mrb[0].mxu0
        %v1532 = vadd.f32 0.0, %v1531
        %v1533 = vpop.f32.mrb[0].mxu0
        %1534 = vmatprep.mubr.f32.mxu0 0.0
        %1535 = vmatmul.mubr.f32.gmra.mrb[0].mxu0 %v1344
        %v1536 = vpop.f32.mrb[0].mxu0
        %v1537 = vadd.f32 0.0, %v1536
        %v1538 = vpop.f32.mrb[0].mxu0
        %1539 = vmatprep.mubr.f32.mxu0 0.0
        %1540 = vmatmul.mubr.f32.gmra.mrb[0].mxu0 %v1347
        %v1541 = vpop.f32.mrb[0].mxu0
        %v1542 = vadd.f32 0.0, %v1541
        %v1543 = vpop.f32.mrb[0].mxu0
        %1544 = vmatprep.mubr.f32.mxu0 0.0
        %1545 = vmatmul.mubr.f32.gmra.mrb[0].mxu0 %v1350
        %v1546 = vpop.f32.mrb[0].mxu0
        %v1547 = vadd.f32 0.0, %v1546
        %v1548 = vpop.f32.mrb[0].mxu0
        %1549 = vmatprep.mubr.f32.mxu0 0.0
        %1550 = vmatmul.mubr.f32.gmra.mrb[0].mxu0 %v1353
        %v1551 = vpop.f32.mrb[0].mxu0
        %v1552 = vadd.f32 0.0, %v1551
        %v1553 = vpop.f32.mrb[0].mxu0
        %1554 = vmatprep.mubr.f32.mxu0 0.0
        %1555 = vmatmul.mubr.f32.gmra.mrb[0].mxu0 %v1356
        %v1556 = vpop.f32.mrb[0].mxu0
        %v1557 = vadd.f32 0.0, %v1556
        %v1558 = vpop.f32.mrb[0].mxu0
        %1559 = vmatprep.mubr.f32.mxu0 0.0
        %1560 = vmatmul.mubr.f32.gmra.mrb[0].mxu0 %v1359
        %v1561 = vpop.f32.mrb[0].mxu0
        %v1562 = vadd.f32 0.0, %v1561
        %v1563 = vpop.f32.mrb[0].mxu0
        %1564 = vmatprep.mubr.f32.mxu0 0.0
        %1565 = vmatmul.mubr.f32.gmra.mrb[0].mxu0 %v1362
        %v1566 = vpop.f32.mrb[0].mxu0
        %v1567 = vadd.f32 0.0, %v1566
        %v1568 = vpop.f32.mrb[0].mxu0
        %1569 = vmatprep.mubr.f32.mxu0 0.0
        %1570 = vmatmul.mubr.f32.gmra.mrb[0].mxu0 %v1365
        %v1571 = vpop.f32.mrb[0].mxu0
        %v1572 = vadd.f32 0.0, %v1571
        %v1573 = vpop.f32.mrb[0].mxu0
        %1574 = vmatprep.mubr.f32.mxu0 0.0
        %1575 = vmatmul.mubr.f32.gmra.mrb[0].mxu0 %v1368
        %v1576 = vpop.f32.mrb[0].mxu0
        %v1577 = vadd.f32 0.0, %v1576
        %v1578 = vpop.f32.mrb[0].mxu0
        %1579 = vmatprep.mubr.f32.mxu0 0.0
        %1580 = vmatmul.mubr.f32.gmra.mrb[0].mxu0 %v1371
        %v1581 = vpop.f32.mrb[0].mxu0
        %v1582 = vadd.f32 0.0, %v1581
        %v1583 = vpop.f32.mrb[0].mxu0
        %1584 = vmatprep.mubr.f32.mxu0 0.0
        %1585 = vmatmul.mubr.f32.gmra.mrb[0].mxu0 %v1374
        %v1586 = vpop.f32.mrb[0].mxu0
        %v1587 = vadd.f32 0.0, %v1586
        %v1588 = vpop.f32.mrb[0].mxu0
        %1589 = vmatprep.mubr.f32.mxu0 0.0
        %1590 = vmatmul.mubr.f32.gmra.mrb[0].mxu0 %v1377
        %v1591 = vpop.f32.mrb[0].mxu0
        %v1592 = vadd.f32 0.0, %v1591
        %v1593 = vpop.f32.mrb[0].mxu0
        %1594 = vmatprep.mubr.f32.mxu0 0.0
        %1595 = vmatmul.mubr.f32.gmra.mrb[0].mxu0 %v1380
        %v1596 = vpop.f32.mrb[0].mxu0
        %v1597 = vadd.f32 0.0, %v1596
        %v1598 = vpop.f32.mrb[0].mxu0
        %1599 = vmatprep.mubr.f32.mxu0 0.0
        %1600 = vmatmul.mubr.f32.gmra.mrb[0].mxu0 %v1383
        %v1601 = vpop.f32.mrb[0].mxu0
        %v1602 = vadd.f32 0.0, %v1601
        %v1603 = vpop.f32.mrb[0].mxu0
        %1604 = vmatprep.mubr.f32.mxu0 0.0
        %1605 = vmatmul.mubr.f32.gmra.mrb[0].mxu0 %v1386
        %v1606 = vpop.f32.mrb[0].mxu0
        %v1607 = vadd.f32 0.0, %v1606
        %v1608 = vpop.f32.mrb[0].mxu0
        %1609 = vmatprep.mubr.f32.mxu0 0.0
        %1610 = vmatmul.mubr.f32.gmra.mrb[0].mxu0 %v1389
        %v1611 = vpop.f32.mrb[0].mxu0
        %v1612 = vadd.f32 0.0, %v1611
        %v1613 = vpop.f32.mrb[0].mxu0
        %1614 = vmatprep.mubr.f32.mxu0 0.0
        %1615 = vmatmul.mubr.f32.gmra.mrb[0].mxu0 %v1392
        %v1616 = vpop.f32.mrb[0].mxu0
        %v1617 = vadd.f32 0.0, %v1616
        %v1618 = vpop.f32.mrb[0].mxu0
        %1619 = vmatprep.mubr.f32.mxu0 0.0
        %1620 = vmatmul.mubr.f32.gmra.mrb[0].mxu0 %v1395
        %v1621 = vpop.f32.mrb[0].mxu0
        %v1622 = vadd.f32 0.0, %v1621
        %v1623 = vpop.f32.mrb[0].mxu0
        %1624 = vdwg.mxu0
        %v1625 = vadd.f32 %v1078, %v1467
        %v1626 = vadd.f32 %v1083, %v1472
        %v1627 = vadd.f32 %v1088, %v1477
        %v1628 = vadd.f32 %v1093, %v1482
        %v1629 = vadd.f32 %v1098, %v1487
        %v1630 = vadd.f32 %v1103, %v1492
        %v1631 = vadd.f32 %v1108, %v1497
        %v1632 = vadd.f32 %v1113, %v1502
        %v1633 = vadd.f32 %v1118, %v1507
        %v1634 = vadd.f32 %v1123, %v1512
        %v1635 = vadd.f32 %v1128, %v1517
        %v1636 = vadd.f32 %v1133, %v1522
        %v1637 = vadd.f32 %v1138, %v1527
        %v1638 = vadd.f32 %v1143, %v1532
        %v1639 = vadd.f32 %v1148, %v1537
        %v1640 = vadd.f32 %v1153, %v1542
        %v1641 = vadd.f32 %v1158, %v1547
        %v1642 = vadd.f32 %v1163, %v1552
        %v1643 = vadd.f32 %v1168, %v1557
        %v1644 = vadd.f32 %v1173, %v1562
        %v1645 = vadd.f32 %v1178, %v1567
        %v1646 = vadd.f32 %v1183, %v1572
        %v1647 = vadd.f32 %v1188, %v1577
        %v1648 = vadd.f32 %v1193, %v1582
        %v1649 = vadd.f32 %v1198, %v1587
        %v1650 = vadd.f32 %v1203, %v1592
        %v1651 = vadd.f32 %v1208, %v1597
        %v1652 = vadd.f32 %v1213, %v1602
        %v1653 = vadd.f32 %v1218, %v1607
        %v1654 = vadd.f32 %v1223, %v1612
        %v1655 = vadd.f32 %v1228, %v1617
        %v1656 = vadd.f32 %v1233, %v1622
        %v1657 = vld [vmem:[%s2] sm:$0x1]
        %v1659 = vlaneseq
        %v1660 = vshrl.u32 %v1659, 7
        %v1661 = vsub.s32 0, %v1660
        %v1662 = vrot.slane %v1657, %v1661
        %v1664 = vadd.f32 %v1625, %v1662
        %v1665 = vadd.f32 %v1626, %v1662
        %v1666 = vadd.f32 %v1627, %v1662
        %v1667 = vadd.f32 %v1628, %v1662
        %v1668 = vadd.f32 %v1629, %v1662
        %v1669 = vadd.f32 %v1630, %v1662
        %v1670 = vadd.f32 %v1631, %v1662
        %v1671 = vadd.f32 %v1632, %v1662
        %v1672 = vadd.f32 %v1633, %v1662
        %v1673 = vadd.f32 %v1634, %v1662
        %v1674 = vadd.f32 %v1635, %v1662
        %v1675 = vadd.f32 %v1636, %v1662
        %v1676 = vadd.f32 %v1637, %v1662
        %v1677 = vadd.f32 %v1638, %v1662
        %v1678 = vadd.f32 %v1639, %v1662
        %v1679 = vadd.f32 %v1640, %v1662
        %v1680 = vadd.f32 %v1641, %v1662
        %v1681 = vadd.f32 %v1642, %v1662
        %v1682 = vadd.f32 %v1643, %v1662
        %v1683 = vadd.f32 %v1644, %v1662
        %v1684 = vadd.f32 %v1645, %v1662
        %v1685 = vadd.f32 %v1646, %v1662
        %v1686 = vadd.f32 %v1647, %v1662
        %v1687 = vadd.f32 %v1648, %v1662
        %v1688 = vadd.f32 %v1649, %v1662
        %v1689 = vadd.f32 %v1650, %v1662
        %v1690 = vadd.f32 %v1651, %v1662
        %v1691 = vadd.f32 %v1652, %v1662
        %v1692 = vadd.f32 %v1653, %v1662
        %v1693 = vadd.f32 %v1654, %v1662
        %v1694 = vadd.f32 %v1655, %v1662
        %v1695 = vadd.f32 %v1656, %v1662
        %v1696 = vmax.f32 %v1664, 0.0
        %v1697 = vmax.f32 %v1665, 0.0
        %v1698 = vmax.f32 %v1666, 0.0
        %v1699 = vmax.f32 %v1667, 0.0
        %v1700 = vmax.f32 %v1668, 0.0
        %v1701 = vmax.f32 %v1669, 0.0
        %v1702 = vmax.f32 %v1670, 0.0
        %v1703 = vmax.f32 %v1671, 0.0
        %v1704 = vmax.f32 %v1672, 0.0
        %v1705 = vmax.f32 %v1673, 0.0
        %v1706 = vmax.f32 %v1674, 0.0
        %v1707 = vmax.f32 %v1675, 0.0
        %v1708 = vmax.f32 %v1676, 0.0
        %v1709 = vmax.f32 %v1677, 0.0
        %v1710 = vmax.f32 %v1678, 0.0
        %v1711 = vmax.f32 %v1679, 0.0
        %v1712 = vmax.f32 %v1680, 0.0
        %v1713 = vmax.f32 %v1681, 0.0
        %v1714 = vmax.f32 %v1682, 0.0
        %v1715 = vmax.f32 %v1683, 0.0
        %v1716 = vmax.f32 %v1684, 0.0
        %v1717 = vmax.f32 %v1685, 0.0
        %v1718 = vmax.f32 %v1686, 0.0
        %v1719 = vmax.f32 %v1687, 0.0
        %v1720 = vmax.f32 %v1688, 0.0
        %v1721 = vmax.f32 %v1689, 0.0
        %v1722 = vmax.f32 %v1690, 0.0
        %v1723 = vmax.f32 %v1691, 0.0
        %v1724 = vmax.f32 %v1692, 0.0
        %v1725 = vmax.f32 %v1693, 0.0
        %v1726 = vmax.f32 %v1694, 0.0
        %v1727 = vmax.f32 %v1695, 0.0
        %1728 = vst.msk [vmem:[#allocation2 + $0x8] sm:$0xff] %vm445, %v1696
        %1729 = vst.msk [vmem:[#allocation2 + $0x10] sm:$0xff] %vm445, %v1697
        %1730 = vst.msk [vmem:[#allocation2 + $0x18] sm:$0xff] %vm445, %v1698
        %1731 = vst.msk [vmem:[#allocation2 + $0x20] sm:$0xff] %vm445, %v1699
        %1732 = vst.msk [vmem:[#allocation2 + $0x28] sm:$0xff] %vm445, %v1700
        %1733 = vst.msk [vmem:[#allocation2 + $0x30] sm:$0xff] %vm445, %v1701
        %1734 = vst.msk [vmem:[#allocation2 + $0x38] sm:$0xff] %vm445, %v1702
        %1735 = vst.msk [vmem:[#allocation2 + $0x40] sm:$0xff] %vm445, %v1703
        %1736 = vst.msk [vmem:[#allocation2 + $0x48] sm:$0xff] %vm445, %v1704
        %1737 = vst.msk [vmem:[#allocation2 + $0x50] sm:$0xff] %vm445, %v1705
        %1738 = vst.msk [vmem:[#allocation2 + $0x58] sm:$0xff] %vm445, %v1706
        %1739 = vst.msk [vmem:[#allocation2 + $0x60] sm:$0xff] %vm445, %v1707
        %1740 = vst.msk [vmem:[#allocation2 + $0x68] sm:$0xff] %vm445, %v1708
        %1741 = vst.msk [vmem:[#allocation2 + $0x70] sm:$0xff] %vm445, %v1709
        %1742 = vst.msk [vmem:[#allocation2 + $0x78] sm:$0xff] %vm445, %v1710
        %1743 = vst.msk [vmem:[#allocation2 + $0x80] sm:$0xff] %vm445, %v1711
        %1744 = vst.msk [vmem:[#allocation2 + $0x90] sm:$0xff] %vm445, %v1712
        %1745 = vst.msk [vmem:[#allocation2 + $0x98] sm:$0xff] %vm445, %v1713
        %1746 = vst.msk [vmem:[#allocation2 + $0xa0] sm:$0xff] %vm445, %v1714
        %1747 = vst.msk [vmem:[#allocation2 + $0xa8] sm:$0xff] %vm445, %v1715
        %1748 = vst.msk [vmem:[#allocation2 + $0xb0] sm:$0xff] %vm445, %v1716
        %1749 = vst.msk [vmem:[#allocation2 + $0xb8] sm:$0xff] %vm445, %v1717
        %1750 = vst.msk [vmem:[#allocation2 + $0xc0] sm:$0xff] %vm445, %v1718
        %1751 = vst.msk [vmem:[#allocation2 + $0xc8] sm:$0xff] %vm445, %v1719
        %1752 = vst.msk [vmem:[#allocation2 + $0xd0] sm:$0xff] %vm445, %v1720
        %1753 = vst.msk [vmem:[#allocation2 + $0xd8] sm:$0xff] %vm445, %v1721
        %1754 = vst.msk [vmem:[#allocation2 + $0xe0] sm:$0xff] %vm445, %v1722
        %1755 = vst.msk [vmem:[#allocation2 + $0xe8] sm:$0xff] %vm445, %v1723
        %1756 = vst.msk [vmem:[#allocation2 + $0xf0] sm:$0xff] %vm445, %v1724
        %1757 = vst.msk [vmem:[#allocation2 + $0xf8] sm:$0xff] %vm445, %v1725
        %1758 = vst.msk [vmem:[#allocation2 + $0x100] sm:$0xff] %vm445, %v1726
        %1759 = vst.msk [vmem:[#allocation2 + $0x108] sm:$0xff] %vm445, %v1727
        %s1760 = scalar_lea.vmem [#allocation2], 7
        %v1761 = vld [vmem:[%s1760] ss:$2 sm:$0xff]
        %s1762 = scalar_lea.vmem [#allocation2], 23
        %v1763 = vld [vmem:[%s1762] ss:$2 sm:$0xff]
        %s1764 = scalar_lea.vmem [#allocation2], 39
        %v1765 = vld [vmem:[%s1764] ss:$2 sm:$0xff]
        %s1766 = scalar_lea.vmem [#allocation2], 55
        %v1767 = vld [vmem:[%s1766] ss:$2 sm:$0xff]
        %s1768 = scalar_lea.vmem [#allocation2], 71
        %v1769 = vld [vmem:[%s1768] ss:$2 sm:$0xff]
        %s1770 = scalar_lea.vmem [#allocation2], 87
        %v1771 = vld [vmem:[%s1770] ss:$2 sm:$0xff]
        %s1772 = scalar_lea.vmem [#allocation2], 103
        %v1773 = vld [vmem:[%s1772] ss:$2 sm:$0xff]
        %s1774 = scalar_lea.vmem [#allocation2], 119
        %v1775 = vld [vmem:[%s1774] ss:$2 sm:$0xff]
        %s1776 = scalar_lea.vmem [#allocation2], 143
        %v1777 = vld [vmem:[%s1776] ss:$2 sm:$0xff]
        %s1778 = scalar_lea.vmem [#allocation2], 159
        %v1779 = vld [vmem:[%s1778] ss:$2 sm:$0xff]
        %s1780 = scalar_lea.vmem [#allocation2], 175
        %v1781 = vld [vmem:[%s1780] ss:$2 sm:$0xff]
        %s1782 = scalar_lea.vmem [#allocation2], 191
        %v1783 = vld [vmem:[%s1782] ss:$2 sm:$0xff]
        %s1784 = scalar_lea.vmem [#allocation2], 207
        %v1785 = vld [vmem:[%s1784] ss:$2 sm:$0xff]
        %s1786 = scalar_lea.vmem [#allocation2], 223
        %v1787 = vld [vmem:[%s1786] ss:$2 sm:$0xff]
        %s1788 = scalar_lea.vmem [#allocation2], 239
        %v1789 = vld [vmem:[%s1788] ss:$2 sm:$0xff]
        %s1790 = scalar_lea.vmem [#allocation2], 255
        %v1791 = vld [vmem:[%s1790] ss:$2 sm:$0xff]
        %v1792 = vld [vmem:[%s3] sm:$0xff]
        %v1793 = vld [vmem:[%s3 + $0x8] sm:$0xff]
        %s1794 = scalar_lea.vmem [#allocation2], 8
        %v1795 = vld [vmem:[%s1794] ss:$2 sm:$0xff]
        %s1796 = scalar_lea.vmem [#allocation2], 24
        %v1797 = vld [vmem:[%s1796] ss:$2 sm:$0xff]
        %s1798 = scalar_lea.vmem [#allocation2], 40
        %v1799 = vld [vmem:[%s1798] ss:$2 sm:$0xff]
        %s1800 = scalar_lea.vmem [#allocation2], 56
        %v1801 = vld [vmem:[%s1800] ss:$2 sm:$0xff]
        %s1802 = scalar_lea.vmem [#allocation2], 72
        %v1803 = vld [vmem:[%s1802] ss:$2 sm:$0xff]
        %s1804 = scalar_lea.vmem [#allocation2], 88
        %v1805 = vld [vmem:[%s1804] ss:$2 sm:$0xff]
        %s1806 = scalar_lea.vmem [#allocation2], 104
        %v1807 = vld [vmem:[%s1806] ss:$2 sm:$0xff]
        %s1808 = scalar_lea.vmem [#allocation2], 120
        %v1809 = vld [vmem:[%s1808] ss:$2 sm:$0xff]
        %s1810 = scalar_lea.vmem [#allocation2], 144
        %v1811 = vld [vmem:[%s1810] ss:$2 sm:$0xff]
        %s1812 = scalar_lea.vmem [#allocation2], 160
        %v1813 = vld [vmem:[%s1812] ss:$2 sm:$0xff]
        %s1814 = scalar_lea.vmem [#allocation2], 176
        %v1815 = vld [vmem:[%s1814] ss:$2 sm:$0xff]
        %s1816 = scalar_lea.vmem [#allocation2], 192
        %v1817 = vld [vmem:[%s1816] ss:$2 sm:$0xff]
        %s1818 = scalar_lea.vmem [#allocation2], 208
        %v1819 = vld [vmem:[%s1818] ss:$2 sm:$0xff]
        %s1820 = scalar_lea.vmem [#allocation2], 224
        %v1821 = vld [vmem:[%s1820] ss:$2 sm:$0xff]
        %s1822 = scalar_lea.vmem [#allocation2], 240
        %v1823 = vld [vmem:[%s1822] ss:$2 sm:$0xff]
        %s1824 = scalar_lea.vmem [#allocation2], 256
        %v1825 = vld [vmem:[%s1824] ss:$2 sm:$0xff]
        %v1826 = vld [vmem:[%s3 + $0x10] sm:$0xff]
        %v1827 = vld [vmem:[%s3 + $0x18] sm:$0xff]
        %v1829 = vsel %vm445, %v1795, 0
        %v1832 = vsel %vm445, %v1797, 0
        %v1835 = vsel %vm445, %v1799, 0
        %v1838 = vsel %vm445, %v1801, 0
        %v1841 = vsel %vm445, %v1803, 0
        %v1844 = vsel %vm445, %v1805, 0
        %v1847 = vsel %vm445, %v1807, 0
        %v1850 = vsel %vm445, %v1809, 0
        %v1853 = vsel %vm445, %v1811, 0
        %v1856 = vsel %vm445, %v1813, 0
        %v1859 = vsel %vm445, %v1815, 0
        %v1862 = vsel %vm445, %v1817, 0
        %v1865 = vsel %vm445, %v1819, 0
        %v1868 = vsel %vm445, %v1821, 0
        %v1871 = vsel %vm445, %v1823, 0
        %v1874 = vsel %vm445, %v1825, 0
        %1876 = vmatprep.subr.mxu0 0.0
        %1877 = vmatpush1.msra.mxu0 %v1826
        %1878 = vmatprep.subr.mxu0 0.0
        %1879 = vmatpush1.msra.mxu0 %v1827
        %1880 = vmatprep.subr.mxu0 0.0
        %1881 = vmatpush1.msra.mxu0 0.0
        %1882 = vmatprep.subr.mxu0 0.0
        %1883 = vmatpush1.msra.mxu0 0.0
        %1884 = vmatprep.subr.mxu0 0.0
        %1885 = vmatpush1.msra.mxu0 0.0
        %1886 = vmatprep.subr.mxu0 0.0
        %1887 = vmatpush1.msra.mxu0 0.0
        %1888 = vmatprep.subr.mxu0 0.0
        %1889 = vmatpush1.msra.mxu0 0.0
        %1890 = vmatprep.subr.mxu0 0.0
        %1891 = vmatpush1.msra.mxu0 0.0
        %1892 = vmatprep.subr.mxu0 0.0
        %1893 = vmatpush1.msra.mxu0 0.0
        %1894 = vmatprep.subr.mxu0 0.0
        %1895 = vmatpush1.msra.mxu0 0.0
        %1896 = vmatprep.subr.mxu0 0.0
        %1897 = vmatpush1.msra.mxu0 0.0
        %1898 = vmatprep.subr.mxu0 0.0
        %1899 = vmatpush1.msra.mxu0 0.0
        %1900 = vmatprep.subr.mxu0 0.0
        %1901 = vmatpush1.msra.mxu0 0.0
        %1902 = vmatprep.subr.mxu0 0.0
        %1903 = vmatpush1.msra.mxu0 0.0
        %1904 = vmatprep.subr.mxu0 0.0
        %1905 = vmatpush1.msra.mxu0 0.0
        %1906 = vmatprep.subr.mxu0 0.0
        %1907 = vmatpush1.msra.mxu0 0.0
        %1908 = vmatprep.subr.mxu0 0.0
        %1909 = vmatpush1.msra.mxu0 0.0
        %1910 = vmatprep.subr.mxu0 0.0
        %1911 = vmatpush1.msra.mxu0 0.0
        %1912 = vmatprep.subr.mxu0 0.0
        %1913 = vmatpush1.msra.mxu0 0.0
        %1914 = vmatprep.subr.mxu0 0.0
        %1915 = vmatpush1.msra.mxu0 0.0
        %1916 = vmatprep.subr.mxu0 0.0
        %1917 = vmatpush1.msra.mxu0 0.0
        %1918 = vmatprep.subr.mxu0 0.0
        %1919 = vmatpush1.msra.mxu0 0.0
        %1920 = vmatprep.subr.mxu0 0.0
        %1921 = vmatpush1.msra.mxu0 0.0
        %1922 = vmatprep.subr.mxu0 0.0
        %1923 = vmatpush1.msra.mxu0 0.0
        %1924 = vmatprep.subr.mxu0 0.0
        %1925 = vmatpush1.msra.mxu0 0.0
        %1926 = vmatprep.subr.mxu0 0.0
        %1927 = vmatpush1.msra.mxu0 0.0
        %1928 = vmatprep.subr.mxu0 0.0
        %1929 = vmatpush1.msra.mxu0 0.0
        %1930 = vmatprep.subr.mxu0 0.0
        %1931 = vmatpush1.msra.mxu0 0.0
        %1932 = vmatprep.subr.mxu0 0.0
        %1933 = vmatpush1.msra.mxu0 0.0
        %1934 = vmatprep.subr.mxu0 0.0
        %1935 = vmatpush1.msra.mxu0 0.0
        %1936 = vmatprep.subr.mxu0 0.0
        %1937 = vmatpush1.msra.mxu0 0.0
        %1938 = vmatprep.subr.mxu0 0.0
        %1939 = vmatpush1.msra.mxu0 0.0
        %1940 = vmatprep.mubr.f32.mxu0 0.0
        %1941 = vmatmul.mubr.f32.gmra.mrb[0].mxu0 %v1829
        %v1942 = vpop.f32.mrb[0].mxu0
        %v1943 = vadd.f32 0.0, %v1942
        %v1944 = vpop.f32.mrb[0].mxu0
        %1945 = vmatprep.mubr.f32.mxu0 0.0
        %1946 = vmatmul.mubr.f32.gmra.mrb[0].mxu0 %v1832
        %v1947 = vpop.f32.mrb[0].mxu0
        %v1948 = vadd.f32 0.0, %v1947
        %v1949 = vpop.f32.mrb[0].mxu0
        %1950 = vmatprep.mubr.f32.mxu0 0.0
        %1951 = vmatmul.mubr.f32.gmra.mrb[0].mxu0 %v1835
        %v1952 = vpop.f32.mrb[0].mxu0
        %v1953 = vadd.f32 0.0, %v1952
        %v1954 = vpop.f32.mrb[0].mxu0
        %1955 = vmatprep.mubr.f32.mxu0 0.0
        %1956 = vmatmul.mubr.f32.gmra.mrb[0].mxu0 %v1838
        %v1957 = vpop.f32.mrb[0].mxu0
        %v1958 = vadd.f32 0.0, %v1957
        %v1959 = vpop.f32.mrb[0].mxu0
        %1960 = vmatprep.mubr.f32.mxu0 0.0
        %1961 = vmatmul.mubr.f32.gmra.mrb[0].mxu0 %v1841
        %v1962 = vpop.f32.mrb[0].mxu0
        %v1963 = vadd.f32 0.0, %v1962
        %v1964 = vpop.f32.mrb[0].mxu0
        %1965 = vmatprep.mubr.f32.mxu0 0.0
        %1966 = vmatmul.mubr.f32.gmra.mrb[0].mxu0 %v1844
        %v1967 = vpop.f32.mrb[0].mxu0
        %v1968 = vadd.f32 0.0, %v1967
        %v1969 = vpop.f32.mrb[0].mxu0
        %1970 = vmatprep.mubr.f32.mxu0 0.0
        %1971 = vmatmul.mubr.f32.gmra.mrb[0].mxu0 %v1847
        %v1972 = vpop.f32.mrb[0].mxu0
        %v1973 = vadd.f32 0.0, %v1972
        %v1974 = vpop.f32.mrb[0].mxu0
        %1975 = vmatprep.mubr.f32.mxu0 0.0
        %1976 = vmatmul.mubr.f32.gmra.mrb[0].mxu0 %v1850
        %v1977 = vpop.f32.mrb[0].mxu0
        %v1978 = vadd.f32 0.0, %v1977
        %v1979 = vpop.f32.mrb[0].mxu0
        %1980 = vmatprep.mubr.f32.mxu0 0.0
        %1981 = vmatmul.mubr.f32.gmra.mrb[0].mxu0 %v1853
        %v1982 = vpop.f32.mrb[0].mxu0
        %v1983 = vadd.f32 0.0, %v1982
        %v1984 = vpop.f32.mrb[0].mxu0
        %1985 = vmatprep.mubr.f32.mxu0 0.0
        %1986 = vmatmul.mubr.f32.gmra.mrb[0].mxu0 %v1856
        %v1987 = vpop.f32.mrb[0].mxu0
        %v1988 = vadd.f32 0.0, %v1987
        %v1989 = vpop.f32.mrb[0].mxu0
        %1990 = vmatprep.mubr.f32.mxu0 0.0
        %1991 = vmatmul.mubr.f32.gmra.mrb[0].mxu0 %v1859
        %v1992 = vpop.f32.mrb[0].mxu0
        %v1993 = vadd.f32 0.0, %v1992
        %v1994 = vpop.f32.mrb[0].mxu0
        %1995 = vmatprep.mubr.f32.mxu0 0.0
        %1996 = vmatmul.mubr.f32.gmra.mrb[0].mxu0 %v1862
        %v1997 = vpop.f32.mrb[0].mxu0
        %v1998 = vadd.f32 0.0, %v1997
        %v1999 = vpop.f32.mrb[0].mxu0
        %2000 = vmatprep.mubr.f32.mxu0 0.0
        %2001 = vmatmul.mubr.f32.gmra.mrb[0].mxu0 %v1865
        %v2002 = vpop.f32.mrb[0].mxu0
        %v2003 = vadd.f32 0.0, %v2002
        %v2004 = vpop.f32.mrb[0].mxu0
        %2005 = vmatprep.mubr.f32.mxu0 0.0
        %2006 = vmatmul.mubr.f32.gmra.mrb[0].mxu0 %v1868
        %v2007 = vpop.f32.mrb[0].mxu0
        %v2008 = vadd.f32 0.0, %v2007
        %v2009 = vpop.f32.mrb[0].mxu0
        %2010 = vmatprep.mubr.f32.mxu0 0.0
        %2011 = vmatmul.mubr.f32.gmra.mrb[0].mxu0 %v1871
        %v2012 = vpop.f32.mrb[0].mxu0
        %v2013 = vadd.f32 0.0, %v2012
        %v2014 = vpop.f32.mrb[0].mxu0
        %2015 = vmatprep.mubr.f32.mxu0 0.0
        %2016 = vmatmul.mubr.f32.gmra.mrb[0].mxu0 %v1874
        %v2017 = vpop.f32.mrb[0].mxu0
        %v2018 = vadd.f32 0.0, %v2017
        %v2019 = vpop.f32.mrb[0].mxu0
        %2020 = vdwg.mxu0
        %v2022 = vsel %vm445, %v1761, 0
        %v2025 = vsel %vm445, %v1763, 0
        %v2028 = vsel %vm445, %v1765, 0
        %v2031 = vsel %vm445, %v1767, 0
        %v2034 = vsel %vm445, %v1769, 0
        %v2037 = vsel %vm445, %v1771, 0
        %v2040 = vsel %vm445, %v1773, 0
        %v2043 = vsel %vm445, %v1775, 0
        %v2046 = vsel %vm445, %v1777, 0
        %v2049 = vsel %vm445, %v1779, 0
        %v2052 = vsel %vm445, %v1781, 0
        %v2055 = vsel %vm445, %v1783, 0
        %v2058 = vsel %vm445, %v1785, 0
        %v2061 = vsel %vm445, %v1787, 0
        %v2064 = vsel %vm445, %v1789, 0
        %v2067 = vsel %vm445, %v1791, 0
        %2069 = vmatprep.subr.mxu0 0.0
        %2070 = vmatpush1.msra.mxu0 %v1792
        %2071 = vmatprep.subr.mxu0 0.0
        %2072 = vmatpush1.msra.mxu0 %v1793
        %2073 = vmatprep.subr.mxu0 0.0
        %2074 = vmatpush1.msra.mxu0 0.0
        %2075 = vmatprep.subr.mxu0 0.0
        %2076 = vmatpush1.msra.mxu0 0.0
        %2077 = vmatprep.subr.mxu0 0.0
        %2078 = vmatpush1.msra.mxu0 0.0
        %2079 = vmatprep.subr.mxu0 0.0
        %2080 = vmatpush1.msra.mxu0 0.0
        %2081 = vmatprep.subr.mxu0 0.0
        %2082 = vmatpush1.msra.mxu0 0.0
        %2083 = vmatprep.subr.mxu0 0.0
        %2084 = vmatpush1.msra.mxu0 0.0
        %2085 = vmatprep.subr.mxu0 0.0
        %2086 = vmatpush1.msra.mxu0 0.0
        %2087 = vmatprep.subr.mxu0 0.0
        %2088 = vmatpush1.msra.mxu0 0.0
        %2089 = vmatprep.subr.mxu0 0.0
        %2090 = vmatpush1.msra.mxu0 0.0
        %2091 = vmatprep.subr.mxu0 0.0
        %2092 = vmatpush1.msra.mxu0 0.0
        %2093 = vmatprep.subr.mxu0 0.0
        %2094 = vmatpush1.msra.mxu0 0.0
        %2095 = vmatprep.subr.mxu0 0.0
        %2096 = vmatpush1.msra.mxu0 0.0
        %2097 = vmatprep.subr.mxu0 0.0
        %2098 = vmatpush1.msra.mxu0 0.0
        %2099 = vmatprep.subr.mxu0 0.0
        %2100 = vmatpush1.msra.mxu0 0.0
        %2101 = vmatprep.subr.mxu0 0.0
        %2102 = vmatpush1.msra.mxu0 0.0
        %2103 = vmatprep.subr.mxu0 0.0
        %2104 = vmatpush1.msra.mxu0 0.0
        %2105 = vmatprep.subr.mxu0 0.0
        %2106 = vmatpush1.msra.mxu0 0.0
        %2107 = vmatprep.subr.mxu0 0.0
        %2108 = vmatpush1.msra.mxu0 0.0
        %2109 = vmatprep.subr.mxu0 0.0
        %2110 = vmatpush1.msra.mxu0 0.0
        %2111 = vmatprep.subr.mxu0 0.0
        %2112 = vmatpush1.msra.mxu0 0.0
        %2113 = vmatprep.subr.mxu0 0.0
        %2114 = vmatpush1.msra.mxu0 0.0
        %2115 = vmatprep.subr.mxu0 0.0
        %2116 = vmatpush1.msra.mxu0 0.0
        %2117 = vmatprep.subr.mxu0 0.0
        %2118 = vmatpush1.msra.mxu0 0.0
        %2119 = vmatprep.subr.mxu0 0.0
        %2120 = vmatpush1.msra.mxu0 0.0
        %2121 = vmatprep.subr.mxu0 0.0
        %2122 = vmatpush1.msra.mxu0 0.0
        %2123 = vmatprep.subr.mxu0 0.0
        %2124 = vmatpush1.msra.mxu0 0.0
        %2125 = vmatprep.subr.mxu0 0.0
        %2126 = vmatpush1.msra.mxu0 0.0
        %2127 = vmatprep.subr.mxu0 0.0
        %2128 = vmatpush1.msra.mxu0 0.0
        %2129 = vmatprep.subr.mxu0 0.0
        %2130 = vmatpush1.msra.mxu0 0.0
        %2131 = vmatprep.subr.mxu0 0.0
        %2132 = vmatpush1.msra.mxu0 0.0
        %2133 = vmatprep.mubr.f32.mxu0 0.0
        %2134 = vmatmul.mubr.f32.gmra.mrb[0].mxu0 %v2022
        %v2135 = vpop.f32.mrb[0].mxu0
        %v2136 = vadd.f32 %v1943, %v2135
        %v2137 = vpop.f32.mrb[0].mxu0
        %2138 = vmatprep.mubr.f32.mxu0 0.0
        %2139 = vmatmul.mubr.f32.gmra.mrb[0].mxu0 %v2025
        %v2140 = vpop.f32.mrb[0].mxu0
        %v2141 = vadd.f32 %v1948, %v2140
        %v2142 = vpop.f32.mrb[0].mxu0
        %2143 = vmatprep.mubr.f32.mxu0 0.0
        %2144 = vmatmul.mubr.f32.gmra.mrb[0].mxu0 %v2028
        %v2145 = vpop.f32.mrb[0].mxu0
        %v2146 = vadd.f32 %v1953, %v2145
        %v2147 = vpop.f32.mrb[0].mxu0
        %2148 = vmatprep.mubr.f32.mxu0 0.0
        %2149 = vmatmul.mubr.f32.gmra.mrb[0].mxu0 %v2031
        %v2150 = vpop.f32.mrb[0].mxu0
        %v2151 = vadd.f32 %v1958, %v2150
        %v2152 = vpop.f32.mrb[0].mxu0
        %2153 = vmatprep.mubr.f32.mxu0 0.0
        %2154 = vmatmul.mubr.f32.gmra.mrb[0].mxu0 %v2034
        %v2155 = vpop.f32.mrb[0].mxu0
        %v2156 = vadd.f32 %v1963, %v2155
        %v2157 = vpop.f32.mrb[0].mxu0
        %2158 = vmatprep.mubr.f32.mxu0 0.0
        %2159 = vmatmul.mubr.f32.gmra.mrb[0].mxu0 %v2037
        %v2160 = vpop.f32.mrb[0].mxu0
        %v2161 = vadd.f32 %v1968, %v2160
        %v2162 = vpop.f32.mrb[0].mxu0
        %2163 = vmatprep.mubr.f32.mxu0 0.0
        %2164 = vmatmul.mubr.f32.gmra.mrb[0].mxu0 %v2040
        %v2165 = vpop.f32.mrb[0].mxu0
        %v2166 = vadd.f32 %v1973, %v2165
        %v2167 = vpop.f32.mrb[0].mxu0
        %2168 = vmatprep.mubr.f32.mxu0 0.0
        %2169 = vmatmul.mubr.f32.gmra.mrb[0].mxu0 %v2043
        %v2170 = vpop.f32.mrb[0].mxu0
        %v2171 = vadd.f32 %v1978, %v2170
        %v2172 = vpop.f32.mrb[0].mxu0
        %2173 = vmatprep.mubr.f32.mxu0 0.0
        %2174 = vmatmul.mubr.f32.gmra.mrb[0].mxu0 %v2046
        %v2175 = vpop.f32.mrb[0].mxu0
        %v2176 = vadd.f32 %v1983, %v2175
        %v2177 = vpop.f32.mrb[0].mxu0
        %2178 = vmatprep.mubr.f32.mxu0 0.0
        %2179 = vmatmul.mubr.f32.gmra.mrb[0].mxu0 %v2049
        %v2180 = vpop.f32.mrb[0].mxu0
        %v2181 = vadd.f32 %v1988, %v2180
        %v2182 = vpop.f32.mrb[0].mxu0
        %2183 = vmatprep.mubr.f32.mxu0 0.0
        %2184 = vmatmul.mubr.f32.gmra.mrb[0].mxu0 %v2052
        %v2185 = vpop.f32.mrb[0].mxu0
        %v2186 = vadd.f32 %v1993, %v2185
        %v2187 = vpop.f32.mrb[0].mxu0
        %2188 = vmatprep.mubr.f32.mxu0 0.0
        %2189 = vmatmul.mubr.f32.gmra.mrb[0].mxu0 %v2055
        %v2190 = vpop.f32.mrb[0].mxu0
        %v2191 = vadd.f32 %v1998, %v2190
        %v2192 = vpop.f32.mrb[0].mxu0
        %2193 = vmatprep.mubr.f32.mxu0 0.0
        %2194 = vmatmul.mubr.f32.gmra.mrb[0].mxu0 %v2058
        %v2195 = vpop.f32.mrb[0].mxu0
        %v2196 = vadd.f32 %v2003, %v2195
        %v2197 = vpop.f32.mrb[0].mxu0
        %2198 = vmatprep.mubr.f32.mxu0 0.0
        %2199 = vmatmul.mubr.f32.gmra.mrb[0].mxu0 %v2061
        %v2200 = vpop.f32.mrb[0].mxu0
        %v2201 = vadd.f32 %v2008, %v2200
        %v2202 = vpop.f32.mrb[0].mxu0
        %2203 = vmatprep.mubr.f32.mxu0 0.0
        %2204 = vmatmul.mubr.f32.gmra.mrb[0].mxu0 %v2064
        %v2205 = vpop.f32.mrb[0].mxu0
        %v2206 = vadd.f32 %v2013, %v2205
        %v2207 = vpop.f32.mrb[0].mxu0
        %2208 = vmatprep.mubr.f32.mxu0 0.0
        %2209 = vmatmul.mubr.f32.gmra.mrb[0].mxu0 %v2067
        %v2210 = vpop.f32.mrb[0].mxu0
        %v2211 = vadd.f32 %v2018, %v2210
        %v2212 = vpop.f32.mrb[0].mxu0
        %2213 = vdwg.mxu0
        %s2214 = scalar_lea.vmem [#allocation2], 9
        %v2215 = vld [vmem:[%s2214] ss:$2 sm:$0xff]
        %s2216 = scalar_lea.vmem [#allocation2], 25
        %v2217 = vld [vmem:[%s2216] ss:$2 sm:$0xff]
        %s2218 = scalar_lea.vmem [#allocation2], 41
        %v2219 = vld [vmem:[%s2218] ss:$2 sm:$0xff]
        %s2220 = scalar_lea.vmem [#allocation2], 57
        %v2221 = vld [vmem:[%s2220] ss:$2 sm:$0xff]
        %s2222 = scalar_lea.vmem [#allocation2], 73
        %v2223 = vld [vmem:[%s2222] ss:$2 sm:$0xff]
        %s2224 = scalar_lea.vmem [#allocation2], 89
        %v2225 = vld [vmem:[%s2224] ss:$2 sm:$0xff]
        %s2226 = scalar_lea.vmem [#allocation2], 105
        %v2227 = vld [vmem:[%s2226] ss:$2 sm:$0xff]
        %s2228 = scalar_lea.vmem [#allocation2], 121
        %v2229 = vld [vmem:[%s2228] ss:$2 sm:$0xff]
        %s2230 = scalar_lea.vmem [#allocation2], 145
        %v2231 = vld [vmem:[%s2230] ss:$2 sm:$0xff]
        %s2232 = scalar_lea.vmem [#allocation2], 161
        %v2233 = vld [vmem:[%s2232] ss:$2 sm:$0xff]
        %s2234 = scalar_lea.vmem [#allocation2], 177
        %v2235 = vld [vmem:[%s2234] ss:$2 sm:$0xff]
        %s2236 = scalar_lea.vmem [#allocation2], 193
        %v2237 = vld [vmem:[%s2236] ss:$2 sm:$0xff]
        %s2238 = scalar_lea.vmem [#allocation2], 209
        %v2239 = vld [vmem:[%s2238] ss:$2 sm:$0xff]
        %s2240 = scalar_lea.vmem [#allocation2], 225
        %v2241 = vld [vmem:[%s2240] ss:$2 sm:$0xff]
        %s2242 = scalar_lea.vmem [#allocation2], 241
        %v2243 = vld [vmem:[%s2242] ss:$2 sm:$0xff]
        %s2244 = scalar_lea.vmem [#allocation2], 257
        %v2245 = vld [vmem:[%s2244] ss:$2 sm:$0xff]
        %v2246 = vld [vmem:[%s3 + $0x20] sm:$0xff]
        %v2247 = vld [vmem:[%s3 + $0x28] sm:$0xff]
        %v2249 = vsel %vm445, %v2215, 0
        %v2252 = vsel %vm445, %v2217, 0
        %v2255 = vsel %vm445, %v2219, 0
        %v2258 = vsel %vm445, %v2221, 0
        %v2261 = vsel %vm445, %v2223, 0
        %v2264 = vsel %vm445, %v2225, 0
        %v2267 = vsel %vm445, %v2227, 0
        %v2270 = vsel %vm445, %v2229, 0
        %v2273 = vsel %vm445, %v2231, 0
        %v2276 = vsel %vm445, %v2233, 0
        %v2279 = vsel %vm445, %v2235, 0
        %v2282 = vsel %vm445, %v2237, 0
        %v2285 = vsel %vm445, %v2239, 0
        %v2288 = vsel %vm445, %v2241, 0
        %v2291 = vsel %vm445, %v2243, 0
        %v2294 = vsel %vm445, %v2245, 0
        %2296 = vmatprep.subr.mxu0 0.0
        %2297 = vmatpush1.msra.mxu0 %v2246
        %2298 = vmatprep.subr.mxu0 0.0
        %2299 = vmatpush1.msra.mxu0 %v2247
        %2300 = vmatprep.subr.mxu0 0.0
        %2301 = vmatpush1.msra.mxu0 0.0
        %2302 = vmatprep.subr.mxu0 0.0
        %2303 = vmatpush1.msra.mxu0 0.0
        %2304 = vmatprep.subr.mxu0 0.0
        %2305 = vmatpush1.msra.mxu0 0.0
        %2306 = vmatprep.subr.mxu0 0.0
        %2307 = vmatpush1.msra.mxu0 0.0
        %2308 = vmatprep.subr.mxu0 0.0
        %2309 = vmatpush1.msra.mxu0 0.0
        %2310 = vmatprep.subr.mxu0 0.0
        %2311 = vmatpush1.msra.mxu0 0.0
        %2312 = vmatprep.subr.mxu0 0.0
        %2313 = vmatpush1.msra.mxu0 0.0
        %2314 = vmatprep.subr.mxu0 0.0
        %2315 = vmatpush1.msra.mxu0 0.0
        %2316 = vmatprep.subr.mxu0 0.0
        %2317 = vmatpush1.msra.mxu0 0.0
        %2318 = vmatprep.subr.mxu0 0.0
        %2319 = vmatpush1.msra.mxu0 0.0
        %2320 = vmatprep.subr.mxu0 0.0
        %2321 = vmatpush1.msra.mxu0 0.0
        %2322 = vmatprep.subr.mxu0 0.0
        %2323 = vmatpush1.msra.mxu0 0.0
        %2324 = vmatprep.subr.mxu0 0.0
        %2325 = vmatpush1.msra.mxu0 0.0
        %2326 = vmatprep.subr.mxu0 0.0
        %2327 = vmatpush1.msra.mxu0 0.0
        %2328 = vmatprep.subr.mxu0 0.0
        %2329 = vmatpush1.msra.mxu0 0.0
        %2330 = vmatprep.subr.mxu0 0.0
        %2331 = vmatpush1.msra.mxu0 0.0
        %2332 = vmatprep.subr.mxu0 0.0
        %2333 = vmatpush1.msra.mxu0 0.0
        %2334 = vmatprep.subr.mxu0 0.0
        %2335 = vmatpush1.msra.mxu0 0.0
        %2336 = vmatprep.subr.mxu0 0.0
        %2337 = vmatpush1.msra.mxu0 0.0
        %2338 = vmatprep.subr.mxu0 0.0
        %2339 = vmatpush1.msra.mxu0 0.0
        %2340 = vmatprep.subr.mxu0 0.0
        %2341 = vmatpush1.msra.mxu0 0.0
        %2342 = vmatprep.subr.mxu0 0.0
        %2343 = vmatpush1.msra.mxu0 0.0
        %2344 = vmatprep.subr.mxu0 0.0
        %2345 = vmatpush1.msra.mxu0 0.0
        %2346 = vmatprep.subr.mxu0 0.0
        %2347 = vmatpush1.msra.mxu0 0.0
        %2348 = vmatprep.subr.mxu0 0.0
        %2349 = vmatpush1.msra.mxu0 0.0
        %2350 = vmatprep.subr.mxu0 0.0
        %2351 = vmatpush1.msra.mxu0 0.0
        %2352 = vmatprep.subr.mxu0 0.0
        %2353 = vmatpush1.msra.mxu0 0.0
        %2354 = vmatprep.subr.mxu0 0.0
        %2355 = vmatpush1.msra.mxu0 0.0
        %2356 = vmatprep.subr.mxu0 0.0
        %2357 = vmatpush1.msra.mxu0 0.0
        %2358 = vmatprep.subr.mxu0 0.0
        %2359 = vmatpush1.msra.mxu0 0.0
        %2360 = vmatprep.mubr.f32.mxu0 0.0
        %2361 = vmatmul.mubr.f32.gmra.mrb[0].mxu0 %v2249
        %v2362 = vpop.f32.mrb[0].mxu0
        %v2363 = vadd.f32 0.0, %v2362
        %v2364 = vpop.f32.mrb[0].mxu0
        %2365 = vmatprep.mubr.f32.mxu0 0.0
        %2366 = vmatmul.mubr.f32.gmra.mrb[0].mxu0 %v2252
        %v2367 = vpop.f32.mrb[0].mxu0
        %v2368 = vadd.f32 0.0, %v2367
        %v2369 = vpop.f32.mrb[0].mxu0
        %2370 = vmatprep.mubr.f32.mxu0 0.0
        %2371 = vmatmul.mubr.f32.gmra.mrb[0].mxu0 %v2255
        %v2372 = vpop.f32.mrb[0].mxu0
        %v2373 = vadd.f32 0.0, %v2372
        %v2374 = vpop.f32.mrb[0].mxu0
        %2375 = vmatprep.mubr.f32.mxu0 0.0
        %2376 = vmatmul.mubr.f32.gmra.mrb[0].mxu0 %v2258
        %v2377 = vpop.f32.mrb[0].mxu0
        %v2378 = vadd.f32 0.0, %v2377
        %v2379 = vpop.f32.mrb[0].mxu0
        %2380 = vmatprep.mubr.f32.mxu0 0.0
        %2381 = vmatmul.mubr.f32.gmra.mrb[0].mxu0 %v2261
        %v2382 = vpop.f32.mrb[0].mxu0
        %v2383 = vadd.f32 0.0, %v2382
        %v2384 = vpop.f32.mrb[0].mxu0
        %2385 = vmatprep.mubr.f32.mxu0 0.0
        %2386 = vmatmul.mubr.f32.gmra.mrb[0].mxu0 %v2264
        %v2387 = vpop.f32.mrb[0].mxu0
        %v2388 = vadd.f32 0.0, %v2387
        %v2389 = vpop.f32.mrb[0].mxu0
        %2390 = vmatprep.mubr.f32.mxu0 0.0
        %2391 = vmatmul.mubr.f32.gmra.mrb[0].mxu0 %v2267
        %v2392 = vpop.f32.mrb[0].mxu0
        %v2393 = vadd.f32 0.0, %v2392
        %v2394 = vpop.f32.mrb[0].mxu0
        %2395 = vmatprep.mubr.f32.mxu0 0.0
        %2396 = vmatmul.mubr.f32.gmra.mrb[0].mxu0 %v2270
        %v2397 = vpop.f32.mrb[0].mxu0
        %v2398 = vadd.f32 0.0, %v2397
        %v2399 = vpop.f32.mrb[0].mxu0
        %2400 = vmatprep.mubr.f32.mxu0 0.0
        %2401 = vmatmul.mubr.f32.gmra.mrb[0].mxu0 %v2273
        %v2402 = vpop.f32.mrb[0].mxu0
        %v2403 = vadd.f32 0.0, %v2402
        %v2404 = vpop.f32.mrb[0].mxu0
        %2405 = vmatprep.mubr.f32.mxu0 0.0
        %2406 = vmatmul.mubr.f32.gmra.mrb[0].mxu0 %v2276
        %v2407 = vpop.f32.mrb[0].mxu0
        %v2408 = vadd.f32 0.0, %v2407
        %v2409 = vpop.f32.mrb[0].mxu0
        %2410 = vmatprep.mubr.f32.mxu0 0.0
        %2411 = vmatmul.mubr.f32.gmra.mrb[0].mxu0 %v2279
        %v2412 = vpop.f32.mrb[0].mxu0
        %v2413 = vadd.f32 0.0, %v2412
        %v2414 = vpop.f32.mrb[0].mxu0
        %2415 = vmatprep.mubr.f32.mxu0 0.0
        %2416 = vmatmul.mubr.f32.gmra.mrb[0].mxu0 %v2282
        %v2417 = vpop.f32.mrb[0].mxu0
        %v2418 = vadd.f32 0.0, %v2417
        %v2419 = vpop.f32.mrb[0].mxu0
        %2420 = vmatprep.mubr.f32.mxu0 0.0
        %2421 = vmatmul.mubr.f32.gmra.mrb[0].mxu0 %v2285
        %v2422 = vpop.f32.mrb[0].mxu0
        %v2423 = vadd.f32 0.0, %v2422
        %v2424 = vpop.f32.mrb[0].mxu0
        %2425 = vmatprep.mubr.f32.mxu0 0.0
        %2426 = vmatmul.mubr.f32.gmra.mrb[0].mxu0 %v2288
        %v2427 = vpop.f32.mrb[0].mxu0
        %v2428 = vadd.f32 0.0, %v2427
        %v2429 = vpop.f32.mrb[0].mxu0
        %2430 = vmatprep.mubr.f32.mxu0 0.0
        %2431 = vmatmul.mubr.f32.gmra.mrb[0].mxu0 %v2291
        %v2432 = vpop.f32.mrb[0].mxu0
        %v2433 = vadd.f32 0.0, %v2432
        %v2434 = vpop.f32.mrb[0].mxu0
        %2435 = vmatprep.mubr.f32.mxu0 0.0
        %2436 = vmatmul.mubr.f32.gmra.mrb[0].mxu0 %v2294
        %v2437 = vpop.f32.mrb[0].mxu0
        %v2438 = vadd.f32 0.0, %v2437
        %v2439 = vpop.f32.mrb[0].mxu0
        %2440 = vdwg.mxu0
        %v2441 = vadd.f32 %v2136, %v2363
        %v2442 = vadd.f32 %v2141, %v2368
        %v2443 = vadd.f32 %v2146, %v2373
        %v2444 = vadd.f32 %v2151, %v2378
        %v2445 = vadd.f32 %v2156, %v2383
        %v2446 = vadd.f32 %v2161, %v2388
        %v2447 = vadd.f32 %v2166, %v2393
        %v2448 = vadd.f32 %v2171, %v2398
        %v2449 = vadd.f32 %v2176, %v2403
        %v2450 = vadd.f32 %v2181, %v2408
        %v2451 = vadd.f32 %v2186, %v2413
        %v2452 = vadd.f32 %v2191, %v2418
        %v2453 = vadd.f32 %v2196, %v2423
        %v2454 = vadd.f32 %v2201, %v2428
        %v2455 = vadd.f32 %v2206, %v2433
        %v2456 = vadd.f32 %v2211, %v2438
        %v2457 = vld [vmem:[%s4] sm:$0x1]
        %v2459 = vlaneseq
        %v2460 = vshrl.u32 %v2459, 7
        %v2461 = vsub.s32 0, %v2460
        %v2462 = vrot.slane %v2457, %v2461
        %v2464 = vadd.f32 %v2441, %v2462
        %v2465 = vadd.f32 %v2442, %v2462
        %v2466 = vadd.f32 %v2443, %v2462
        %v2467 = vadd.f32 %v2444, %v2462
        %v2468 = vadd.f32 %v2445, %v2462
        %v2469 = vadd.f32 %v2446, %v2462
        %v2470 = vadd.f32 %v2447, %v2462
        %v2471 = vadd.f32 %v2448, %v2462
        %v2472 = vadd.f32 %v2449, %v2462
        %v2473 = vadd.f32 %v2450, %v2462
        %v2474 = vadd.f32 %v2451, %v2462
        %v2475 = vadd.f32 %v2452, %v2462
        %v2476 = vadd.f32 %v2453, %v2462
        %v2477 = vadd.f32 %v2454, %v2462
        %v2478 = vadd.f32 %v2455, %v2462
        %v2479 = vadd.f32 %v2456, %v2462
        %v2480 = vmax.f32 %v2464, 0.0
        %v2481 = vmax.f32 %v2465, 0.0
        %v2482 = vmax.f32 %v2466, 0.0
        %v2483 = vmax.f32 %v2467, 0.0
        %v2484 = vmax.f32 %v2468, 0.0
        %v2485 = vmax.f32 %v2469, 0.0
        %v2486 = vmax.f32 %v2470, 0.0
        %v2487 = vmax.f32 %v2471, 0.0
        %v2488 = vmax.f32 %v2472, 0.0
        %v2489 = vmax.f32 %v2473, 0.0
        %v2490 = vmax.f32 %v2474, 0.0
        %v2491 = vmax.f32 %v2475, 0.0
        %v2492 = vmax.f32 %v2476, 0.0
        %v2493 = vmax.f32 %v2477, 0.0
        %v2494 = vmax.f32 %v2478, 0.0
        %v2495 = vmax.f32 %v2479, 0.0
        %2496 = vst.msk [vmem:[#allocation3 + $0x8] sm:$0xff] %vm448, %v2480
        %2497 = vst.msk [vmem:[#allocation3 + $0x10] sm:$0xff] %vm448, %v2481
        %2498 = vst.msk [vmem:[#allocation3 + $0x18] sm:$0xff] %vm448, %v2482
        %2499 = vst.msk [vmem:[#allocation3 + $0x20] sm:$0xff] %vm448, %v2483
        %2500 = vst.msk [vmem:[#allocation3 + $0x28] sm:$0xff] %vm448, %v2484
        %2501 = vst.msk [vmem:[#allocation3 + $0x30] sm:$0xff] %vm448, %v2485
        %2502 = vst.msk [vmem:[#allocation3 + $0x38] sm:$0xff] %vm448, %v2486
        %2503 = vst.msk [vmem:[#allocation3 + $0x40] sm:$0xff] %vm448, %v2487
        %2504 = vst.msk [vmem:[#allocation3 + $0x50] sm:$0xff] %vm448, %v2488
        %2505 = vst.msk [vmem:[#allocation3 + $0x58] sm:$0xff] %vm448, %v2489
        %2506 = vst.msk [vmem:[#allocation3 + $0x60] sm:$0xff] %vm448, %v2490
        %2507 = vst.msk [vmem:[#allocation3 + $0x68] sm:$0xff] %vm448, %v2491
        %2508 = vst.msk [vmem:[#allocation3 + $0x70] sm:$0xff] %vm448, %v2492
        %2509 = vst.msk [vmem:[#allocation3 + $0x78] sm:$0xff] %vm448, %v2493
        %2510 = vst.msk [vmem:[#allocation3 + $0x80] sm:$0xff] %vm448, %v2494
        %2511 = vst.msk [vmem:[#allocation3 + $0x88] sm:$0xff] %vm448, %v2495
        %s2512 = scalar_lea.vmem [#allocation3], 7
        %v2513 = vld [vmem:[%s2512] ss:$2 sm:$0xff]
        %s2514 = scalar_lea.vmem [#allocation3], 23
        %v2515 = vld [vmem:[%s2514] ss:$2 sm:$0xff]
        %s2516 = scalar_lea.vmem [#allocation3], 39
        %v2517 = vld [vmem:[%s2516] ss:$2 sm:$0xff]
        %s2518 = scalar_lea.vmem [#allocation3], 55
        %v2519 = vld [vmem:[%s2518] ss:$2 sm:$0xff]
        %s2520 = scalar_lea.vmem [#allocation3], 79
        %v2521 = vld [vmem:[%s2520] ss:$2 sm:$0xff]
        %s2522 = scalar_lea.vmem [#allocation3], 95
        %v2523 = vld [vmem:[%s2522] ss:$2 sm:$0xff]
        %s2524 = scalar_lea.vmem [#allocation3], 111
        %v2525 = vld [vmem:[%s2524] ss:$2 sm:$0xff]
        %s2526 = scalar_lea.vmem [#allocation3], 127
        %v2527 = vld [vmem:[%s2526] ss:$2 sm:$0xff]
        %v2528 = vld [vmem:[%s5] sm:$0xff]
        %v2529 = vld [vmem:[%s5 + $0x8] sm:$0xff]
        %v2530 = vld [vmem:[%s5 + $0x10] sm:$0xff]
        %v2531 = vld [vmem:[%s5 + $0x18] sm:$0xff]
        %s2532 = scalar_lea.vmem [#allocation3], 8
        %v2533 = vld [vmem:[%s2532] ss:$2 sm:$0xff]
        %s2534 = scalar_lea.vmem [#allocation3], 24
        %v2535 = vld [vmem:[%s2534] ss:$2 sm:$0xff]
        %s2536 = scalar_lea.vmem [#allocation3], 40
        %v2537 = vld [vmem:[%s2536] ss:$2 sm:$0xff]
        %s2538 = scalar_lea.vmem [#allocation3], 56
        %v2539 = vld [vmem:[%s2538] ss:$2 sm:$0xff]
        %s2540 = scalar_lea.vmem [#allocation3], 80
        %v2541 = vld [vmem:[%s2540] ss:$2 sm:$0xff]
        %s2542 = scalar_lea.vmem [#allocation3], 96
        %v2543 = vld [vmem:[%s2542] ss:$2 sm:$0xff]
        %s2544 = scalar_lea.vmem [#allocation3], 112
        %v2545 = vld [vmem:[%s2544] ss:$2 sm:$0xff]
        %s2546 = scalar_lea.vmem [#allocation3], 128
        %v2547 = vld [vmem:[%s2546] ss:$2 sm:$0xff]
        %v2548 = vld [vmem:[%s5 + $0x20] sm:$0xff]
        %v2549 = vld [vmem:[%s5 + $0x28] sm:$0xff]
        %v2550 = vld [vmem:[%s5 + $0x30] sm:$0xff]
        %v2551 = vld [vmem:[%s5 + $0x38] sm:$0xff]
        %v2553 = vsel %vm448, %v2533, 0
        %v2556 = vsel %vm448, %v2535, 0
        %v2559 = vsel %vm448, %v2537, 0
        %v2562 = vsel %vm448, %v2539, 0
        %v2565 = vsel %vm448, %v2541, 0
        %v2568 = vsel %vm448, %v2543, 0
        %v2571 = vsel %vm448, %v2545, 0
        %v2574 = vsel %vm448, %v2547, 0
        %2576 = vmatprep.subr.mxu0 0.0
        %2577 = vmatpush1.msra.mxu0 %v2548
        %2578 = vmatprep.subr.mxu0 0.0
        %2579 = vmatpush1.msra.mxu0 %v2549
        %2580 = vmatprep.subr.mxu0 0.0
        %2581 = vmatpush1.msra.mxu0 %v2550
        %2582 = vmatprep.subr.mxu0 0.0
        %2583 = vmatpush1.msra.mxu0 %v2551
        %2584 = vmatprep.subr.mxu0 0.0
        %2585 = vmatpush1.msra.mxu0 0.0
        %2586 = vmatprep.subr.mxu0 0.0
        %2587 = vmatpush1.msra.mxu0 0.0
        %2588 = vmatprep.subr.mxu0 0.0
        %2589 = vmatpush1.msra.mxu0 0.0
        %2590 = vmatprep.subr.mxu0 0.0
        %2591 = vmatpush1.msra.mxu0 0.0
        %2592 = vmatprep.subr.mxu0 0.0
        %2593 = vmatpush1.msra.mxu0 0.0
        %2594 = vmatprep.subr.mxu0 0.0
        %2595 = vmatpush1.msra.mxu0 0.0
        %2596 = vmatprep.subr.mxu0 0.0
        %2597 = vmatpush1.msra.mxu0 0.0
        %2598 = vmatprep.subr.mxu0 0.0
        %2599 = vmatpush1.msra.mxu0 0.0
        %2600 = vmatprep.subr.mxu0 0.0
        %2601 = vmatpush1.msra.mxu0 0.0
        %2602 = vmatprep.subr.mxu0 0.0
        %2603 = vmatpush1.msra.mxu0 0.0
        %2604 = vmatprep.subr.mxu0 0.0
        %2605 = vmatpush1.msra.mxu0 0.0
        %2606 = vmatprep.subr.mxu0 0.0
        %2607 = vmatpush1.msra.mxu0 0.0
        %2608 = vmatprep.subr.mxu0 0.0
        %2609 = vmatpush1.msra.mxu0 0.0
        %2610 = vmatprep.subr.mxu0 0.0
        %2611 = vmatpush1.msra.mxu0 0.0
        %2612 = vmatprep.subr.mxu0 0.0
        %2613 = vmatpush1.msra.mxu0 0.0
        %2614 = vmatprep.subr.mxu0 0.0
        %2615 = vmatpush1.msra.mxu0 0.0
        %2616 = vmatprep.subr.mxu0 0.0
        %2617 = vmatpush1.msra.mxu0 0.0
        %2618 = vmatprep.subr.mxu0 0.0
        %2619 = vmatpush1.msra.mxu0 0.0
        %2620 = vmatprep.subr.mxu0 0.0
        %2621 = vmatpush1.msra.mxu0 0.0
        %2622 = vmatprep.subr.mxu0 0.0
        %2623 = vmatpush1.msra.mxu0 0.0
        %2624 = vmatprep.subr.mxu0 0.0
        %2625 = vmatpush1.msra.mxu0 0.0
        %2626 = vmatprep.subr.mxu0 0.0
        %2627 = vmatpush1.msra.mxu0 0.0
        %2628 = vmatprep.subr.mxu0 0.0
        %2629 = vmatpush1.msra.mxu0 0.0
        %2630 = vmatprep.subr.mxu0 0.0
        %2631 = vmatpush1.msra.mxu0 0.0
        %2632 = vmatprep.subr.mxu0 0.0
        %2633 = vmatpush1.msra.mxu0 0.0
        %2634 = vmatprep.subr.mxu0 0.0
        %2635 = vmatpush1.msra.mxu0 0.0
        %2636 = vmatprep.subr.mxu0 0.0
        %2637 = vmatpush1.msra.mxu0 0.0
        %2638 = vmatprep.subr.mxu0 0.0
        %2639 = vmatpush1.msra.mxu0 0.0
        %2640 = vmatprep.mubr.f32.mxu0 0.0
        %2641 = vmatmul.mubr.f32.gmra.mrb[0].mxu0 %v2553
        %v2642 = vpop.f32.mrb[0].mxu0
        %v2643 = vadd.f32 0.0, %v2642
        %v2644 = vpop.f32.mrb[0].mxu0
        %2645 = vmatprep.mubr.f32.mxu0 0.0
        %2646 = vmatmul.mubr.f32.gmra.mrb[0].mxu0 %v2556
        %v2647 = vpop.f32.mrb[0].mxu0
        %v2648 = vadd.f32 0.0, %v2647
        %v2649 = vpop.f32.mrb[0].mxu0
        %2650 = vmatprep.mubr.f32.mxu0 0.0
        %2651 = vmatmul.mubr.f32.gmra.mrb[0].mxu0 %v2559
        %v2652 = vpop.f32.mrb[0].mxu0
        %v2653 = vadd.f32 0.0, %v2652
        %v2654 = vpop.f32.mrb[0].mxu0
        %2655 = vmatprep.mubr.f32.mxu0 0.0
        %2656 = vmatmul.mubr.f32.gmra.mrb[0].mxu0 %v2562
        %v2657 = vpop.f32.mrb[0].mxu0
        %v2658 = vadd.f32 0.0, %v2657
        %v2659 = vpop.f32.mrb[0].mxu0
        %2660 = vmatprep.mubr.f32.mxu0 0.0
        %2661 = vmatmul.mubr.f32.gmra.mrb[0].mxu0 %v2565
        %v2662 = vpop.f32.mrb[0].mxu0
        %v2663 = vadd.f32 0.0, %v2662
        %v2664 = vpop.f32.mrb[0].mxu0
        %2665 = vmatprep.mubr.f32.mxu0 0.0
        %2666 = vmatmul.mubr.f32.gmra.mrb[0].mxu0 %v2568
        %v2667 = vpop.f32.mrb[0].mxu0
        %v2668 = vadd.f32 0.0, %v2667
        %v2669 = vpop.f32.mrb[0].mxu0
        %2670 = vmatprep.mubr.f32.mxu0 0.0
        %2671 = vmatmul.mubr.f32.gmra.mrb[0].mxu0 %v2571
        %v2672 = vpop.f32.mrb[0].mxu0
        %v2673 = vadd.f32 0.0, %v2672
        %v2674 = vpop.f32.mrb[0].mxu0
        %2675 = vmatprep.mubr.f32.mxu0 0.0
        %2676 = vmatmul.mubr.f32.gmra.mrb[0].mxu0 %v2574
        %v2677 = vpop.f32.mrb[0].mxu0
        %v2678 = vadd.f32 0.0, %v2677
        %v2679 = vpop.f32.mrb[0].mxu0
        %2680 = vdwg.mxu0
        %v2682 = vsel %vm448, %v2513, 0
        %v2685 = vsel %vm448, %v2515, 0
        %v2688 = vsel %vm448, %v2517, 0
        %v2691 = vsel %vm448, %v2519, 0
        %v2694 = vsel %vm448, %v2521, 0
        %v2697 = vsel %vm448, %v2523, 0
        %v2700 = vsel %vm448, %v2525, 0
        %v2703 = vsel %vm448, %v2527, 0
        %2705 = vmatprep.subr.mxu0 0.0
        %2706 = vmatpush1.msra.mxu0 %v2528
        %2707 = vmatprep.subr.mxu0 0.0
        %2708 = vmatpush1.msra.mxu0 %v2529
        %2709 = vmatprep.subr.mxu0 0.0
        %2710 = vmatpush1.msra.mxu0 %v2530
        %2711 = vmatprep.subr.mxu0 0.0
        %2712 = vmatpush1.msra.mxu0 %v2531
        %2713 = vmatprep.subr.mxu0 0.0
        %2714 = vmatpush1.msra.mxu0 0.0
        %2715 = vmatprep.subr.mxu0 0.0
        %2716 = vmatpush1.msra.mxu0 0.0
        %2717 = vmatprep.subr.mxu0 0.0
        %2718 = vmatpush1.msra.mxu0 0.0
        %2719 = vmatprep.subr.mxu0 0.0
        %2720 = vmatpush1.msra.mxu0 0.0
        %2721 = vmatprep.subr.mxu0 0.0
        %2722 = vmatpush1.msra.mxu0 0.0
        %2723 = vmatprep.subr.mxu0 0.0
        %2724 = vmatpush1.msra.mxu0 0.0
        %2725 = vmatprep.subr.mxu0 0.0
        %2726 = vmatpush1.msra.mxu0 0.0
        %2727 = vmatprep.subr.mxu0 0.0
        %2728 = vmatpush1.msra.mxu0 0.0
        %2729 = vmatprep.subr.mxu0 0.0
        %2730 = vmatpush1.msra.mxu0 0.0
        %2731 = vmatprep.subr.mxu0 0.0
        %2732 = vmatpush1.msra.mxu0 0.0
        %2733 = vmatprep.subr.mxu0 0.0
        %2734 = vmatpush1.msra.mxu0 0.0
        %2735 = vmatprep.subr.mxu0 0.0
        %2736 = vmatpush1.msra.mxu0 0.0
        %2737 = vmatprep.subr.mxu0 0.0
        %2738 = vmatpush1.msra.mxu0 0.0
        %2739 = vmatprep.subr.mxu0 0.0
        %2740 = vmatpush1.msra.mxu0 0.0
        %2741 = vmatprep.subr.mxu0 0.0
        %2742 = vmatpush1.msra.mxu0 0.0
        %2743 = vmatprep.subr.mxu0 0.0
        %2744 = vmatpush1.msra.mxu0 0.0
        %2745 = vmatprep.subr.mxu0 0.0
        %2746 = vmatpush1.msra.mxu0 0.0
        %2747 = vmatprep.subr.mxu0 0.0
        %2748 = vmatpush1.msra.mxu0 0.0
        %2749 = vmatprep.subr.mxu0 0.0
        %2750 = vmatpush1.msra.mxu0 0.0
        %2751 = vmatprep.subr.mxu0 0.0
        %2752 = vmatpush1.msra.mxu0 0.0
        %2753 = vmatprep.subr.mxu0 0.0
        %2754 = vmatpush1.msra.mxu0 0.0
        %2755 = vmatprep.subr.mxu0 0.0
        %2756 = vmatpush1.msra.mxu0 0.0
        %2757 = vmatprep.subr.mxu0 0.0
        %2758 = vmatpush1.msra.mxu0 0.0
        %2759 = vmatprep.subr.mxu0 0.0
        %2760 = vmatpush1.msra.mxu0 0.0
        %2761 = vmatprep.subr.mxu0 0.0
        %2762 = vmatpush1.msra.mxu0 0.0
        %2763 = vmatprep.subr.mxu0 0.0
        %2764 = vmatpush1.msra.mxu0 0.0
        %2765 = vmatprep.subr.mxu0 0.0
        %2766 = vmatpush1.msra.mxu0 0.0
        %2767 = vmatprep.subr.mxu0 0.0
        %2768 = vmatpush1.msra.mxu0 0.0
        %2769 = vmatprep.mubr.f32.mxu0 0.0
        %2770 = vmatmul.mubr.f32.gmra.mrb[0].mxu0 %v2682
        %v2771 = vpop.f32.mrb[0].mxu0
        %v2772 = vadd.f32 %v2643, %v2771
        %v2773 = vpop.f32.mrb[0].mxu0
        %2774 = vmatprep.mubr.f32.mxu0 0.0
        %2775 = vmatmul.mubr.f32.gmra.mrb[0].mxu0 %v2685
        %v2776 = vpop.f32.mrb[0].mxu0
        %v2777 = vadd.f32 %v2648, %v2776
        %v2778 = vpop.f32.mrb[0].mxu0
        %2779 = vmatprep.mubr.f32.mxu0 0.0
        %2780 = vmatmul.mubr.f32.gmra.mrb[0].mxu0 %v2688
        %v2781 = vpop.f32.mrb[0].mxu0
        %v2782 = vadd.f32 %v2653, %v2781
        %v2783 = vpop.f32.mrb[0].mxu0
        %2784 = vmatprep.mubr.f32.mxu0 0.0
        %2785 = vmatmul.mubr.f32.gmra.mrb[0].mxu0 %v2691
        %v2786 = vpop.f32.mrb[0].mxu0
        %v2787 = vadd.f32 %v2658, %v2786
        %v2788 = vpop.f32.mrb[0].mxu0
        %2789 = vmatprep.mubr.f32.mxu0 0.0
        %2790 = vmatmul.mubr.f32.gmra.mrb[0].mxu0 %v2694
        %v2791 = vpop.f32.mrb[0].mxu0
        %v2792 = vadd.f32 %v2663, %v2791
        %v2793 = vpop.f32.mrb[0].mxu0
        %2794 = vmatprep.mubr.f32.mxu0 0.0
        %2795 = vmatmul.mubr.f32.gmra.mrb[0].mxu0 %v2697
        %v2796 = vpop.f32.mrb[0].mxu0
        %v2797 = vadd.f32 %v2668, %v2796
        %v2798 = vpop.f32.mrb[0].mxu0
        %2799 = vmatprep.mubr.f32.mxu0 0.0
        %2800 = vmatmul.mubr.f32.gmra.mrb[0].mxu0 %v2700
        %v2801 = vpop.f32.mrb[0].mxu0
        %v2802 = vadd.f32 %v2673, %v2801
        %v2803 = vpop.f32.mrb[0].mxu0
        %2804 = vmatprep.mubr.f32.mxu0 0.0
        %2805 = vmatmul.mubr.f32.gmra.mrb[0].mxu0 %v2703
        %v2806 = vpop.f32.mrb[0].mxu0
        %v2807 = vadd.f32 %v2678, %v2806
        %v2808 = vpop.f32.mrb[0].mxu0
        %2809 = vdwg.mxu0
        %s2810 = scalar_lea.vmem [#allocation3], 9
        %v2811 = vld [vmem:[%s2810] ss:$2 sm:$0xff]
        %s2812 = scalar_lea.vmem [#allocation3], 25
        %v2813 = vld [vmem:[%s2812] ss:$2 sm:$0xff]
        %s2814 = scalar_lea.vmem [#allocation3], 41
        %v2815 = vld [vmem:[%s2814] ss:$2 sm:$0xff]
        %s2816 = scalar_lea.vmem [#allocation3], 57
        %v2817 = vld [vmem:[%s2816] ss:$2 sm:$0xff]
        %s2818 = scalar_lea.vmem [#allocation3], 81
        %v2819 = vld [vmem:[%s2818] ss:$2 sm:$0xff]
        %s2820 = scalar_lea.vmem [#allocation3], 97
        %v2821 = vld [vmem:[%s2820] ss:$2 sm:$0xff]
        %s2822 = scalar_lea.vmem [#allocation3], 113
        %v2823 = vld [vmem:[%s2822] ss:$2 sm:$0xff]
        %s2824 = scalar_lea.vmem [#allocation3], 129
        %v2825 = vld [vmem:[%s2824] ss:$2 sm:$0xff]
        %v2826 = vld [vmem:[%s5 + $0x40] sm:$0xff]
        %v2827 = vld [vmem:[%s5 + $0x48] sm:$0xff]
        %v2828 = vld [vmem:[%s5 + $0x50] sm:$0xff]
        %v2829 = vld [vmem:[%s5 + $0x58] sm:$0xff]
        %v2831 = vsel %vm448, %v2811, 0
        %v2834 = vsel %vm448, %v2813, 0
        %v2837 = vsel %vm448, %v2815, 0
        %v2840 = vsel %vm448, %v2817, 0
        %v2843 = vsel %vm448, %v2819, 0
        %v2846 = vsel %vm448, %v2821, 0
        %v2849 = vsel %vm448, %v2823, 0
        %v2852 = vsel %vm448, %v2825, 0
        %2854 = vmatprep.subr.mxu0 0.0
        %2855 = vmatpush1.msra.mxu0 %v2826
        %2856 = vmatprep.subr.mxu0 0.0
        %2857 = vmatpush1.msra.mxu0 %v2827
        %2858 = vmatprep.subr.mxu0 0.0
        %2859 = vmatpush1.msra.mxu0 %v2828
        %2860 = vmatprep.subr.mxu0 0.0
        %2861 = vmatpush1.msra.mxu0 %v2829
        %2862 = vmatprep.subr.mxu0 0.0
        %2863 = vmatpush1.msra.mxu0 0.0
        %2864 = vmatprep.subr.mxu0 0.0
        %2865 = vmatpush1.msra.mxu0 0.0
        %2866 = vmatprep.subr.mxu0 0.0
        %2867 = vmatpush1.msra.mxu0 0.0
        %2868 = vmatprep.subr.mxu0 0.0
        %2869 = vmatpush1.msra.mxu0 0.0
        %2870 = vmatprep.subr.mxu0 0.0
        %2871 = vmatpush1.msra.mxu0 0.0
        %2872 = vmatprep.subr.mxu0 0.0
        %2873 = vmatpush1.msra.mxu0 0.0
        %2874 = vmatprep.subr.mxu0 0.0
        %2875 = vmatpush1.msra.mxu0 0.0
        %2876 = vmatprep.subr.mxu0 0.0
        %2877 = vmatpush1.msra.mxu0 0.0
        %2878 = vmatprep.subr.mxu0 0.0
        %2879 = vmatpush1.msra.mxu0 0.0
        %2880 = vmatprep.subr.mxu0 0.0
        %2881 = vmatpush1.msra.mxu0 0.0
        %2882 = vmatprep.subr.mxu0 0.0
        %2883 = vmatpush1.msra.mxu0 0.0
        %2884 = vmatprep.subr.mxu0 0.0
        %2885 = vmatpush1.msra.mxu0 0.0
        %2886 = vmatprep.subr.mxu0 0.0
        %2887 = vmatpush1.msra.mxu0 0.0
        %2888 = vmatprep.subr.mxu0 0.0
        %2889 = vmatpush1.msra.mxu0 0.0
        %2890 = vmatprep.subr.mxu0 0.0
        %2891 = vmatpush1.msra.mxu0 0.0
        %2892 = vmatprep.subr.mxu0 0.0
        %2893 = vmatpush1.msra.mxu0 0.0
        %2894 = vmatprep.subr.mxu0 0.0
        %2895 = vmatpush1.msra.mxu0 0.0
        %2896 = vmatprep.subr.mxu0 0.0
        %2897 = vmatpush1.msra.mxu0 0.0
        %2898 = vmatprep.subr.mxu0 0.0
        %2899 = vmatpush1.msra.mxu0 0.0
        %2900 = vmatprep.subr.mxu0 0.0
        %2901 = vmatpush1.msra.mxu0 0.0
        %2902 = vmatprep.subr.mxu0 0.0
        %2903 = vmatpush1.msra.mxu0 0.0
        %2904 = vmatprep.subr.mxu0 0.0
        %2905 = vmatpush1.msra.mxu0 0.0
        %2906 = vmatprep.subr.mxu0 0.0
        %2907 = vmatpush1.msra.mxu0 0.0
        %2908 = vmatprep.subr.mxu0 0.0
        %2909 = vmatpush1.msra.mxu0 0.0
        %2910 = vmatprep.subr.mxu0 0.0
        %2911 = vmatpush1.msra.mxu0 0.0
        %2912 = vmatprep.subr.mxu0 0.0
        %2913 = vmatpush1.msra.mxu0 0.0
        %2914 = vmatprep.subr.mxu0 0.0
        %2915 = vmatpush1.msra.mxu0 0.0
        %2916 = vmatprep.subr.mxu0 0.0
        %2917 = vmatpush1.msra.mxu0 0.0
        %2918 = vmatprep.mubr.f32.mxu0 0.0
        %2919 = vmatmul.mubr.f32.gmra.mrb[0].mxu0 %v2831
        %v2920 = vpop.f32.mrb[0].mxu0
        %v2921 = vadd.f32 0.0, %v2920
        %v2922 = vpop.f32.mrb[0].mxu0
        %2923 = vmatprep.mubr.f32.mxu0 0.0
        %2924 = vmatmul.mubr.f32.gmra.mrb[0].mxu0 %v2834
        %v2925 = vpop.f32.mrb[0].mxu0
        %v2926 = vadd.f32 0.0, %v2925
        %v2927 = vpop.f32.mrb[0].mxu0
        %2928 = vmatprep.mubr.f32.mxu0 0.0
        %2929 = vmatmul.mubr.f32.gmra.mrb[0].mxu0 %v2837
        %v2930 = vpop.f32.mrb[0].mxu0
        %v2931 = vadd.f32 0.0, %v2930
        %v2932 = vpop.f32.mrb[0].mxu0
        %2933 = vmatprep.mubr.f32.mxu0 0.0
        %2934 = vmatmul.mubr.f32.gmra.mrb[0].mxu0 %v2840
        %v2935 = vpop.f32.mrb[0].mxu0
        %v2936 = vadd.f32 0.0, %v2935
        %v2937 = vpop.f32.mrb[0].mxu0
        %2938 = vmatprep.mubr.f32.mxu0 0.0
        %2939 = vmatmul.mubr.f32.gmra.mrb[0].mxu0 %v2843
        %v2940 = vpop.f32.mrb[0].mxu0
        %v2941 = vadd.f32 0.0, %v2940
        %v2942 = vpop.f32.mrb[0].mxu0
        %2943 = vmatprep.mubr.f32.mxu0 0.0
        %2944 = vmatmul.mubr.f32.gmra.mrb[0].mxu0 %v2846
        %v2945 = vpop.f32.mrb[0].mxu0
        %v2946 = vadd.f32 0.0, %v2945
        %v2947 = vpop.f32.mrb[0].mxu0
        %2948 = vmatprep.mubr.f32.mxu0 0.0
        %2949 = vmatmul.mubr.f32.gmra.mrb[0].mxu0 %v2849
        %v2950 = vpop.f32.mrb[0].mxu0
        %v2951 = vadd.f32 0.0, %v2950
        %v2952 = vpop.f32.mrb[0].mxu0
        %2953 = vmatprep.mubr.f32.mxu0 0.0
        %2954 = vmatmul.mubr.f32.gmra.mrb[0].mxu0 %v2852
        %v2955 = vpop.f32.mrb[0].mxu0
        %v2956 = vadd.f32 0.0, %v2955
        %v2957 = vpop.f32.mrb[0].mxu0
        %2958 = vdwg.mxu0
        %v2959 = vadd.f32 %v2772, %v2921
        %v2960 = vadd.f32 %v2777, %v2926
        %v2961 = vadd.f32 %v2782, %v2931
        %v2962 = vadd.f32 %v2787, %v2936
        %v2963 = vadd.f32 %v2792, %v2941
        %v2964 = vadd.f32 %v2797, %v2946
        %v2965 = vadd.f32 %v2802, %v2951
        %v2966 = vadd.f32 %v2807, %v2956
        %v2967 = vld [vmem:[%s6] sm:$0x1]
        %v2969 = vlaneseq
        %v2970 = vshrl.u32 %v2969, 7
        %v2971 = vsub.s32 0, %v2970
        %v2972 = vrot.slane %v2967, %v2971
        %v2974 = vadd.f32 %v2959, %v2972
        %v2975 = vadd.f32 %v2960, %v2972
        %v2976 = vadd.f32 %v2961, %v2972
        %v2977 = vadd.f32 %v2962, %v2972
        %v2978 = vadd.f32 %v2963, %v2972
        %v2979 = vadd.f32 %v2964, %v2972
        %v2980 = vadd.f32 %v2965, %v2972
        %v2981 = vadd.f32 %v2966, %v2972
        %v2982 = vmax.f32 %v2974, 0.0
        %v2983 = vmax.f32 %v2975, 0.0
        %v2984 = vmax.f32 %v2976, 0.0
        %v2985 = vmax.f32 %v2977, 0.0
        %v2986 = vmax.f32 %v2978, 0.0
        %v2987 = vmax.f32 %v2979, 0.0
        %v2988 = vmax.f32 %v2980, 0.0
        %v2989 = vmax.f32 %v2981, 0.0
        %2990 = vst.msk [vmem:[#allocation4 + $0x8] sm:$0xff] %vm448, %v2982
        %2991 = vst.msk [vmem:[#allocation4 + $0x10] sm:$0xff] %vm448, %v2983
        %2992 = vst.msk [vmem:[#allocation4 + $0x18] sm:$0xff] %vm448, %v2984
        %2993 = vst.msk [vmem:[#allocation4 + $0x20] sm:$0xff] %vm448, %v2985
        %2994 = vst.msk [vmem:[#allocation4 + $0x30] sm:$0xff] %vm448, %v2986
        %2995 = vst.msk [vmem:[#allocation4 + $0x38] sm:$0xff] %vm448, %v2987
        %2996 = vst.msk [vmem:[#allocation4 + $0x40] sm:$0xff] %vm448, %v2988
        %2997 = vst.msk [vmem:[#allocation4 + $0x48] sm:$0xff] %vm448, %v2989
        %s2998 = scalar_lea.vmem [#allocation4], 7
        %v2999 = vld [vmem:[%s2998] ss:$2 sm:$0xff]
        %s3000 = scalar_lea.vmem [#allocation4], 23
        %v3001 = vld [vmem:[%s3000] ss:$2 sm:$0xff]
        %s3002 = scalar_lea.vmem [#allocation4], 47
        %v3003 = vld [vmem:[%s3002] ss:$2 sm:$0xff]
        %s3004 = scalar_lea.vmem [#allocation4], 63
        %v3005 = vld [vmem:[%s3004] ss:$2 sm:$0xff]
        %v3006 = vld [vmem:[%s7] sm:$0xff]
        %v3007 = vld [vmem:[%s7 + $0x8] sm:$0xff]
        %v3008 = vld [vmem:[%s7 + $0x10] sm:$0xff]
        %v3009 = vld [vmem:[%s7 + $0x18] sm:$0xff]
        %s3010 = scalar_lea.vmem [#allocation4], 8
        %v3011 = vld [vmem:[%s3010] ss:$2 sm:$0xff]
        %s3012 = scalar_lea.vmem [#allocation4], 24
        %v3013 = vld [vmem:[%s3012] ss:$2 sm:$0xff]
        %s3014 = scalar_lea.vmem [#allocation4], 48
        %v3015 = vld [vmem:[%s3014] ss:$2 sm:$0xff]
        %s3016 = scalar_lea.vmem [#allocation4], 64
        %v3017 = vld [vmem:[%s3016] ss:$2 sm:$0xff]
        %v3018 = vld [vmem:[%s7 + $0x20] sm:$0xff]
        %v3019 = vld [vmem:[%s7 + $0x28] sm:$0xff]
        %v3020 = vld [vmem:[%s7 + $0x30] sm:$0xff]
        %v3021 = vld [vmem:[%s7 + $0x38] sm:$0xff]
        %v3023 = vsel %vm448, %v3011, 0
        %v3026 = vsel %vm448, %v3013, 0
        %v3029 = vsel %vm448, %v3015, 0
        %v3032 = vsel %vm448, %v3017, 0
        %3034 = vmatprep.subr.mxu0 0.0
        %3035 = vmatpush1.msra.mxu0 %v3018
        %3036 = vmatprep.subr.mxu0 0.0
        %3037 = vmatpush1.msra.mxu0 %v3019
        %3038 = vmatprep.subr.mxu0 0.0
        %3039 = vmatpush1.msra.mxu0 %v3020
        %3040 = vmatprep.subr.mxu0 0.0
        %3041 = vmatpush1.msra.mxu0 %v3021
        %3042 = vmatprep.subr.mxu0 0.0
        %3043 = vmatpush1.msra.mxu0 0.0
        %3044 = vmatprep.subr.mxu0 0.0
        %3045 = vmatpush1.msra.mxu0 0.0
        %3046 = vmatprep.subr.mxu0 0.0
        %3047 = vmatpush1.msra.mxu0 0.0
        %3048 = vmatprep.subr.mxu0 0.0
        %3049 = vmatpush1.msra.mxu0 0.0
        %3050 = vmatprep.subr.mxu0 0.0
        %3051 = vmatpush1.msra.mxu0 0.0
        %3052 = vmatprep.subr.mxu0 0.0
        %3053 = vmatpush1.msra.mxu0 0.0
        %3054 = vmatprep.subr.mxu0 0.0
        %3055 = vmatpush1.msra.mxu0 0.0
        %3056 = vmatprep.subr.mxu0 0.0
        %3057 = vmatpush1.msra.mxu0 0.0
        %3058 = vmatprep.subr.mxu0 0.0
        %3059 = vmatpush1.msra.mxu0 0.0
        %3060 = vmatprep.subr.mxu0 0.0
        %3061 = vmatpush1.msra.mxu0 0.0
        %3062 = vmatprep.subr.mxu0 0.0
        %3063 = vmatpush1.msra.mxu0 0.0
        %3064 = vmatprep.subr.mxu0 0.0
        %3065 = vmatpush1.msra.mxu0 0.0
        %3066 = vmatprep.subr.mxu0 0.0
        %3067 = vmatpush1.msra.mxu0 0.0
        %3068 = vmatprep.subr.mxu0 0.0
        %3069 = vmatpush1.msra.mxu0 0.0
        %3070 = vmatprep.subr.mxu0 0.0
        %3071 = vmatpush1.msra.mxu0 0.0
        %3072 = vmatprep.subr.mxu0 0.0
        %3073 = vmatpush1.msra.mxu0 0.0
        %3074 = vmatprep.subr.mxu0 0.0
        %3075 = vmatpush1.msra.mxu0 0.0
        %3076 = vmatprep.subr.mxu0 0.0
        %3077 = vmatpush1.msra.mxu0 0.0
        %3078 = vmatprep.subr.mxu0 0.0
        %3079 = vmatpush1.msra.mxu0 0.0
        %3080 = vmatprep.subr.mxu0 0.0
        %3081 = vmatpush1.msra.mxu0 0.0
        %3082 = vmatprep.subr.mxu0 0.0
        %3083 = vmatpush1.msra.mxu0 0.0
        %3084 = vmatprep.subr.mxu0 0.0
        %3085 = vmatpush1.msra.mxu0 0.0
        %3086 = vmatprep.subr.mxu0 0.0
        %3087 = vmatpush1.msra.mxu0 0.0
        %3088 = vmatprep.subr.mxu0 0.0
        %3089 = vmatpush1.msra.mxu0 0.0
        %3090 = vmatprep.subr.mxu0 0.0
        %3091 = vmatpush1.msra.mxu0 0.0
        %3092 = vmatprep.subr.mxu0 0.0
        %3093 = vmatpush1.msra.mxu0 0.0
        %3094 = vmatprep.subr.mxu0 0.0
        %3095 = vmatpush1.msra.mxu0 0.0
        %3096 = vmatprep.subr.mxu0 0.0
        %3097 = vmatpush1.msra.mxu0 0.0
        %3098 = vmatprep.mubr.f32.mxu0 0.0
        %3099 = vmatmul.mubr.f32.gmra.mrb[0].mxu0 %v3023
        %v3100 = vpop.f32.mrb[0].mxu0
        %v3101 = vadd.f32 0.0, %v3100
        %v3102 = vpop.f32.mrb[0].mxu0
        %3103 = vmatprep.mubr.f32.mxu0 0.0
        %3104 = vmatmul.mubr.f32.gmra.mrb[0].mxu0 %v3026
        %v3105 = vpop.f32.mrb[0].mxu0
        %v3106 = vadd.f32 0.0, %v3105
        %v3107 = vpop.f32.mrb[0].mxu0
        %3108 = vmatprep.mubr.f32.mxu0 0.0
        %3109 = vmatmul.mubr.f32.gmra.mrb[0].mxu0 %v3029
        %v3110 = vpop.f32.mrb[0].mxu0
        %v3111 = vadd.f32 0.0, %v3110
        %v3112 = vpop.f32.mrb[0].mxu0
        %3113 = vmatprep.mubr.f32.mxu0 0.0
        %3114 = vmatmul.mubr.f32.gmra.mrb[0].mxu0 %v3032
        %v3115 = vpop.f32.mrb[0].mxu0
        %v3116 = vadd.f32 0.0, %v3115
        %v3117 = vpop.f32.mrb[0].mxu0
        %3118 = vdwg.mxu0
        %v3120 = vsel %vm448, %v2999, 0
        %v3123 = vsel %vm448, %v3001, 0
        %v3126 = vsel %vm448, %v3003, 0
        %v3129 = vsel %vm448, %v3005, 0
        %3131 = vmatprep.subr.mxu0 0.0
        %3132 = vmatpush1.msra.mxu0 %v3006
        %3133 = vmatprep.subr.mxu0 0.0
        %3134 = vmatpush1.msra.mxu0 %v3007
        %3135 = vmatprep.subr.mxu0 0.0
        %3136 = vmatpush1.msra.mxu0 %v3008
        %3137 = vmatprep.subr.mxu0 0.0
        %3138 = vmatpush1.msra.mxu0 %v3009
        %3139 = vmatprep.subr.mxu0 0.0
        %3140 = vmatpush1.msra.mxu0 0.0
        %3141 = vmatprep.subr.mxu0 0.0
        %3142 = vmatpush1.msra.mxu0 0.0
        %3143 = vmatprep.subr.mxu0 0.0
        %3144 = vmatpush1.msra.mxu0 0.0
        %3145 = vmatprep.subr.mxu0 0.0
        %3146 = vmatpush1.msra.mxu0 0.0
        %3147 = vmatprep.subr.mxu0 0.0
        %3148 = vmatpush1.msra.mxu0 0.0
        %3149 = vmatprep.subr.mxu0 0.0
        %3150 = vmatpush1.msra.mxu0 0.0
        %3151 = vmatprep.subr.mxu0 0.0
        %3152 = vmatpush1.msra.mxu0 0.0
        %3153 = vmatprep.subr.mxu0 0.0
        %3154 = vmatpush1.msra.mxu0 0.0
        %3155 = vmatprep.subr.mxu0 0.0
        %3156 = vmatpush1.msra.mxu0 0.0
        %3157 = vmatprep.subr.mxu0 0.0
        %3158 = vmatpush1.msra.mxu0 0.0
        %3159 = vmatprep.subr.mxu0 0.0
        %3160 = vmatpush1.msra.mxu0 0.0
        %3161 = vmatprep.subr.mxu0 0.0
        %3162 = vmatpush1.msra.mxu0 0.0
        %3163 = vmatprep.subr.mxu0 0.0
        %3164 = vmatpush1.msra.mxu0 0.0
        %3165 = vmatprep.subr.mxu0 0.0
        %3166 = vmatpush1.msra.mxu0 0.0
        %3167 = vmatprep.subr.mxu0 0.0
        %3168 = vmatpush1.msra.mxu0 0.0
        %3169 = vmatprep.subr.mxu0 0.0
        %3170 = vmatpush1.msra.mxu0 0.0
        %3171 = vmatprep.subr.mxu0 0.0
        %3172 = vmatpush1.msra.mxu0 0.0
        %3173 = vmatprep.subr.mxu0 0.0
        %3174 = vmatpush1.msra.mxu0 0.0
        %3175 = vmatprep.subr.mxu0 0.0
        %3176 = vmatpush1.msra.mxu0 0.0
        %3177 = vmatprep.subr.mxu0 0.0
        %3178 = vmatpush1.msra.mxu0 0.0
        %3179 = vmatprep.subr.mxu0 0.0
        %3180 = vmatpush1.msra.mxu0 0.0
        %3181 = vmatprep.subr.mxu0 0.0
        %3182 = vmatpush1.msra.mxu0 0.0
        %3183 = vmatprep.subr.mxu0 0.0
        %3184 = vmatpush1.msra.mxu0 0.0
        %3185 = vmatprep.subr.mxu0 0.0
        %3186 = vmatpush1.msra.mxu0 0.0
        %3187 = vmatprep.subr.mxu0 0.0
        %3188 = vmatpush1.msra.mxu0 0.0
        %3189 = vmatprep.subr.mxu0 0.0
        %3190 = vmatpush1.msra.mxu0 0.0
        %3191 = vmatprep.subr.mxu0 0.0
        %3192 = vmatpush1.msra.mxu0 0.0
        %3193 = vmatprep.subr.mxu0 0.0
        %3194 = vmatpush1.msra.mxu0 0.0
        %3195 = vmatprep.mubr.f32.mxu0 0.0
        %3196 = vmatmul.mubr.f32.gmra.mrb[0].mxu0 %v3120
        %v3197 = vpop.f32.mrb[0].mxu0
        %v3198 = vadd.f32 %v3101, %v3197
        %v3199 = vpop.f32.mrb[0].mxu0
        %3200 = vmatprep.mubr.f32.mxu0 0.0
        %3201 = vmatmul.mubr.f32.gmra.mrb[0].mxu0 %v3123
        %v3202 = vpop.f32.mrb[0].mxu0
        %v3203 = vadd.f32 %v3106, %v3202
        %v3204 = vpop.f32.mrb[0].mxu0
        %3205 = vmatprep.mubr.f32.mxu0 0.0
        %3206 = vmatmul.mubr.f32.gmra.mrb[0].mxu0 %v3126
        %v3207 = vpop.f32.mrb[0].mxu0
        %v3208 = vadd.f32 %v3111, %v3207
        %v3209 = vpop.f32.mrb[0].mxu0
        %3210 = vmatprep.mubr.f32.mxu0 0.0
        %3211 = vmatmul.mubr.f32.gmra.mrb[0].mxu0 %v3129
        %v3212 = vpop.f32.mrb[0].mxu0
        %v3213 = vadd.f32 %v3116, %v3212
        %v3214 = vpop.f32.mrb[0].mxu0
        %3215 = vdwg.mxu0
        %s3216 = scalar_lea.vmem [#allocation4], 9
        %v3217 = vld [vmem:[%s3216] ss:$2 sm:$0xff]
        %s3218 = scalar_lea.vmem [#allocation4], 25
        %v3219 = vld [vmem:[%s3218] ss:$2 sm:$0xff]
        %s3220 = scalar_lea.vmem [#allocation4], 49
        %v3221 = vld [vmem:[%s3220] ss:$2 sm:$0xff]
        %s3222 = scalar_lea.vmem [#allocation4], 65
        %v3223 = vld [vmem:[%s3222] ss:$2 sm:$0xff]
        %v3224 = vld [vmem:[%s7 + $0x40] sm:$0xff]
        %v3225 = vld [vmem:[%s7 + $0x48] sm:$0xff]
        %v3226 = vld [vmem:[%s7 + $0x50] sm:$0xff]
        %v3227 = vld [vmem:[%s7 + $0x58] sm:$0xff]
        %v3229 = vsel %vm448, %v3217, 0
        %v3232 = vsel %vm448, %v3219, 0
        %v3235 = vsel %vm448, %v3221, 0
        %v3238 = vsel %vm448, %v3223, 0
        %3240 = vmatprep.subr.mxu0 0.0
        %3241 = vmatpush1.msra.mxu0 %v3224
        %3242 = vmatprep.subr.mxu0 0.0
        %3243 = vmatpush1.msra.mxu0 %v3225
        %3244 = vmatprep.subr.mxu0 0.0
        %3245 = vmatpush1.msra.mxu0 %v3226
        %3246 = vmatprep.subr.mxu0 0.0
        %3247 = vmatpush1.msra.mxu0 %v3227
        %3248 = vmatprep.subr.mxu0 0.0
        %3249 = vmatpush1.msra.mxu0 0.0
        %3250 = vmatprep.subr.mxu0 0.0
        %3251 = vmatpush1.msra.mxu0 0.0
        %3252 = vmatprep.subr.mxu0 0.0
        %3253 = vmatpush1.msra.mxu0 0.0
        %3254 = vmatprep.subr.mxu0 0.0
        %3255 = vmatpush1.msra.mxu0 0.0
        %3256 = vmatprep.subr.mxu0 0.0
        %3257 = vmatpush1.msra.mxu0 0.0
        %3258 = vmatprep.subr.mxu0 0.0
        %3259 = vmatpush1.msra.mxu0 0.0
        %3260 = vmatprep.subr.mxu0 0.0
        %3261 = vmatpush1.msra.mxu0 0.0
        %3262 = vmatprep.subr.mxu0 0.0
        %3263 = vmatpush1.msra.mxu0 0.0
        %3264 = vmatprep.subr.mxu0 0.0
        %3265 = vmatpush1.msra.mxu0 0.0
        %3266 = vmatprep.subr.mxu0 0.0
        %3267 = vmatpush1.msra.mxu0 0.0
        %3268 = vmatprep.subr.mxu0 0.0
        %3269 = vmatpush1.msra.mxu0 0.0
        %3270 = vmatprep.subr.mxu0 0.0
        %3271 = vmatpush1.msra.mxu0 0.0
        %3272 = vmatprep.subr.mxu0 0.0
        %3273 = vmatpush1.msra.mxu0 0.0
        %3274 = vmatprep.subr.mxu0 0.0
        %3275 = vmatpush1.msra.mxu0 0.0
        %3276 = vmatprep.subr.mxu0 0.0
        %3277 = vmatpush1.msra.mxu0 0.0
        %3278 = vmatprep.subr.mxu0 0.0
        %3279 = vmatpush1.msra.mxu0 0.0
        %3280 = vmatprep.subr.mxu0 0.0
        %3281 = vmatpush1.msra.mxu0 0.0
        %3282 = vmatprep.subr.mxu0 0.0
        %3283 = vmatpush1.msra.mxu0 0.0
        %3284 = vmatprep.subr.mxu0 0.0
        %3285 = vmatpush1.msra.mxu0 0.0
        %3286 = vmatprep.subr.mxu0 0.0
        %3287 = vmatpush1.msra.mxu0 0.0
        %3288 = vmatprep.subr.mxu0 0.0
        %3289 = vmatpush1.msra.mxu0 0.0
        %3290 = vmatprep.subr.mxu0 0.0
        %3291 = vmatpush1.msra.mxu0 0.0
        %3292 = vmatprep.subr.mxu0 0.0
        %3293 = vmatpush1.msra.mxu0 0.0
        %3294 = vmatprep.subr.mxu0 0.0
        %3295 = vmatpush1.msra.mxu0 0.0
        %3296 = vmatprep.subr.mxu0 0.0
        %3297 = vmatpush1.msra.mxu0 0.0
        %3298 = vmatprep.subr.mxu0 0.0
        %3299 = vmatpush1.msra.mxu0 0.0
        %3300 = vmatprep.subr.mxu0 0.0
        %3301 = vmatpush1.msra.mxu0 0.0
        %3302 = vmatprep.subr.mxu0 0.0
        %3303 = vmatpush1.msra.mxu0 0.0
        %3304 = vmatprep.mubr.f32.mxu0 0.0
        %3305 = vmatmul.mubr.f32.gmra.mrb[0].mxu0 %v3229
        %v3306 = vpop.f32.mrb[0].mxu0
        %v3307 = vadd.f32 0.0, %v3306
        %v3308 = vpop.f32.mrb[0].mxu0
        %3309 = vmatprep.mubr.f32.mxu0 0.0
        %3310 = vmatmul.mubr.f32.gmra.mrb[0].mxu0 %v3232
        %v3311 = vpop.f32.mrb[0].mxu0
        %v3312 = vadd.f32 0.0, %v3311
        %v3313 = vpop.f32.mrb[0].mxu0
        %3314 = vmatprep.mubr.f32.mxu0 0.0
        %3315 = vmatmul.mubr.f32.gmra.mrb[0].mxu0 %v3235
        %v3316 = vpop.f32.mrb[0].mxu0
        %v3317 = vadd.f32 0.0, %v3316
        %v3318 = vpop.f32.mrb[0].mxu0
        %3319 = vmatprep.mubr.f32.mxu0 0.0
        %3320 = vmatmul.mubr.f32.gmra.mrb[0].mxu0 %v3238
        %v3321 = vpop.f32.mrb[0].mxu0
        %v3322 = vadd.f32 0.0, %v3321
        %v3323 = vpop.f32.mrb[0].mxu0
        %3324 = vdwg.mxu0
        %v3325 = vadd.f32 %v3198, %v3307
        %v3326 = vadd.f32 %v3203, %v3312
        %v3327 = vadd.f32 %v3208, %v3317
        %v3328 = vadd.f32 %v3213, %v3322
        %v3329 = vld [vmem:[%s8] sm:$0x1]
        %v3331 = vlaneseq
        %v3332 = vshrl.u32 %v3331, 7
        %v3333 = vsub.s32 0, %v3332
        %v3334 = vrot.slane %v3329, %v3333
        %v3336 = vadd.f32 %v3325, %v3334
        %v3337 = vadd.f32 %v3326, %v3334
        %v3338 = vadd.f32 %v3327, %v3334
        %v3339 = vadd.f32 %v3328, %v3334
        %v3340 = vmax.f32 %v3336, 0.0
        %v3341 = vmax.f32 %v3337, 0.0
        %v3342 = vmax.f32 %v3338, 0.0
        %v3343 = vmax.f32 %v3339, 0.0
        %3344 = vst.msk [vmem:[#allocation5 + $0x8] sm:$0xff] %vm453, %v3340
        %3345 = vst.msk [vmem:[#allocation5 + $0x10] sm:$0xff] %vm453, %v3341
        %3346 = vst.msk [vmem:[#allocation5 + $0x20] sm:$0xff] %vm453, %v3342
        %3347 = vst.msk [vmem:[#allocation5 + $0x28] sm:$0xff] %vm453, %v3343
        %s3348 = scalar_lea.vmem [#allocation5], 7
        %v3349 = vld [vmem:[%s3348] ss:$2 sm:$0xff]
        %s3350 = scalar_lea.vmem [#allocation5], 31
        %v3351 = vld [vmem:[%s3350] ss:$2 sm:$0xff]
        %v3352 = vld [vmem:[%s9] sm:$0xff]
        %v3353 = vld [vmem:[%s9 + $0x8] sm:$0xff]
        %v3354 = vld [vmem:[%s9 + $0x10] sm:$0xff]
        %v3355 = vld [vmem:[%s9 + $0x18] sm:$0xff]
        %v3356 = vld [vmem:[%s9 + $0x20] sm:$0xff]
        %v3357 = vld [vmem:[%s9 + $0x28] sm:$0xff]
        %v3358 = vld [vmem:[%s9 + $0x30] sm:$0xff]
        %v3359 = vld [vmem:[%s9 + $0x38] sm:$0xff]
        %s3360 = scalar_lea.vmem [#allocation5], 8
        %v3361 = vld [vmem:[%s3360] ss:$2 sm:$0xff]
        %s3362 = scalar_lea.vmem [#allocation5], 32
        %v3363 = vld [vmem:[%s3362] ss:$2 sm:$0xff]
        %v3364 = vld [vmem:[%s9 + $0x40] sm:$0xff]
        %v3365 = vld [vmem:[%s9 + $0x48] sm:$0xff]
        %v3366 = vld [vmem:[%s9 + $0x50] sm:$0xff]
        %v3367 = vld [vmem:[%s9 + $0x58] sm:$0xff]
        %v3368 = vld [vmem:[%s9 + $0x60] sm:$0xff]
        %v3369 = vld [vmem:[%s9 + $0x68] sm:$0xff]
        %v3370 = vld [vmem:[%s9 + $0x70] sm:$0xff]
        %v3371 = vld [vmem:[%s9 + $0x78] sm:$0xff]
        %v3373 = vsel %vm453, %v3361, 0
        %v3376 = vsel %vm453, %v3363, 0
        %3378 = vmatprep.subr.mxu0 0.0
        %3379 = vmatpush1.msra.mxu0 %v3364
        %3380 = vmatprep.subr.mxu0 0.0
        %3381 = vmatpush1.msra.mxu0 %v3365
        %3382 = vmatprep.subr.mxu0 0.0
        %3383 = vmatpush1.msra.mxu0 %v3366
        %3384 = vmatprep.subr.mxu0 0.0
        %3385 = vmatpush1.msra.mxu0 %v3367
        %3386 = vmatprep.subr.mxu0 0.0
        %3387 = vmatpush1.msra.mxu0 %v3368
        %3388 = vmatprep.subr.mxu0 0.0
        %3389 = vmatpush1.msra.mxu0 %v3369
        %3390 = vmatprep.subr.mxu0 0.0
        %3391 = vmatpush1.msra.mxu0 %v3370
        %3392 = vmatprep.subr.mxu0 0.0
        %3393 = vmatpush1.msra.mxu0 %v3371
        %3394 = vmatprep.subr.mxu0 0.0
        %3395 = vmatpush1.msra.mxu0 0.0
        %3396 = vmatprep.subr.mxu0 0.0
        %3397 = vmatpush1.msra.mxu0 0.0
        %3398 = vmatprep.subr.mxu0 0.0
        %3399 = vmatpush1.msra.mxu0 0.0
        %3400 = vmatprep.subr.mxu0 0.0
        %3401 = vmatpush1.msra.mxu0 0.0
        %3402 = vmatprep.subr.mxu0 0.0
        %3403 = vmatpush1.msra.mxu0 0.0
        %3404 = vmatprep.subr.mxu0 0.0
        %3405 = vmatpush1.msra.mxu0 0.0
        %3406 = vmatprep.subr.mxu0 0.0
        %3407 = vmatpush1.msra.mxu0 0.0
        %3408 = vmatprep.subr.mxu0 0.0
        %3409 = vmatpush1.msra.mxu0 0.0
        %3410 = vmatprep.subr.mxu0 0.0
        %3411 = vmatpush1.msra.mxu0 0.0
        %3412 = vmatprep.subr.mxu0 0.0
        %3413 = vmatpush1.msra.mxu0 0.0
        %3414 = vmatprep.subr.mxu0 0.0
        %3415 = vmatpush1.msra.mxu0 0.0
        %3416 = vmatprep.subr.mxu0 0.0
        %3417 = vmatpush1.msra.mxu0 0.0
        %3418 = vmatprep.subr.mxu0 0.0
        %3419 = vmatpush1.msra.mxu0 0.0
        %3420 = vmatprep.subr.mxu0 0.0
        %3421 = vmatpush1.msra.mxu0 0.0
        %3422 = vmatprep.subr.mxu0 0.0
        %3423 = vmatpush1.msra.mxu0 0.0
        %3424 = vmatprep.subr.mxu0 0.0
        %3425 = vmatpush1.msra.mxu0 0.0
        %3426 = vmatprep.subr.mxu0 0.0
        %3427 = vmatpush1.msra.mxu0 0.0
        %3428 = vmatprep.subr.mxu0 0.0
        %3429 = vmatpush1.msra.mxu0 0.0
        %3430 = vmatprep.subr.mxu0 0.0
        %3431 = vmatpush1.msra.mxu0 0.0
        %3432 = vmatprep.subr.mxu0 0.0
        %3433 = vmatpush1.msra.mxu0 0.0
        %3434 = vmatprep.subr.mxu0 0.0
        %3435 = vmatpush1.msra.mxu0 0.0
        %3436 = vmatprep.subr.mxu0 0.0
        %3437 = vmatpush1.msra.mxu0 0.0
        %3438 = vmatprep.subr.mxu0 0.0
        %3439 = vmatpush1.msra.mxu0 0.0
        %3440 = vmatprep.subr.mxu0 0.0
        %3441 = vmatpush1.msra.mxu0 0.0
        %3442 = vmatprep.mubr.f32.mxu0 0.0
        %3443 = vmatmul.mubr.f32.gmra.mrb[0].mxu0 %v3373
        %v3444 = vpop.f32.mrb[0].mxu0
        %v3445 = vadd.f32 0.0, %v3444
        %v3446 = vpop.f32.mrb[0].mxu0
        %3447 = vmatprep.mubr.f32.mxu0 0.0
        %3448 = vmatmul.mubr.f32.gmra.mrb[0].mxu0 %v3376
        %v3449 = vpop.f32.mrb[0].mxu0
        %v3450 = vadd.f32 0.0, %v3449
        %v3451 = vpop.f32.mrb[0].mxu0
        %3452 = vdwg.mxu0
        %v3454 = vsel %vm453, %v3349, 0
        %v3457 = vsel %vm453, %v3351, 0
        %3459 = vmatprep.subr.mxu0 0.0
        %3460 = vmatpush1.msra.mxu0 %v3352
        %3461 = vmatprep.subr.mxu0 0.0
        %3462 = vmatpush1.msra.mxu0 %v3353
        %3463 = vmatprep.subr.mxu0 0.0
        %3464 = vmatpush1.msra.mxu0 %v3354
        %3465 = vmatprep.subr.mxu0 0.0
        %3466 = vmatpush1.msra.mxu0 %v3355
        %3467 = vmatprep.subr.mxu0 0.0
        %3468 = vmatpush1.msra.mxu0 %v3356
        %3469 = vmatprep.subr.mxu0 0.0
        %3470 = vmatpush1.msra.mxu0 %v3357
        %3471 = vmatprep.subr.mxu0 0.0
        %3472 = vmatpush1.msra.mxu0 %v3358
        %3473 = vmatprep.subr.mxu0 0.0
        %3474 = vmatpush1.msra.mxu0 %v3359
        %3475 = vmatprep.subr.mxu0 0.0
        %3476 = vmatpush1.msra.mxu0 0.0
        %3477 = vmatprep.subr.mxu0 0.0
        %3478 = vmatpush1.msra.mxu0 0.0
        %3479 = vmatprep.subr.mxu0 0.0
        %3480 = vmatpush1.msra.mxu0 0.0
        %3481 = vmatprep.subr.mxu0 0.0
        %3482 = vmatpush1.msra.mxu0 0.0
        %3483 = vmatprep.subr.mxu0 0.0
        %3484 = vmatpush1.msra.mxu0 0.0
        %3485 = vmatprep.subr.mxu0 0.0
        %3486 = vmatpush1.msra.mxu0 0.0
        %3487 = vmatprep.subr.mxu0 0.0
        %3488 = vmatpush1.msra.mxu0 0.0
        %3489 = vmatprep.subr.mxu0 0.0
        %3490 = vmatpush1.msra.mxu0 0.0
        %3491 = vmatprep.subr.mxu0 0.0
        %3492 = vmatpush1.msra.mxu0 0.0
        %3493 = vmatprep.subr.mxu0 0.0
        %3494 = vmatpush1.msra.mxu0 0.0
        %3495 = vmatprep.subr.mxu0 0.0
        %3496 = vmatpush1.msra.mxu0 0.0
        %3497 = vmatprep.subr.mxu0 0.0
        %3498 = vmatpush1.msra.mxu0 0.0
        %3499 = vmatprep.subr.mxu0 0.0
        %3500 = vmatpush1.msra.mxu0 0.0
        %3501 = vmatprep.subr.mxu0 0.0
        %3502 = vmatpush1.msra.mxu0 0.0
        %3503 = vmatprep.subr.mxu0 0.0
        %3504 = vmatpush1.msra.mxu0 0.0
        %3505 = vmatprep.subr.mxu0 0.0
        %3506 = vmatpush1.msra.mxu0 0.0
        %3507 = vmatprep.subr.mxu0 0.0
        %3508 = vmatpush1.msra.mxu0 0.0
        %3509 = vmatprep.subr.mxu0 0.0
        %3510 = vmatpush1.msra.mxu0 0.0
        %3511 = vmatprep.subr.mxu0 0.0
        %3512 = vmatpush1.msra.mxu0 0.0
        %3513 = vmatprep.subr.mxu0 0.0
        %3514 = vmatpush1.msra.mxu0 0.0
        %3515 = vmatprep.subr.mxu0 0.0
        %3516 = vmatpush1.msra.mxu0 0.0
        %3517 = vmatprep.subr.mxu0 0.0
        %3518 = vmatpush1.msra.mxu0 0.0
        %3519 = vmatprep.subr.mxu0 0.0
        %3520 = vmatpush1.msra.mxu0 0.0
        %3521 = vmatprep.subr.mxu0 0.0
        %3522 = vmatpush1.msra.mxu0 0.0
        %3523 = vmatprep.mubr.f32.mxu0 0.0
        %3524 = vmatmul.mubr.f32.gmra.mrb[0].mxu0 %v3454
        %v3525 = vpop.f32.mrb[0].mxu0
        %v3526 = vadd.f32 %v3445, %v3525
        %v3527 = vpop.f32.mrb[0].mxu0
        %3528 = vmatprep.mubr.f32.mxu0 0.0
        %3529 = vmatmul.mubr.f32.gmra.mrb[0].mxu0 %v3457
        %v3530 = vpop.f32.mrb[0].mxu0
        %v3531 = vadd.f32 %v3450, %v3530
        %v3532 = vpop.f32.mrb[0].mxu0
        %3533 = vdwg.mxu0
        %s3534 = scalar_lea.vmem [#allocation5], 9
        %v3535 = vld [vmem:[%s3534] ss:$2 sm:$0xff]
        %s3536 = scalar_lea.vmem [#allocation5], 33
        %v3537 = vld [vmem:[%s3536] ss:$2 sm:$0xff]
        %v3538 = vld [vmem:[%s9 + $0x80] sm:$0xff]
        %v3539 = vld [vmem:[%s9 + $0x88] sm:$0xff]
        %v3540 = vld [vmem:[%s9 + $0x90] sm:$0xff]
        %v3541 = vld [vmem:[%s9 + $0x98] sm:$0xff]
        %v3542 = vld [vmem:[%s9 + $0xa0] sm:$0xff]
        %v3543 = vld [vmem:[%s9 + $0xa8] sm:$0xff]
        %v3544 = vld [vmem:[%s9 + $0xb0] sm:$0xff]
        %v3545 = vld [vmem:[%s9 + $0xb8] sm:$0xff]
        %v3547 = vsel %vm453, %v3535, 0
        %v3550 = vsel %vm453, %v3537, 0
        %3552 = vmatprep.subr.mxu0 0.0
        %3553 = vmatpush1.msra.mxu0 %v3538
        %3554 = vmatprep.subr.mxu0 0.0
        %3555 = vmatpush1.msra.mxu0 %v3539
        %3556 = vmatprep.subr.mxu0 0.0
        %3557 = vmatpush1.msra.mxu0 %v3540
        %3558 = vmatprep.subr.mxu0 0.0
        %3559 = vmatpush1.msra.mxu0 %v3541
        %3560 = vmatprep.subr.mxu0 0.0
        %3561 = vmatpush1.msra.mxu0 %v3542
        %3562 = vmatprep.subr.mxu0 0.0
        %3563 = vmatpush1.msra.mxu0 %v3543
        %3564 = vmatprep.subr.mxu0 0.0
        %3565 = vmatpush1.msra.mxu0 %v3544
        %3566 = vmatprep.subr.mxu0 0.0
        %3567 = vmatpush1.msra.mxu0 %v3545
        %3568 = vmatprep.subr.mxu0 0.0
        %3569 = vmatpush1.msra.mxu0 0.0
        %3570 = vmatprep.subr.mxu0 0.0
        %3571 = vmatpush1.msra.mxu0 0.0
        %3572 = vmatprep.subr.mxu0 0.0
        %3573 = vmatpush1.msra.mxu0 0.0
        %3574 = vmatprep.subr.mxu0 0.0
        %3575 = vmatpush1.msra.mxu0 0.0
        %3576 = vmatprep.subr.mxu0 0.0
        %3577 = vmatpush1.msra.mxu0 0.0
        %3578 = vmatprep.subr.mxu0 0.0
        %3579 = vmatpush1.msra.mxu0 0.0
        %3580 = vmatprep.subr.mxu0 0.0
        %3581 = vmatpush1.msra.mxu0 0.0
        %3582 = vmatprep.subr.mxu0 0.0
        %3583 = vmatpush1.msra.mxu0 0.0
        %3584 = vmatprep.subr.mxu0 0.0
        %3585 = vmatpush1.msra.mxu0 0.0
        %3586 = vmatprep.subr.mxu0 0.0
        %3587 = vmatpush1.msra.mxu0 0.0
        %3588 = vmatprep.subr.mxu0 0.0
        %3589 = vmatpush1.msra.mxu0 0.0
        %3590 = vmatprep.subr.mxu0 0.0
        %3591 = vmatpush1.msra.mxu0 0.0
        %3592 = vmatprep.subr.mxu0 0.0
        %3593 = vmatpush1.msra.mxu0 0.0
        %3594 = vmatprep.subr.mxu0 0.0
        %3595 = vmatpush1.msra.mxu0 0.0
        %3596 = vmatprep.subr.mxu0 0.0
        %3597 = vmatpush1.msra.mxu0 0.0
        %3598 = vmatprep.subr.mxu0 0.0
        %3599 = vmatpush1.msra.mxu0 0.0
        %3600 = vmatprep.subr.mxu0 0.0
        %3601 = vmatpush1.msra.mxu0 0.0
        %3602 = vmatprep.subr.mxu0 0.0
        %3603 = vmatpush1.msra.mxu0 0.0
        %3604 = vmatprep.subr.mxu0 0.0
        %3605 = vmatpush1.msra.mxu0 0.0
        %3606 = vmatprep.subr.mxu0 0.0
        %3607 = vmatpush1.msra.mxu0 0.0
        %3608 = vmatprep.subr.mxu0 0.0
        %3609 = vmatpush1.msra.mxu0 0.0
        %3610 = vmatprep.subr.mxu0 0.0
        %3611 = vmatpush1.msra.mxu0 0.0
        %3612 = vmatprep.subr.mxu0 0.0
        %3613 = vmatpush1.msra.mxu0 0.0
        %3614 = vmatprep.subr.mxu0 0.0
        %3615 = vmatpush1.msra.mxu0 0.0
        %3616 = vmatprep.mubr.f32.mxu0 0.0
        %3617 = vmatmul.mubr.f32.gmra.mrb[0].mxu0 %v3547
        %v3618 = vpop.f32.mrb[0].mxu0
        %v3619 = vadd.f32 0.0, %v3618
        %v3620 = vpop.f32.mrb[0].mxu0
        %3621 = vmatprep.mubr.f32.mxu0 0.0
        %3622 = vmatmul.mubr.f32.gmra.mrb[0].mxu0 %v3550
        %v3623 = vpop.f32.mrb[0].mxu0
        %v3624 = vadd.f32 0.0, %v3623
        %v3625 = vpop.f32.mrb[0].mxu0
        %3626 = vdwg.mxu0
        %v3627 = vadd.f32 %v3526, %v3619
        %v3628 = vadd.f32 %v3531, %v3624
        %v3629 = vld [vmem:[%s10] sm:$0x1]
        %v3631 = vlaneseq
        %v3632 = vshrl.u32 %v3631, 7
        %v3633 = vsub.s32 0, %v3632
        %v3634 = vrot.slane %v3629, %v3633
        %v3636 = vadd.f32 %v3627, %v3634
        %v3637 = vadd.f32 %v3628, %v3634
        %v3638 = vmax.f32 %v3636, 0.0
        %v3639 = vmax.f32 %v3637, 0.0
        %v3640 = vld [vmem:[%s11] sm:$0xff]
        %v3641 = vld [vmem:[%s11 + $0x8] sm:$0xff]
        %v3642 = vld [vmem:[%s11 + $0x10] sm:$0xff]
        %v3643 = vld [vmem:[%s11 + $0x18] sm:$0xff]
        %v3644 = vld [vmem:[%s11 + $0x20] sm:$0xff]
        %v3645 = vld [vmem:[%s11 + $0x28] sm:$0xff]
        %v3646 = vld [vmem:[%s11 + $0x30] sm:$0xff]
        %v3647 = vld [vmem:[%s11 + $0x38] sm:$0xff]
        %v3648 = vld [vmem:[%s12] sm:$0x1]
        %v3650 = vlaneseq
        %v3651 = vshrl.u32 %v3650, 7
        %v3652 = vsub.s32 0, %v3651
        %v3653 = vrot.slane %v3648, %v3652
        %v3656 = vsel %vm453, %v3638, 0
        %v3659 = vsel %vm453, %v3639, 0
        %3661 = vmatprep.subr.mxu0 0.0
        %3662 = vmatpush1.msra.mxu0 %v3640
        %3663 = vmatprep.subr.mxu0 0.0
        %3664 = vmatpush1.msra.mxu0 %v3641
        %3665 = vmatprep.subr.mxu0 0.0
        %3666 = vmatpush1.msra.mxu0 %v3642
        %3667 = vmatprep.subr.mxu0 0.0
        %3668 = vmatpush1.msra.mxu0 %v3643
        %3669 = vmatprep.subr.mxu0 0.0
        %3670 = vmatpush1.msra.mxu0 %v3644
        %3671 = vmatprep.subr.mxu0 0.0
        %3672 = vmatpush1.msra.mxu0 %v3645
        %3673 = vmatprep.subr.mxu0 0.0
        %3674 = vmatpush1.msra.mxu0 %v3646
        %3675 = vmatprep.subr.mxu0 0.0
        %3676 = vmatpush1.msra.mxu0 %v3647
        %3677 = vmatprep.subr.mxu0 0.0
        %3678 = vmatpush1.msra.mxu0 0.0
        %3679 = vmatprep.subr.mxu0 0.0
        %3680 = vmatpush1.msra.mxu0 0.0
        %3681 = vmatprep.subr.mxu0 0.0
        %3682 = vmatpush1.msra.mxu0 0.0
        %3683 = vmatprep.subr.mxu0 0.0
        %3684 = vmatpush1.msra.mxu0 0.0
        %3685 = vmatprep.subr.mxu0 0.0
        %3686 = vmatpush1.msra.mxu0 0.0
        %3687 = vmatprep.subr.mxu0 0.0
        %3688 = vmatpush1.msra.mxu0 0.0
        %3689 = vmatprep.subr.mxu0 0.0
        %3690 = vmatpush1.msra.mxu0 0.0
        %3691 = vmatprep.subr.mxu0 0.0
        %3692 = vmatpush1.msra.mxu0 0.0
        %3693 = vmatprep.subr.mxu0 0.0
        %3694 = vmatpush1.msra.mxu0 0.0
        %3695 = vmatprep.subr.mxu0 0.0
        %3696 = vmatpush1.msra.mxu0 0.0
        %3697 = vmatprep.subr.mxu0 0.0
        %3698 = vmatpush1.msra.mxu0 0.0
        %3699 = vmatprep.subr.mxu0 0.0
        %3700 = vmatpush1.msra.mxu0 0.0
        %3701 = vmatprep.subr.mxu0 0.0
        %3702 = vmatpush1.msra.mxu0 0.0
        %3703 = vmatprep.subr.mxu0 0.0
        %3704 = vmatpush1.msra.mxu0 0.0
        %3705 = vmatprep.subr.mxu0 0.0
        %3706 = vmatpush1.msra.mxu0 0.0
        %3707 = vmatprep.subr.mxu0 0.0
        %3708 = vmatpush1.msra.mxu0 0.0
        %3709 = vmatprep.subr.mxu0 0.0
        %3710 = vmatpush1.msra.mxu0 0.0
        %3711 = vmatprep.subr.mxu0 0.0
        %3712 = vmatpush1.msra.mxu0 0.0
        %3713 = vmatprep.subr.mxu0 0.0
        %3714 = vmatpush1.msra.mxu0 0.0
        %3715 = vmatprep.subr.mxu0 0.0
        %3716 = vmatpush1.msra.mxu0 0.0
        %3717 = vmatprep.subr.mxu0 0.0
        %3718 = vmatpush1.msra.mxu0 0.0
        %3719 = vmatprep.subr.mxu0 0.0
        %3720 = vmatpush1.msra.mxu0 0.0
        %3721 = vmatprep.subr.mxu0 0.0
        %3722 = vmatpush1.msra.mxu0 0.0
        %3723 = vmatprep.subr.mxu0 0.0
        %3724 = vmatpush1.msra.mxu0 0.0
        %3725 = vmatprep.mubr.f32.mxu0 0.0
        %3726 = vmatmul.mubr.f32.gmra.mrb[0].mxu0 %v3656
        %v3727 = vpop.f32.mrb[0].mxu0
        %v3728 = vadd.f32 %v3653, %v3727
        %v3729 = vpop.f32.mrb[0].mxu0
        %3730 = vmatprep.mubr.f32.mxu0 0.0
        %3731 = vmatmul.mubr.f32.gmra.mrb[0].mxu0 %v3659
        %v3732 = vpop.f32.mrb[0].mxu0
        %v3733 = vadd.f32 %v3653, %v3732
        %v3734 = vpop.f32.mrb[0].mxu0
        %3735 = vdwg.mxu0
        %vm3736 = vcmask 31744
        %v3737 = vsel %vm3736, %v3728, 0.0
        %v3738 = vrot.slane %v3737, 4
        %v3739 = vadd.f32 %v3737, %v3738
        %v3740 = vrot.slane %v3739, 2
        %v3741 = vadd.f32 %v3739, %v3740
        %v3742 = vrot.slane %v3741, 1
        %v3743 = vadd.f32 %v3741, %v3742
        %v3744 = vsel %vm3736, %v3733, 0.0
        %v3745 = vrot.slane %v3744, 4
        %v3746 = vadd.f32 %v3744, %v3745
        %v3747 = vrot.slane %v3746, 2
        %v3748 = vadd.f32 %v3746, %v3747
        %v3749 = vrot.slane %v3748, 1
        %v3750 = vadd.f32 %v3748, %v3749
        %v3751 = vrcp.pop 8.0
        %v3752 = vmul.f32 %v3743, %v3751
        %v3753 = vmul.f32 %v3750, %v3751
        %vm3754 = vcmask 24576
        %3755 = vst.msk [vmem:[%s436] sm:$0x1] %vm3754, %v3752
        %3756 = vst.msk [vmem:[%s436 + $0x1] sm:$0x1] %vm3754, %v3753
        %s3757 = sand.u32 %s313, 1
        %s3758 = scalar_lea.sflag [#allocation7], %s3757
        %s3759 = sand.u32 %s313, 1
        %s3760 = smul.addr %s3759, 2
        %s3761 = scalar_lea.vmem [#allocation6], %s3760
        // Predicated region
        $region73: #{_lambda_.1} parent=71 // pred_check
          %p3762 = pneg %p323
        $region74: #{_lambda_.1} parent=71 // pred_check_branch
          %3764 = sbr.rel (%p3762) target = $region76
        $region75: #{_lambda_.1} parent=71 // pred_region
          %s3765 = smul.u32 2, %s27
          %s3767 = ssub.s32 32, 32
          %3768 = vsyncadd %s3758, %s3767
          %s3769 = smul.addr %s3765, 16
          %s3770 = scalar_lea.hbm %s13, %s3769
          %s3771 = sshll.u32 %s3761, 4
          %s3772 = int_to_ptr.vmem [resolvable:$true] %s3771
          %3777 = dma.vmem_to_hbm [thread:$0]  %s3772, 32, %s3770, %s3758, 16, 16, 1
        $region76: #{_lambda_.1} parent=71 // pred_fallthru
          _
      $region72: #{_lambda_.1} parent=5 // pred_fallthru
        _
      %p3778 = scmp.le.s32.totalorder 2, %s22
      // Predicated region
      $region77: #{_lambda_.1} parent=5 // pred_check
        %p3779 = pneg %p3778
      $region78: #{_lambda_.1} parent=5 // pred_check_branch
        %3781 = sbr.rel (%p3779) target = $region80
      $region79: #{_lambda_.1} parent=5 // pred_region
        %s3782 = ssub.s32 %s22, 2
        // Predicated region
        $region81: #{_lambda_.1} parent=79 // pred_check
          %p3783 = pneg %p329
        $region82: #{_lambda_.1} parent=79 // pred_check_branch
          %3785 = sbr.rel (%p3783) target = $region84
        $region83: #{_lambda_.1} parent=79 // pred_region
          %s3786 = sand.u32 %s314, 1
          %s3787 = scalar_lea.sflag [#allocation7], %s3786
          %s3788 = sand.u32 %s314, 1
          %s3789 = smul.addr %s3788, 2
          %s3790 = scalar_lea.vmem [#allocation6], %s3789
          %3791 = dma.done %s3787, 32
        $region84: #{_lambda_.1} parent=79 // pred_fallthru
          _
      $region80: #{_lambda_.1} parent=5 // pred_fallthru
        _
    $region6: #{_lambda_.1} parent=1 // loop_footer
      %s26 = sadd.s32 1, %s22
    $region7: #{_lambda_.1} parent=1 // loop_footer_branch
      %21 = sbr.rel target = $region3
    $region8: #{_lambda_.1} parent=1 // loop_exit
      _
    %3792 = vsyncpa [#allocation7], 1
    %s3793 = scalar_lea.sflag [#allocation7], 1
    %3794 = vsyncpa %s3793, 1

</llo_original>
